<compile_context>
chip_gen: v5e
topology: v5e:2x2
jax: 0.10.0
libtpu: 0.0.40
codegen_flags: <defaults>
</compile_context>

<pallas_src>
import functools

import jax
import jax.numpy as jnp
from jax.experimental import pallas as pl
from jax.experimental.pallas import tpu as pltpu


# ------------------------------ small helpers ------------------------------

def _round_up(x, m):
    return (x + m - 1) // m * m


def _pad_to(a, shape, dtype):
    """Zero-pad array `a` into a `shape`-shaped array of `dtype`."""
    out = jnp.zeros(shape, dtype)
    idx = tuple(slice(0, s) for s in a.shape)
    return out.at[idx].set(a.astype(dtype))


_VMEM = pl.BlockSpec(memory_space=pltpu.MemorySpace.VMEM)

# 48 MiB scoped VMEM: fits v7x (64 MiB physical) with headroom, fine on v5e/v6e.
_VMEM_LIMIT = 48 * 1024 * 1024


# ----------------------------- Pallas kernels ------------------------------

def _rnn_attn_kernel(x_ref, y_ref, mask_ref,
                     ew_ih_ref, ew_hh_ref, eb_ref,
                     dw_ih_ref, dw_hh_ref, db_ref,
                     attn_ref, feat_ref,
                     mem_scr, hs_scr, *, S, T):
    """Fused encoder RNN + decoder RNN + masked attention (batch-major).

    x_ref:    (B, S_rnd, E) bf16 source embeddings (batch/time zero-padded)
    y_ref:    (B, T_rnd, E) bf16 target embeddings
    mask_ref: (B, S_att) f32     0 where valid, -1e9 where padded
    weights:  w_ih (E,H) bf16, w_hh (H,H) bf16, b (1,H) f32 (enc and dec)
    outputs:  attn_ref (B, T_rnd, S_att) f32
              feat_ref (B*T_rnd, 2H) bf16  -- [h | context] for the projection
    scratch:  mem_scr (B, S_att, H) bf16 (encoder memory, stays in VMEM)
              hs_scr  (B, T_rnd, H) bf16 (decoder hidden states)
    """
    B, S_rnd, E = x_ref.shape
    _, T_rnd, _ = y_ref.shape
    H = ew_hh_ref.shape[1]

    # Scratch is uninitialized: zero it so padded rows stay finite through
    # exp()/matmuls before the wrapper slices them away.
    mem_scr[...] = jnp.zeros_like(mem_scr)
    hs_scr[...] = jnp.zeros_like(hs_scr)

    # ----------------------------- encoder --------------------------------
    # Hoisted input projection: one (B*S_rnd, E) x (E, H) MXU matmul for all t.
    xin = (jnp.dot(x_ref[...].reshape(B * S_rnd, E), ew_ih_ref[...],
                   preferred_element_type=jnp.float32)
           + eb_ref[...]).reshape(B, S_rnd, H)

    e_whh = ew_hh_ref[...]                       # bf16, reused every step
    h = jnp.zeros((B, H), jnp.float32)
    for t in range(S):                           # real S only; fully unrolled
        h = jnp.tanh(xin[:, t, :]
                     + jnp.dot(h.astype(jnp.bfloat16), e_whh,
                               preferred_element_type=jnp.float32))
        mem_scr[:, t, :] = h.astype(jnp.bfloat16)
    # h == encoder final state (stays in registers/VMEM; never exported).

    # ------------------------ decoder recurrence --------------------------
    yin = (jnp.dot(y_ref[...].reshape(B * T_rnd, E), dw_ih_ref[...],
                   preferred_element_type=jnp.float32)
           + db_ref[...]).reshape(B, T_rnd, H)

    d_whh = dw_hh_ref[...]                       # bf16
    for t in range(T):                           # real T only
        h = jnp.tanh(yin[:, t, :]
                     + jnp.dot(h.astype(jnp.bfloat16), d_whh,
                               preferred_element_type=jnp.float32))
        hs_scr[:, t, :] = h.astype(jnp.bfloat16)

    # --------------------- batched masked attention -----------------------
    hs = hs_scr[...]                             # (B, T_rnd, H) bf16
    mem = mem_scr[...]                           # (B, S_att, H) bf16

    scores = jnp.einsum('bth,bsh->bts', hs, mem,
                        preferred_element_type=jnp.float32)        # (B,T,S)
    scores = scores + mask_ref[...][:, None, :]                    # f32 mask
    scores = scores - jnp.max(scores, axis=2, keepdims=True)
    p = jnp.exp(scores)
    attn = p * pl.reciprocal(jnp.sum(p, axis=2, keepdims=True), approx=True)
    attn_ref[...] = attn                                           # lane-dense

    context = jnp.einsum('bts,bsh->bth', attn.astype(jnp.bfloat16), mem,
                         preferred_element_type=jnp.float32)       # (B,T,H)

    # [h | context] feature slab for the K=2H output projection.
    feat_ref[:, 0:H] = hs.reshape(B * T_rnd, H)
    feat_ref[:, H:2 * H] = context.reshape(B * T_rnd, H).astype(jnp.bfloat16)


def _proj_kernel(feat_ref, w_ref, b_ref, out_ref):
    """Output projection block: (M, 2H) x (2H, TILE_V) + bias, f32 out."""
    out_ref[...] = (jnp.dot(feat_ref[...], w_ref[...],
                            preferred_element_type=jnp.float32)
                    + b_ref[...])


# ------------------------------ JAX wrapper --------------------------------

@functools.partial(jax.jit, static_argnames=("v_real",))
def _seq2seq_apply(enc_c, dec_c, src_tokens, src_lengths, tgt_tokens, *, v_real):
    B, S = src_tokens.shape
    _, T = tgt_tokens.shape
    E_pad = enc_c["w_ih"].shape[0]
    H_pad = enc_c["w_hh"].shape[0]
    V_pad = dec_c["w_out"].shape[1]

    B_pad = _round_up(B, 8)
    S_rnd = _round_up(S, 8)
    T_rnd = _round_up(T, 8)
    S_att = _round_up(S, 128)        # lane-dense attention / memory block
    M = B_pad * T_rnd
    K2 = 2 * H_pad

    # Embedding gathers + activation padding: plain-JAX glue.
    x = _pad_to(enc_c["emb"][src_tokens], (B_pad, S_rnd, E_pad), jnp.bfloat16)
    y = _pad_to(dec_c["emb"][tgt_tokens], (B_pad, T_rnd, E_pad), jnp.bfloat16)

    lens = jnp.zeros((B_pad,), jnp.int32).at[:B].set(src_lengths.astype(jnp.int32))
    mask = jnp.where(jnp.arange(S_att)[None, :] < lens[:, None],
                     0.0, -1e9).astype(jnp.float32)                # (B_pad, S_att)

    # ---- call 1: fused encoder + decoder recurrence + attention -----------
    attn_p, feat = pl.pallas_call(
        functools.partial(_rnn_attn_kernel, S=S, T=T),
        out_shape=(jax.ShapeDtypeStruct((B_pad, T_rnd, S_att), jnp.float32),
                   jax.ShapeDtypeStruct((M, K2), jnp.bfloat16)),
        in_specs=[_VMEM] * 9,
        out_specs=(_VMEM, _VMEM),
        scratch_shapes=[pltpu.VMEM((B_pad, S_att, H_pad), jnp.bfloat16),
                        pltpu.VMEM((B_pad, T_rnd, H_pad), jnp.bfloat16)],
        compiler_params=pltpu.CompilerParams(vmem_limit_bytes=_VMEM_LIMIT),
    )(x, y, mask,
      enc_c["w_ih"], enc_c["w_hh"], enc_c["b"],
      dec_c["w_ih"], dec_c["w_hh"], dec_c["b"])

    # ---- call 2: K=2H output projection, gridded over the vocab dim -------
    tile_v = 512 if V_pad % 512 == 0 else 128
    logits_p = pl.pallas_call(
        _proj_kernel,
        out_shape=jax.ShapeDtypeStruct((M, V_pad), jnp.float32),
        grid=(V_pad // tile_v,),
        in_specs=[pl.BlockSpec((M, K2), lambda j: (0, 0)),
                  pl.BlockSpec((K2, tile_v), lambda j: (0, j)),
                  pl.BlockSpec((1, tile_v), lambda j: (0, j))],
        out_specs=pl.BlockSpec((M, tile_v), lambda j: (0, j)),
        compiler_params=pltpu.CompilerParams(
            dimension_semantics=("parallel",),      # megacore on v7x
            vmem_limit_bytes=_VMEM_LIMIT),
    )(feat, dec_c["w_out"], dec_c["b_out"])

    logits = logits_p.reshape(B_pad, T_rnd, V_pad)[:B, :T, :v_real]
    attn_history = attn_p[:B, :T, :S]
    return logits, attn_history


# ------------------------------ module classes -----------------------------

class Encoder:
    """tanh-RNN encoder. Weights are padded/cast to TPU-friendly shapes ONCE."""

    def __init__(self, params):
        E, H = params["w_ih"].shape
        E_pad, H_pad = _round_up(E, 128), _round_up(H, 128)
        self.consts = {
            "emb":  _pad_to(params["emb"], (params["emb"].shape[0], E_pad), jnp.bfloat16),
            "w_ih": _pad_to(params["w_ih"], (E_pad, H_pad), jnp.bfloat16),
            "w_hh": _pad_to(params["w_hh"], (H_pad, H_pad), jnp.bfloat16),
            "b":    _pad_to(params["b"], (1, H_pad), jnp.float32),
        }
        self.src_lengths = None


class Decoder:
    """tanh-RNN decoder with attention + output projection (pre-padded weights)."""

    def __init__(self, params):
        E, H = params["w_ih"].shape
        V = params["w_oh"].shape[1]
        E_pad, H_pad, V_pad = _round_up(E, 128), _round_up(H, 128), _round_up(V, 128)
        w_oh = _pad_to(params["w_oh"], (H_pad, V_pad), jnp.bfloat16)
        w_oc = _pad_to(params["w_oc"], (H_pad, V_pad), jnp.bfloat16)
        self.consts = {
            "emb":   _pad_to(params["emb"], (params["emb"].shape[0], E_pad), jnp.bfloat16),
            "w_ih":  _pad_to(params["w_ih"], (E_pad, H_pad), jnp.bfloat16),
            "w_hh":  _pad_to(params["w_hh"], (H_pad, H_pad), jnp.bfloat16),
            "b":     _pad_to(params["b"], (1, H_pad), jnp.float32),
            # K-concat projection: [h | ctx] @ [[w_oh]; [w_oc]]  (K = 2*H_pad)
            "w_out": jnp.concatenate([w_oh, w_oc], axis=0),
            "b_out": _pad_to(params["b_out"], (1, V_pad), jnp.float32),
        }
        self.vocab = V


class Model:
    """Mirrors PyTorch Model.forward semantics (tgt truncation, encoder memory +
    final state feeding an attentive decoder, returns (logits, attn_history)).
    Per the performance review, encoder+decoder are fused into a single Pallas
    kernel so encoder memory stays resident in VMEM instead of round-tripping
    HBM between two calls."""

    def __init__(self, encoder, decoder):
        self.encoder = encoder
        self.decoder = decoder

    def forward(self, src_batch, tgt_batch):
        tgt_batch = tgt_batch[:, :-1]
        src_tokens, src_lengths = src_batch
        self.encoder.src_lengths = src_lengths
        logits, attn_history = _seq2seq_apply(
            self.encoder.consts, self.decoder.consts,
            src_tokens, src_lengths, tgt_batch, v_real=self.decoder.vocab)
        return (logits, attn_history)


# ----------------------------------- main ----------------------------------

if __name__ == "__main__":
    key = jax.random.PRNGKey(0)
    B, S_src, T_tgt = 2, 8, 8
    E, H, V_src, V_tgt = 32, 32, 16, 16
    scale = 0.1
    keys = jax.random.split(key, 10)

    enc_params = {
        "emb":  jax.random.normal(keys[0], (V_src, E), jnp.float32) * scale,
        "w_ih": jax.random.normal(keys[1], (E, H), jnp.float32) * scale,
        "w_hh": jax.random.normal(keys[2], (H, H), jnp.float32) * scale,
        "b":    jnp.zeros((1, H), jnp.float32),
    }
    dec_params = {
        "emb":   jax.random.normal(keys[3], (V_tgt, E), jnp.float32) * scale,
        "w_ih":  jax.random.normal(keys[4], (E, H), jnp.float32) * scale,
        "w_hh":  jax.random.normal(keys[5], (H, H), jnp.float32) * scale,
        "b":     jnp.zeros((1, H), jnp.float32),
        "w_oh":  jax.random.normal(keys[6], (H, V_tgt), jnp.float32) * scale,
        "w_oc":  jax.random.normal(keys[7], (H, V_tgt), jnp.float32) * scale,
        "b_out": jnp.zeros((1, V_tgt), jnp.float32),
    }

    src_tokens = jax.random.randint(keys[8], (B, S_src), 0, V_src, dtype=jnp.int32)
    src_lengths = jnp.array([S_src, S_src - 2], dtype=jnp.int32)
    tgt_tokens = jax.random.randint(keys[9], (B, T_tgt), 0, V_tgt, dtype=jnp.int32)

    model = Model(Encoder(enc_params), Decoder(dec_params))
    logits, attn_history = model.forward((src_tokens, src_lengths), tgt_tokens)
    jax.block_until_ready((logits, attn_history))

    assert logits.shape == (B, T_tgt - 1, V_tgt)
    assert attn_history.shape == (B, T_tgt - 1, S_src)
    assert bool(jnp.all(jnp.isfinite(logits)))
    assert bool(jnp.all(jnp.isfinite(attn_history)))
    print("KERNEL_OK")
</pallas_src>

<mosaic_0001>
module attributes {stable_mosaic.version = 11 : i64} {
  func.func @_rnn_attn_kernel(%arg0: memref<8x8x128xbf16, #tpu.memory_space<vmem>>, %arg1: memref<8x8x128xbf16, #tpu.memory_space<vmem>>, %arg2: memref<8x128xf32, #tpu.memory_space<vmem>>, %arg3: memref<128x128xbf16, #tpu.memory_space<vmem>>, %arg4: memref<128x128xbf16, #tpu.memory_space<vmem>>, %arg5: memref<1x128xf32, #tpu.memory_space<vmem>>, %arg6: memref<128x128xbf16, #tpu.memory_space<vmem>>, %arg7: memref<128x128xbf16, #tpu.memory_space<vmem>>, %arg8: memref<1x128xf32, #tpu.memory_space<vmem>>, %arg9: memref<8x8x128xf32, #tpu.memory_space<vmem>>, %arg10: memref<64x256xbf16, #tpu.memory_space<vmem>>, %arg11: memref<8x128x128xbf16, #tpu.memory_space<vmem>>, %arg12: memref<8x8x128xbf16, #tpu.memory_space<vmem>>) attributes {dimension_semantics = [], scalar_prefetch = 0 : i64, scratch_operands = 2 : i64, tpu.core_type = #tpu.core_type<tc>} {
    %cst = arith.constant 0.000000e+00 : bf16
    %0 = vector.broadcast %cst : bf16 to vector<8x128x128xbf16>
    %c0 = arith.constant 0 : index
    %c0_0 = arith.constant 0 : index
    %c0_1 = arith.constant 0 : index
    %1 = vector.load %arg11[%c0, %c0_0, %c0_1] : memref<8x128x128xbf16, #tpu.memory_space<vmem>>, vector<8x128x128xbf16>
    tpu.vector_store %arg11[%c0, %c0_0, %c0_1], %0 {strides = array<i32>} : memref<8x128x128xbf16, #tpu.memory_space<vmem>>, vector<8x128x128xbf16>,
    %cst_2 = arith.constant 0.000000e+00 : bf16
    %2 = vector.broadcast %cst_2 : bf16 to vector<8x8x128xbf16>
    %c0_3 = arith.constant 0 : index
    %c0_4 = arith.constant 0 : index
    %c0_5 = arith.constant 0 : index
    %3 = vector.load %arg12[%c0_3, %c0_4, %c0_5] : memref<8x8x128xbf16, #tpu.memory_space<vmem>>, vector<8x8x128xbf16>
    tpu.vector_store %arg12[%c0_3, %c0_4, %c0_5], %2 {strides = array<i32>} : memref<8x8x128xbf16, #tpu.memory_space<vmem>>, vector<8x8x128xbf16>,
    %c0_6 = arith.constant 0 : index
    %c0_7 = arith.constant 0 : index
    %c0_8 = arith.constant 0 : index
    %4 = vector.load %arg0[%c0_6, %c0_7, %c0_8] : memref<8x8x128xbf16, #tpu.memory_space<vmem>>, vector<8x8x128xbf16>
    %5 = vector.shape_cast %4 : vector<8x8x128xbf16> to vector<64x128xbf16>
    %c0_9 = arith.constant 0 : index
    %c0_10 = arith.constant 0 : index
    %6 = vector.load %arg3[%c0_9, %c0_10] : memref<128x128xbf16, #tpu.memory_space<vmem>>, vector<128x128xbf16>
    %cst_11 = arith.constant dense<0.000000e+00> : vector<64x128xf32>
    %7 = tpu.matmul %5, %6, %cst_11 {dimension_numbers = #tpu.dot_dimension_numbers<[1], [0], [0], [1], [0, 0, 1, 1], [], []>} : vector<64x128xbf16>, vector<128x128xbf16>, vector<64x128xf32> -> vector<64x128xf32>
    %c0_12 = arith.constant 0 : index
    %c0_13 = arith.constant 0 : index
    %8 = vector.load %arg5[%c0_12, %c0_13] : memref<1x128xf32, #tpu.memory_space<vmem>>, vector<1x128xf32>
    %9 = vector.broadcast %8 : vector<1x128xf32> to vector<64x128xf32>
    %10 = arith.addf %7, %9 : vector<64x128xf32>
    %11 = vector.shape_cast %10 : vector<64x128xf32> to vector<8x8x128xf32>
    %c0_14 = arith.constant 0 : index
    %c0_15 = arith.constant 0 : index
    %12 = vector.load %arg4[%c0_14, %c0_15] : memref<128x128xbf16, #tpu.memory_space<vmem>>, vector<128x128xbf16>
    %cst_16 = arith.constant 0.000000e+00 : f32
    %13 = vector.broadcast %cst_16 : f32 to vector<8x128xf32>
    %14 = vector.extract_strided_slice %11 {offsets = [0, 0, 0], sizes = [8, 1, 128], strides = [1, 1, 1]} : vector<8x8x128xf32> to vector<8x1x128xf32>
    %15 = vector.shape_cast %14 : vector<8x1x128xf32> to vector<8x128xf32>
    %16 = arith.truncf %13 : vector<8x128xf32> to vector<8x128xbf16>
    %cst_17 = arith.constant dense<0.000000e+00> : vector<8x128xf32>
    %17 = tpu.matmul %16, %12, %cst_17 {dimension_numbers = #tpu.dot_dimension_numbers<[1], [0], [0], [1], [0, 0, 1, 1], [], []>} : vector<8x128xbf16>, vector<128x128xbf16>, vector<8x128xf32> -> vector<8x128xf32>
    %18 = arith.addf %15, %17 : vector<8x128xf32>
    %19 = math.tanh %18 : vector<8x128xf32>
    %20 = arith.truncf %19 : vector<8x128xf32> to vector<8x128xbf16>
    %c0_18 = arith.constant 0 : index
    %c0_19 = arith.constant 0 : index
    %c0_20 = arith.constant 0 : index
    %21 = vector.load %arg11[%c0_18, %c0_19, %c0_20] : memref<8x128x128xbf16, #tpu.memory_space<vmem>>, vector<8x1x128xbf16>
    %22 = vector.shape_cast %21 : vector<8x1x128xbf16> to vector<8x128xbf16>
    %23 = vector.shape_cast %20 : vector<8x128xbf16> to vector<8x1x128xbf16>
    tpu.vector_store %arg11[%c0_18, %c0_19, %c0_20], %23 {strides = array<i32>} : memref<8x128x128xbf16, #tpu.memory_space<vmem>>, vector<8x1x128xbf16>,
    %24 = vector.extract_strided_slice %11 {offsets = [0, 1, 0], sizes = [8, 1, 128], strides = [1, 1, 1]} : vector<8x8x128xf32> to vector<8x1x128xf32>
    %25 = vector.shape_cast %24 : vector<8x1x128xf32> to vector<8x128xf32>
    %26 = arith.truncf %19 : vector<8x128xf32> to vector<8x128xbf16>
    %cst_21 = arith.constant dense<0.000000e+00> : vector<8x128xf32>
    %27 = tpu.matmul %26, %12, %cst_21 {dimension_numbers = #tpu.dot_dimension_numbers<[1], [0], [0], [1], [0, 0, 1, 1], [], []>} : vector<8x128xbf16>, vector<128x128xbf16>, vector<8x128xf32> -> vector<8x128xf32>
    %28 = arith.addf %25, %27 : vector<8x128xf32>
    %29 = math.tanh %28 : vector<8x128xf32>
    %30 = arith.truncf %29 : vector<8x128xf32> to vector<8x128xbf16>
    %c0_22 = arith.constant 0 : index
    %c1 = arith.constant 1 : index
    %c0_23 = arith.constant 0 : index
    %31 = vector.load %arg11[%c0_22, %c1, %c0_23] : memref<8x128x128xbf16, #tpu.memory_space<vmem>>, vector<8x1x128xbf16>
    %32 = vector.shape_cast %31 : vector<8x1x128xbf16> to vector<8x128xbf16>
    %33 = vector.shape_cast %30 : vector<8x128xbf16> to vector<8x1x128xbf16>
    tpu.vector_store %arg11[%c0_22, %c1, %c0_23], %33 {strides = array<i32>} : memref<8x128x128xbf16, #tpu.memory_space<vmem>>, vector<8x1x128xbf16>,
    %34 = vector.extract_strided_slice %11 {offsets = [0, 2, 0], sizes = [8, 1, 128], strides = [1, 1, 1]} : vector<8x8x128xf32> to vector<8x1x128xf32>
    %35 = vector.shape_cast %34 : vector<8x1x128xf32> to vector<8x128xf32>
    %36 = arith.truncf %29 : vector<8x128xf32> to vector<8x128xbf16>
    %cst_24 = arith.constant dense<0.000000e+00> : vector<8x128xf32>
    %37 = tpu.matmul %36, %12, %cst_24 {dimension_numbers = #tpu.dot_dimension_numbers<[1], [0], [0], [1], [0, 0, 1, 1], [], []>} : vector<8x128xbf16>, vector<128x128xbf16>, vector<8x128xf32> -> vector<8x128xf32>
    %38 = arith.addf %35, %37 : vector<8x128xf32>
    %39 = math.tanh %38 : vector<8x128xf32>
    %40 = arith.truncf %39 : vector<8x128xf32> to vector<8x128xbf16>
    %c0_25 = arith.constant 0 : index
    %c2 = arith.constant 2 : index
    %c0_26 = arith.constant 0 : index
    %41 = vector.load %arg11[%c0_25, %c2, %c0_26] : memref<8x128x128xbf16, #tpu.memory_space<vmem>>, vector<8x1x128xbf16>
    %42 = vector.shape_cast %41 : vector<8x1x128xbf16> to vector<8x128xbf16>
    %43 = vector.shape_cast %40 : vector<8x128xbf16> to vector<8x1x128xbf16>
    tpu.vector_store %arg11[%c0_25, %c2, %c0_26], %43 {strides = array<i32>} : memref<8x128x128xbf16, #tpu.memory_space<vmem>>, vector<8x1x128xbf16>,
    %44 = vector.extract_strided_slice %11 {offsets = [0, 3, 0], sizes = [8, 1, 128], strides = [1, 1, 1]} : vector<8x8x128xf32> to vector<8x1x128xf32>
    %45 = vector.shape_cast %44 : vector<8x1x128xf32> to vector<8x128xf32>
    %46 = arith.truncf %39 : vector<8x128xf32> to vector<8x128xbf16>
    %cst_27 = arith.constant dense<0.000000e+00> : vector<8x128xf32>
    %47 = tpu.matmul %46, %12, %cst_27 {dimension_numbers = #tpu.dot_dimension_numbers<[1], [0], [0], [1], [0, 0, 1, 1], [], []>} : vector<8x128xbf16>, vector<128x128xbf16>, vector<8x128xf32> -> vector<8x128xf32>
    %48 = arith.addf %45, %47 : vector<8x128xf32>
    %49 = math.tanh %48 : vector<8x128xf32>
    %50 = arith.truncf %49 : vector<8x128xf32> to vector<8x128xbf16>
    %c0_28 = arith.constant 0 : index
    %c3 = arith.constant 3 : index
    %c0_29 = arith.constant 0 : index
    %51 = vector.load %arg11[%c0_28, %c3, %c0_29] : memref<8x128x128xbf16, #tpu.memory_space<vmem>>, vector<8x1x128xbf16>
    %52 = vector.shape_cast %51 : vector<8x1x128xbf16> to vector<8x128xbf16>
    %53 = vector.shape_cast %50 : vector<8x128xbf16> to vector<8x1x128xbf16>
    tpu.vector_store %arg11[%c0_28, %c3, %c0_29], %53 {strides = array<i32>} : memref<8x128x128xbf16, #tpu.memory_space<vmem>>, vector<8x1x128xbf16>,
    %54 = vector.extract_strided_slice %11 {offsets = [0, 4, 0], sizes = [8, 1, 128], strides = [1, 1, 1]} : vector<8x8x128xf32> to vector<8x1x128xf32>
    %55 = vector.shape_cast %54 : vector<8x1x128xf32> to vector<8x128xf32>
    %56 = arith.truncf %49 : vector<8x128xf32> to vector<8x128xbf16>
    %cst_30 = arith.constant dense<0.000000e+00> : vector<8x128xf32>
    %57 = tpu.matmul %56, %12, %cst_30 {dimension_numbers = #tpu.dot_dimension_numbers<[1], [0], [0], [1], [0, 0, 1, 1], [], []>} : vector<8x128xbf16>, vector<128x128xbf16>, vector<8x128xf32> -> vector<8x128xf32>
    %58 = arith.addf %55, %57 : vector<8x128xf32>
    %59 = math.tanh %58 : vector<8x128xf32>
    %60 = arith.truncf %59 : vector<8x128xf32> to vector<8x128xbf16>
    %c0_31 = arith.constant 0 : index
    %c4 = arith.constant 4 : index
    %c0_32 = arith.constant 0 : index
    %61 = vector.load %arg11[%c0_31, %c4, %c0_32] : memref<8x128x128xbf16, #tpu.memory_space<vmem>>, vector<8x1x128xbf16>
    %62 = vector.shape_cast %61 : vector<8x1x128xbf16> to vector<8x128xbf16>
    %63 = vector.shape_cast %60 : vector<8x128xbf16> to vector<8x1x128xbf16>
    tpu.vector_store %arg11[%c0_31, %c4, %c0_32], %63 {strides = array<i32>} : memref<8x128x128xbf16, #tpu.memory_space<vmem>>, vector<8x1x128xbf16>,
    %64 = vector.extract_strided_slice %11 {offsets = [0, 5, 0], sizes = [8, 1, 128], strides = [1, 1, 1]} : vector<8x8x128xf32> to vector<8x1x128xf32>
    %65 = vector.shape_cast %64 : vector<8x1x128xf32> to vector<8x128xf32>
    %66 = arith.truncf %59 : vector<8x128xf32> to vector<8x128xbf16>
    %cst_33 = arith.constant dense<0.000000e+00> : vector<8x128xf32>
    %67 = tpu.matmul %66, %12, %cst_33 {dimension_numbers = #tpu.dot_dimension_numbers<[1], [0], [0], [1], [0, 0, 1, 1], [], []>} : vector<8x128xbf16>, vector<128x128xbf16>, vector<8x128xf32> -> vector<8x128xf32>
    %68 = arith.addf %65, %67 : vector<8x128xf32>
    %69 = math.tanh %68 : vector<8x128xf32>
    %70 = arith.truncf %69 : vector<8x128xf32> to vector<8x128xbf16>
    %c0_34 = arith.constant 0 : index
    %c5 = arith.constant 5 : index
    %c0_35 = arith.constant 0 : index
    %71 = vector.load %arg11[%c0_34, %c5, %c0_35] : memref<8x128x128xbf16, #tpu.memory_space<vmem>>, vector<8x1x128xbf16>
    %72 = vector.shape_cast %71 : vector<8x1x128xbf16> to vector<8x128xbf16>
    %73 = vector.shape_cast %70 : vector<8x128xbf16> to vector<8x1x128xbf16>
    tpu.vector_store %arg11[%c0_34, %c5, %c0_35], %73 {strides = array<i32>} : memref<8x128x128xbf16, #tpu.memory_space<vmem>>, vector<8x1x128xbf16>,
    %74 = vector.extract_strided_slice %11 {offsets = [0, 6, 0], sizes = [8, 1, 128], strides = [1, 1, 1]} : vector<8x8x128xf32> to vector<8x1x128xf32>
    %75 = vector.shape_cast %74 : vector<8x1x128xf32> to vector<8x128xf32>
    %76 = arith.truncf %69 : vector<8x128xf32> to vector<8x128xbf16>
    %cst_36 = arith.constant dense<0.000000e+00> : vector<8x128xf32>
    %77 = tpu.matmul %76, %12, %cst_36 {dimension_numbers = #tpu.dot_dimension_numbers<[1], [0], [0], [1], [0, 0, 1, 1], [], []>} : vector<8x128xbf16>, vector<128x128xbf16>, vector<8x128xf32> -> vector<8x128xf32>
    %78 = arith.addf %75, %77 : vector<8x128xf32>
    %79 = math.tanh %78 : vector<8x128xf32>
    %80 = arith.truncf %79 : vector<8x128xf32> to vector<8x128xbf16>
    %c0_37 = arith.constant 0 : index
    %c6 = arith.constant 6 : index
    %c0_38 = arith.constant 0 : index
    %81 = vector.load %arg11[%c0_37, %c6, %c0_38] : memref<8x128x128xbf16, #tpu.memory_space<vmem>>, vector<8x1x128xbf16>
    %82 = vector.shape_cast %81 : vector<8x1x128xbf16> to vector<8x128xbf16>
    %83 = vector.shape_cast %80 : vector<8x128xbf16> to vector<8x1x128xbf16>
    tpu.vector_store %arg11[%c0_37, %c6, %c0_38], %83 {strides = array<i32>} : memref<8x128x128xbf16, #tpu.memory_space<vmem>>, vector<8x1x128xbf16>,
    %84 = vector.extract_strided_slice %11 {offsets = [0, 7, 0], sizes = [8, 1, 128], strides = [1, 1, 1]} : vector<8x8x128xf32> to vector<8x1x128xf32>
    %85 = vector.shape_cast %84 : vector<8x1x128xf32> to vector<8x128xf32>
    %86 = arith.truncf %79 : vector<8x128xf32> to vector<8x128xbf16>
    %cst_39 = arith.constant dense<0.000000e+00> : vector<8x128xf32>
    %87 = tpu.matmul %86, %12, %cst_39 {dimension_numbers = #tpu.dot_dimension_numbers<[1], [0], [0], [1], [0, 0, 1, 1], [], []>} : vector<8x128xbf16>, vector<128x128xbf16>, vector<8x128xf32> -> vector<8x128xf32>
    %88 = arith.addf %85, %87 : vector<8x128xf32>
    %89 = math.tanh %88 : vector<8x128xf32>
    %90 = arith.truncf %89 : vector<8x128xf32> to vector<8x128xbf16>
    %c0_40 = arith.constant 0 : index
    %c7 = arith.constant 7 : index
    %c0_41 = arith.constant 0 : index
    %91 = vector.load %arg11[%c0_40, %c7, %c0_41] : memref<8x128x128xbf16, #tpu.memory_space<vmem>>, vector<8x1x128xbf16>
    %92 = vector.shape_cast %91 : vector<8x1x128xbf16> to vector<8x128xbf16>
    %93 = vector.shape_cast %90 : vector<8x128xbf16> to vector<8x1x128xbf16>
    tpu.vector_store %arg11[%c0_40, %c7, %c0_41], %93 {strides = array<i32>} : memref<8x128x128xbf16, #tpu.memory_space<vmem>>, vector<8x1x128xbf16>,
    %c0_42 = arith.constant 0 : index
    %c0_43 = arith.constant 0 : index
    %c0_44 = arith.constant 0 : index
    %94 = vector.load %arg1[%c0_42, %c0_43, %c0_44] : memref<8x8x128xbf16, #tpu.memory_space<vmem>>, vector<8x8x128xbf16>
    %95 = vector.shape_cast %94 : vector<8x8x128xbf16> to vector<64x128xbf16>
    %c0_45 = arith.constant 0 : index
    %c0_46 = arith.constant 0 : index
    %96 = vector.load %arg6[%c0_45, %c0_46] : memref<128x128xbf16, #tpu.memory_space<vmem>>, vector<128x128xbf16>
    %cst_47 = arith.constant dense<0.000000e+00> : vector<64x128xf32>
    %97 = tpu.matmul %95, %96, %cst_47 {dimension_numbers = #tpu.dot_dimension_numbers<[1], [0], [0], [1], [0, 0, 1, 1], [], []>} : vector<64x128xbf16>, vector<128x128xbf16>, vector<64x128xf32> -> vector<64x128xf32>
    %c0_48 = arith.constant 0 : index
    %c0_49 = arith.constant 0 : index
    %98 = vector.load %arg8[%c0_48, %c0_49] : memref<1x128xf32, #tpu.memory_space<vmem>>, vector<1x128xf32>
    %99 = vector.broadcast %98 : vector<1x128xf32> to vector<64x128xf32>
    %100 = arith.addf %97, %99 : vector<64x128xf32>
    %101 = vector.shape_cast %100 : vector<64x128xf32> to vector<8x8x128xf32>
    %c0_50 = arith.constant 0 : index
    %c0_51 = arith.constant 0 : index
    %102 = vector.load %arg7[%c0_50, %c0_51] : memref<128x128xbf16, #tpu.memory_space<vmem>>, vector<128x128xbf16>
    %103 = vector.extract_strided_slice %101 {offsets = [0, 0, 0], sizes = [8, 1, 128], strides = [1, 1, 1]} : vector<8x8x128xf32> to vector<8x1x128xf32>
    %104 = vector.shape_cast %103 : vector<8x1x128xf32> to vector<8x128xf32>
    %105 = arith.truncf %89 : vector<8x128xf32> to vector<8x128xbf16>
    %cst_52 = arith.constant dense<0.000000e+00> : vector<8x128xf32>
    %106 = tpu.matmul %105, %102, %cst_52 {dimension_numbers = #tpu.dot_dimension_numbers<[1], [0], [0], [1], [0, 0, 1, 1], [], []>} : vector<8x128xbf16>, vector<128x128xbf16>, vector<8x128xf32> -> vector<8x128xf32>
    %107 = arith.addf %104, %106 : vector<8x128xf32>
    %108 = math.tanh %107 : vector<8x128xf32>
    %109 = arith.truncf %108 : vector<8x128xf32> to vector<8x128xbf16>
    %c0_53 = arith.constant 0 : index
    %c0_54 = arith.constant 0 : index
    %c0_55 = arith.constant 0 : index
    %110 = vector.load %arg12[%c0_53, %c0_54, %c0_55] : memref<8x8x128xbf16, #tpu.memory_space<vmem>>, vector<8x1x128xbf16>
    %111 = vector.shape_cast %110 : vector<8x1x128xbf16> to vector<8x128xbf16>
    %112 = vector.shape_cast %109 : vector<8x128xbf16> to vector<8x1x128xbf16>
    tpu.vector_store %arg12[%c0_53, %c0_54, %c0_55], %112 {strides = array<i32>} : memref<8x8x128xbf16, #tpu.memory_space<vmem>>, vector<8x1x128xbf16>,
    %113 = vector.extract_strided_slice %101 {offsets = [0, 1, 0], sizes = [8, 1, 128], strides = [1, 1, 1]} : vector<8x8x128xf32> to vector<8x1x128xf32>
    %114 = vector.shape_cast %113 : vector<8x1x128xf32> to vector<8x128xf32>
    %115 = arith.truncf %108 : vector<8x128xf32> to vector<8x128xbf16>
    %cst_56 = arith.constant dense<0.000000e+00> : vector<8x128xf32>
    %116 = tpu.matmul %115, %102, %cst_56 {dimension_numbers = #tpu.dot_dimension_numbers<[1], [0], [0], [1], [0, 0, 1, 1], [], []>} : vector<8x128xbf16>, vector<128x128xbf16>, vector<8x128xf32> -> vector<8x128xf32>
    %117 = arith.addf %114, %116 : vector<8x128xf32>
    %118 = math.tanh %117 : vector<8x128xf32>
    %119 = arith.truncf %118 : vector<8x128xf32> to vector<8x128xbf16>
    %c0_57 = arith.constant 0 : index
    %c1_58 = arith.constant 1 : index
    %c0_59 = arith.constant 0 : index
    %120 = vector.load %arg12[%c0_57, %c1_58, %c0_59] : memref<8x8x128xbf16, #tpu.memory_space<vmem>>, vector<8x1x128xbf16>
    %121 = vector.shape_cast %120 : vector<8x1x128xbf16> to vector<8x128xbf16>
    %122 = vector.shape_cast %119 : vector<8x128xbf16> to vector<8x1x128xbf16>
    tpu.vector_store %arg12[%c0_57, %c1_58, %c0_59], %122 {strides = array<i32>} : memref<8x8x128xbf16, #tpu.memory_space<vmem>>, vector<8x1x128xbf16>,
    %123 = vector.extract_strided_slice %101 {offsets = [0, 2, 0], sizes = [8, 1, 128], strides = [1, 1, 1]} : vector<8x8x128xf32> to vector<8x1x128xf32>
    %124 = vector.shape_cast %123 : vector<8x1x128xf32> to vector<8x128xf32>
    %125 = arith.truncf %118 : vector<8x128xf32> to vector<8x128xbf16>
    %cst_60 = arith.constant dense<0.000000e+00> : vector<8x128xf32>
    %126 = tpu.matmul %125, %102, %cst_60 {dimension_numbers = #tpu.dot_dimension_numbers<[1], [0], [0], [1], [0, 0, 1, 1], [], []>} : vector<8x128xbf16>, vector<128x128xbf16>, vector<8x128xf32> -> vector<8x128xf32>
    %127 = arith.addf %124, %126 : vector<8x128xf32>
    %128 = math.tanh %127 : vector<8x128xf32>
    %129 = arith.truncf %128 : vector<8x128xf32> to vector<8x128xbf16>
    %c0_61 = arith.constant 0 : index
    %c2_62 = arith.constant 2 : index
    %c0_63 = arith.constant 0 : index
    %130 = vector.load %arg12[%c0_61, %c2_62, %c0_63] : memref<8x8x128xbf16, #tpu.memory_space<vmem>>, vector<8x1x128xbf16>
    %131 = vector.shape_cast %130 : vector<8x1x128xbf16> to vector<8x128xbf16>
    %132 = vector.shape_cast %129 : vector<8x128xbf16> to vector<8x1x128xbf16>
    tpu.vector_store %arg12[%c0_61, %c2_62, %c0_63], %132 {strides = array<i32>} : memref<8x8x128xbf16, #tpu.memory_space<vmem>>, vector<8x1x128xbf16>,
    %133 = vector.extract_strided_slice %101 {offsets = [0, 3, 0], sizes = [8, 1, 128], strides = [1, 1, 1]} : vector<8x8x128xf32> to vector<8x1x128xf32>
    %134 = vector.shape_cast %133 : vector<8x1x128xf32> to vector<8x128xf32>
    %135 = arith.truncf %128 : vector<8x128xf32> to vector<8x128xbf16>
    %cst_64 = arith.constant dense<0.000000e+00> : vector<8x128xf32>
    %136 = tpu.matmul %135, %102, %cst_64 {dimension_numbers = #tpu.dot_dimension_numbers<[1], [0], [0], [1], [0, 0, 1, 1], [], []>} : vector<8x128xbf16>, vector<128x128xbf16>, vector<8x128xf32> -> vector<8x128xf32>
    %137 = arith.addf %134, %136 : vector<8x128xf32>
    %138 = math.tanh %137 : vector<8x128xf32>
    %139 = arith.truncf %138 : vector<8x128xf32> to vector<8x128xbf16>
    %c0_65 = arith.constant 0 : index
    %c3_66 = arith.constant 3 : index
    %c0_67 = arith.constant 0 : index
    %140 = vector.load %arg12[%c0_65, %c3_66, %c0_67] : memref<8x8x128xbf16, #tpu.memory_space<vmem>>, vector<8x1x128xbf16>
    %141 = vector.shape_cast %140 : vector<8x1x128xbf16> to vector<8x128xbf16>
    %142 = vector.shape_cast %139 : vector<8x128xbf16> to vector<8x1x128xbf16>
    tpu.vector_store %arg12[%c0_65, %c3_66, %c0_67], %142 {strides = array<i32>} : memref<8x8x128xbf16, #tpu.memory_space<vmem>>, vector<8x1x128xbf16>,
    %143 = vector.extract_strided_slice %101 {offsets = [0, 4, 0], sizes = [8, 1, 128], strides = [1, 1, 1]} : vector<8x8x128xf32> to vector<8x1x128xf32>
    %144 = vector.shape_cast %143 : vector<8x1x128xf32> to vector<8x128xf32>
    %145 = arith.truncf %138 : vector<8x128xf32> to vector<8x128xbf16>
    %cst_68 = arith.constant dense<0.000000e+00> : vector<8x128xf32>
    %146 = tpu.matmul %145, %102, %cst_68 {dimension_numbers = #tpu.dot_dimension_numbers<[1], [0], [0], [1], [0, 0, 1, 1], [], []>} : vector<8x128xbf16>, vector<128x128xbf16>, vector<8x128xf32> -> vector<8x128xf32>
    %147 = arith.addf %144, %146 : vector<8x128xf32>
    %148 = math.tanh %147 : vector<8x128xf32>
    %149 = arith.truncf %148 : vector<8x128xf32> to vector<8x128xbf16>
    %c0_69 = arith.constant 0 : index
    %c4_70 = arith.constant 4 : index
    %c0_71 = arith.constant 0 : index
    %150 = vector.load %arg12[%c0_69, %c4_70, %c0_71] : memref<8x8x128xbf16, #tpu.memory_space<vmem>>, vector<8x1x128xbf16>
    %151 = vector.shape_cast %150 : vector<8x1x128xbf16> to vector<8x128xbf16>
    %152 = vector.shape_cast %149 : vector<8x128xbf16> to vector<8x1x128xbf16>
    tpu.vector_store %arg12[%c0_69, %c4_70, %c0_71], %152 {strides = array<i32>} : memref<8x8x128xbf16, #tpu.memory_space<vmem>>, vector<8x1x128xbf16>,
    %153 = vector.extract_strided_slice %101 {offsets = [0, 5, 0], sizes = [8, 1, 128], strides = [1, 1, 1]} : vector<8x8x128xf32> to vector<8x1x128xf32>
    %154 = vector.shape_cast %153 : vector<8x1x128xf32> to vector<8x128xf32>
    %155 = arith.truncf %148 : vector<8x128xf32> to vector<8x128xbf16>
    %cst_72 = arith.constant dense<0.000000e+00> : vector<8x128xf32>
    %156 = tpu.matmul %155, %102, %cst_72 {dimension_numbers = #tpu.dot_dimension_numbers<[1], [0], [0], [1], [0, 0, 1, 1], [], []>} : vector<8x128xbf16>, vector<128x128xbf16>, vector<8x128xf32> -> vector<8x128xf32>
    %157 = arith.addf %154, %156 : vector<8x128xf32>
    %158 = math.tanh %157 : vector<8x128xf32>
    %159 = arith.truncf %158 : vector<8x128xf32> to vector<8x128xbf16>
    %c0_73 = arith.constant 0 : index
    %c5_74 = arith.constant 5 : index
    %c0_75 = arith.constant 0 : index
    %160 = vector.load %arg12[%c0_73, %c5_74, %c0_75] : memref<8x8x128xbf16, #tpu.memory_space<vmem>>, vector<8x1x128xbf16>
    %161 = vector.shape_cast %160 : vector<8x1x128xbf16> to vector<8x128xbf16>
    %162 = vector.shape_cast %159 : vector<8x128xbf16> to vector<8x1x128xbf16>
    tpu.vector_store %arg12[%c0_73, %c5_74, %c0_75], %162 {strides = array<i32>} : memref<8x8x128xbf16, #tpu.memory_space<vmem>>, vector<8x1x128xbf16>,
    %163 = vector.extract_strided_slice %101 {offsets = [0, 6, 0], sizes = [8, 1, 128], strides = [1, 1, 1]} : vector<8x8x128xf32> to vector<8x1x128xf32>
    %164 = vector.shape_cast %163 : vector<8x1x128xf32> to vector<8x128xf32>
    %165 = arith.truncf %158 : vector<8x128xf32> to vector<8x128xbf16>
    %cst_76 = arith.constant dense<0.000000e+00> : vector<8x128xf32>
    %166 = tpu.matmul %165, %102, %cst_76 {dimension_numbers = #tpu.dot_dimension_numbers<[1], [0], [0], [1], [0, 0, 1, 1], [], []>} : vector<8x128xbf16>, vector<128x128xbf16>, vector<8x128xf32> -> vector<8x128xf32>
    %167 = arith.addf %164, %166 : vector<8x128xf32>
    %168 = math.tanh %167 : vector<8x128xf32>
    %169 = arith.truncf %168 : vector<8x128xf32> to vector<8x128xbf16>
    %c0_77 = arith.constant 0 : index
    %c6_78 = arith.constant 6 : index
    %c0_79 = arith.constant 0 : index
    %170 = vector.load %arg12[%c0_77, %c6_78, %c0_79] : memref<8x8x128xbf16, #tpu.memory_space<vmem>>, vector<8x1x128xbf16>
    %171 = vector.shape_cast %170 : vector<8x1x128xbf16> to vector<8x128xbf16>
    %172 = vector.shape_cast %169 : vector<8x128xbf16> to vector<8x1x128xbf16>
    tpu.vector_store %arg12[%c0_77, %c6_78, %c0_79], %172 {strides = array<i32>} : memref<8x8x128xbf16, #tpu.memory_space<vmem>>, vector<8x1x128xbf16>,
    %c0_80 = arith.constant 0 : index
    %c0_81 = arith.constant 0 : index
    %c0_82 = arith.constant 0 : index
    %173 = vector.load %arg12[%c0_80, %c0_81, %c0_82] : memref<8x8x128xbf16, #tpu.memory_space<vmem>>, vector<8x8x128xbf16>
    %c0_83 = arith.constant 0 : index
    %c0_84 = arith.constant 0 : index
    %c0_85 = arith.constant 0 : index
    %174 = vector.load %arg11[%c0_83, %c0_84, %c0_85] : memref<8x128x128xbf16, #tpu.memory_space<vmem>>, vector<8x128x128xbf16>
    "tpu.trace_start"() <{level = 10 : i32, message = "bth,bsh->bts"}> : () -> ()
    %cst_86 = arith.constant dense<0.000000e+00> : vector<8x8x128xf32>
    %175 = tpu.matmul %173, %174, %cst_86 {dimension_numbers = #tpu.dot_dimension_numbers<[2], [2], [1], [1], [0, 0, 0, 1, 1, 1], [0], [0]>} : vector<8x8x128xbf16>, vector<8x128x128xbf16>, vector<8x8x128xf32> -> vector<8x8x128xf32>
    "tpu.trace_stop"() : () -> ()
    %c0_87 = arith.constant 0 : index
    %c0_88 = arith.constant 0 : index
    %176 = vector.load %arg2[%c0_87, %c0_88] : memref<8x128xf32, #tpu.memory_space<vmem>>, vector<8x128xf32>
    %177 = vector.shape_cast %176 : vector<8x128xf32> to vector<8x1x128xf32>
    %178 = vector.broadcast %177 : vector<8x1x128xf32> to vector<8x8x128xf32>
    %179 = arith.addf %175, %178 : vector<8x8x128xf32>
    %cst_89 = arith.constant dense<0xFF800000> : vector<8x8xf32>
    %180 = vector.multi_reduction <maximumf>, %179, %cst_89 [2] : vector<8x8x128xf32> to vector<8x8xf32>
    %181 = vector.shape_cast %180 : vector<8x8xf32> to vector<8x8x1xf32>
    %182 = vector.broadcast %181 : vector<8x8x1xf32> to vector<8x8x128xf32>
    %183 = arith.subf %179, %182 : vector<8x8x128xf32>
    %184 = math.exp %183 : vector<8x8x128xf32>
    %cst_90 = arith.constant dense<0.000000e+00> : vector<8x8xf32>
    %185 = vector.multi_reduction <add>, %184, %cst_90 [2] : vector<8x8x128xf32> to vector<8x8xf32>
    %186 = vector.shape_cast %185 : vector<8x8xf32> to vector<8x8x1xf32>
    %187 = tpu.reciprocal %186 {approx = true} : vector<8x8x1xf32> -> vector<8x8x1xf32>
    %188 = vector.broadcast %187 : vector<8x8x1xf32> to vector<8x8x128xf32>
    %189 = arith.mulf %184, %188 : vector<8x8x128xf32>
    %c0_91 = arith.constant 0 : index
    %c0_92 = arith.constant 0 : index
    %c0_93 = arith.constant 0 : index
    %190 = vector.load %arg9[%c0_91, %c0_92, %c0_93] : memref<8x8x128xf32, #tpu.memory_space<vmem>>, vector<8x8x128xf32>
    tpu.vector_store %arg9[%c0_91, %c0_92, %c0_93], %189 {strides = array<i32>} : memref<8x8x128xf32, #tpu.memory_space<vmem>>, vector<8x8x128xf32>,
    %191 = arith.truncf %189 : vector<8x8x128xf32> to vector<8x8x128xbf16>
    "tpu.trace_start"() <{level = 10 : i32, message = "bts,bsh->bth"}> : () -> ()
    %cst_94 = arith.constant dense<0.000000e+00> : vector<8x8x128xf32>
    %192 = tpu.matmul %191, %174, %cst_94 {dimension_numbers = #tpu.dot_dimension_numbers<[2], [1], [1], [2], [0, 0, 0, 1, 1, 2], [0], [0]>} : vector<8x8x128xbf16>, vector<8x128x128xbf16>, vector<8x8x128xf32> -> vector<8x8x128xf32>
    "tpu.trace_stop"() : () -> ()
    %193 = vector.shape_cast %173 : vector<8x8x128xbf16> to vector<64x128xbf16>
    %c0_95 = arith.constant 0 : index
    %c0_96 = arith.constant 0 : index
    %194 = vector.load %arg10[%c0_95, %c0_96] : memref<64x256xbf16, #tpu.memory_space<vmem>>, vector<64x128xbf16>
    tpu.vector_store %arg10[%c0_95, %c0_96], %193 {strides = array<i32>} : memref<64x256xbf16, #tpu.memory_space<vmem>>, vector<64x128xbf16>,
    %195 = vector.shape_cast %192 : vector<8x8x128xf32> to vector<64x128xf32>
    %196 = arith.truncf %195 : vector<64x128xf32> to vector<64x128xbf16>
    %c0_97 = arith.constant 0 : index
    %c128 = arith.constant 128 : index
    %197 = vector.load %arg10[%c0_97, %c128] : memref<64x256xbf16, #tpu.memory_space<vmem>>, vector<64x128xbf16>
    tpu.vector_store %arg10[%c0_97, %c128], %196 {strides = array<i32>} : memref<64x256xbf16, #tpu.memory_space<vmem>>, vector<64x128xbf16>,
    return
  }
}

module attributes {stable_mosaic.version = 11 : i64} {
  func.func @_proj_kernel(%arg0: i32, %arg1: memref<64x256xbf16, #tpu.memory_space<vmem>>, %arg2: memref<256x128xbf16, #tpu.memory_space<vmem>>, %arg3: memref<1x128xf32, #tpu.memory_space<vmem>>, %arg4: memref<64x128xf32, #tpu.memory_space<vmem>>) attributes {dimension_semantics = [#tpu.dimension_semantics<parallel>], iteration_bounds = array<i64: 1>, scalar_prefetch = 0 : i64, scratch_operands = 0 : i64, tpu.core_type = #tpu.core_type<tc>, window_params = [{pipeline_mode = #tpu.pipeline_mode<synchronous>, transform_indices = @transform_0, window_bounds = array<i64: 64, 256>}, {transform_indices = @transform_1, window_bounds = array<i64: 256, 128>}, {transform_indices = @transform_2, window_bounds = array<i64: 1, 128>}, {transform_indices = @transform_3, window_bounds = array<i64: 64, 128>}]} {
    %c0 = arith.constant 0 : index
    %c0_0 = arith.constant 0 : index
    %0 = vector.load %arg1[%c0, %c0_0] : memref<64x256xbf16, #tpu.memory_space<vmem>>, vector<64x256xbf16>
    %c0_1 = arith.constant 0 : index
    %c0_2 = arith.constant 0 : index
    %1 = vector.load %arg2[%c0_1, %c0_2] : memref<256x128xbf16, #tpu.memory_space<vmem>>, vector<256x128xbf16>
    %cst = arith.constant dense<0.000000e+00> : vector<64x128xf32>
    %2 = tpu.matmul %0, %1, %cst {dimension_numbers = #tpu.dot_dimension_numbers<[1], [0], [0], [1], [0, 0, 1, 1], [], []>} : vector<64x256xbf16>, vector<256x128xbf16>, vector<64x128xf32> -> vector<64x128xf32>
    %c0_3 = arith.constant 0 : index
    %c0_4 = arith.constant 0 : index
    %3 = vector.load %arg3[%c0_3, %c0_4] : memref<1x128xf32, #tpu.memory_space<vmem>>, vector<1x128xf32>
    %4 = vector.broadcast %3 : vector<1x128xf32> to vector<64x128xf32>
    %5 = arith.addf %2, %4 : vector<64x128xf32>
    %c0_5 = arith.constant 0 : index
    %c0_6 = arith.constant 0 : index
    %6 = vector.load %arg4[%c0_5, %c0_6] : memref<64x128xf32, #tpu.memory_space<vmem>>, vector<64x128xf32>
    tpu.vector_store %arg4[%c0_5, %c0_6], %5 {strides = array<i32>} : memref<64x128xf32, #tpu.memory_space<vmem>>, vector<64x128xf32>,
    return
  }
  func.func @transform_0(%arg0: i32) -> (i32, i32) {
    %c0_i32 = arith.constant 0 : i32
    %c0_i32_0 = arith.constant 0 : i32
    %c0_i32_1 = arith.constant 0 : i32
    return %c0_i32, %c0_i32_0 : i32, i32
  }
  func.func @transform_1(%arg0: i32) -> (i32, i32) {
    %c0_i32 = arith.constant 0 : i32
    %c0_i32_0 = arith.constant 0 : i32
    return %c0_i32, %arg0 : i32, i32
  }
  func.func @transform_2(%arg0: i32) -> (i32, i32) {
    %c0_i32 = arith.constant 0 : i32
    %c0_i32_0 = arith.constant 0 : i32
    return %c0_i32, %arg0 : i32, i32
  }
  func.func @transform_3(%arg0: i32) -> (i32, i32) {
    %c0_i32 = arith.constant 0 : i32
    %c0_i32_0 = arith.constant 0 : i32
    return %c0_i32, %arg0 : i32, i32
  }
}

</mosaic_0001>

<llo_original>
// kernel: _seq2seq_apply.3
$region0: #{_seq2seq_apply.3}
  #allocation0 [shape = 'u32[]', space=smem, size = 0x4, offset = 0x4, fixed_abs, tag = 'smem constant byte address 0x4 - core index']
  #allocation1 [shape = 'u32[72,128]{1,0:T(1,128)}', space=vmem, size = 0x9000, scoped, tag = 'internal scratch']
  %s0 = inlined_call_operand.vmem [shape: bf16[64,256], index: 0, kind: input, shape index: {}]
  %s1 = inlined_call_operand.vmem [shape: bf16[256,128], index: 1, kind: input, shape index: {}]
  %s2 = inlined_call_operand.vmem [shape: f32[1,128], index: 2, kind: input, shape index: {}]
  %s3 = inlined_call_operand.vmem [shape: f32[64,128], index: 3, kind: output, shape index: {}]
  %s4 = sld [smem:[#allocation0]]
  $region22: #{_seq2seq_apply.3} parent=0
    _
  %s6 = ssub.s32 1, %s4
  %s7 = scalar_select 0, %s6, %s4
  // Predicated region
  $region2: #{_seq2seq_apply.3} parent=0 // pred_check
    _
  $region3: #{_seq2seq_apply.3} parent=0 // pred_check_branch
    %9 = sbr.rel (0) target = $region5
  $region4: #{_seq2seq_apply.3} parent=0 // pred_region
    _
  $region5: #{_seq2seq_apply.3} parent=0 // pred_fallthru
    _
  // Predicated region
  $region6: #{_seq2seq_apply.3} parent=0 // pred_check
    _
  $region7: #{_seq2seq_apply.3} parent=0 // pred_check_branch
    %11 = sbr.rel (0) target = $region9
  $region8: #{_seq2seq_apply.3} parent=0 // pred_region
    _
  $region9: #{_seq2seq_apply.3} parent=0 // pred_fallthru
    _
  // Predicated region
  $region10: #{_seq2seq_apply.3} parent=0 // pred_check
    _
  $region11: #{_seq2seq_apply.3} parent=0 // pred_check_branch
    %13 = sbr.rel (0) target = $region13
  $region12: #{_seq2seq_apply.3} parent=0 // pred_region
    _
  $region13: #{_seq2seq_apply.3} parent=0 // pred_fallthru
    _
  %v14 = vld [vmem:[%s0] sm:$0xff]
  %v15 = vld [vmem:[%s0 + $0x8] sm:$0xff]
  %v16 = vld [vmem:[%s0 + $0x10] sm:$0xff]
  %v17 = vld [vmem:[%s0 + $0x18] sm:$0xff]
  %v18 = vld [vmem:[%s0 + $0x20] sm:$0xff]
  %v19 = vld [vmem:[%s0 + $0x28] sm:$0xff]
  %v20 = vld [vmem:[%s0 + $0x30] sm:$0xff]
  %v21 = vld [vmem:[%s0 + $0x38] sm:$0xff]
  %v22 = vld [vmem:[%s1] sm:$0xf]
  %v23 = vld [vmem:[%s1 + $0x4] sm:$0xf]
  %v24 = vld [vmem:[%s1 + $0x8] sm:$0xf]
  %v25 = vld [vmem:[%s1 + $0xc] sm:$0xf]
  %v26 = vld [vmem:[%s1 + $0x10] sm:$0xf]
  %v27 = vld [vmem:[%s1 + $0x14] sm:$0xf]
  %v28 = vld [vmem:[%s1 + $0x18] sm:$0xf]
  %v29 = vld [vmem:[%s1 + $0x1c] sm:$0xf]
  %v30 = vld [vmem:[%s1 + $0x20] sm:$0xf]
  %v31 = vld [vmem:[%s1 + $0x24] sm:$0xf]
  %v32 = vld [vmem:[%s1 + $0x28] sm:$0xf]
  %v33 = vld [vmem:[%s1 + $0x2c] sm:$0xf]
  %v34 = vld [vmem:[%s1 + $0x30] sm:$0xf]
  %v35 = vld [vmem:[%s1 + $0x34] sm:$0xf]
  %v36 = vld [vmem:[%s1 + $0x38] sm:$0xf]
  %v37 = vld [vmem:[%s1 + $0x3c] sm:$0xf]
  %v38 = vld [vmem:[%s1 + $0x40] sm:$0xf]
  %v39 = vld [vmem:[%s1 + $0x44] sm:$0xf]
  %v40 = vld [vmem:[%s1 + $0x48] sm:$0xf]
  %v41 = vld [vmem:[%s1 + $0x4c] sm:$0xf]
  %v42 = vld [vmem:[%s1 + $0x50] sm:$0xf]
  %v43 = vld [vmem:[%s1 + $0x54] sm:$0xf]
  %v44 = vld [vmem:[%s1 + $0x58] sm:$0xf]
  %v45 = vld [vmem:[%s1 + $0x5c] sm:$0xf]
  %v46 = vld [vmem:[%s1 + $0x60] sm:$0xf]
  %v47 = vld [vmem:[%s1 + $0x64] sm:$0xf]
  %v48 = vld [vmem:[%s1 + $0x68] sm:$0xf]
  %v49 = vld [vmem:[%s1 + $0x6c] sm:$0xf]
  %v50 = vld [vmem:[%s1 + $0x70] sm:$0xf]
  %v51 = vld [vmem:[%s1 + $0x74] sm:$0xf]
  %v52 = vld [vmem:[%s1 + $0x78] sm:$0xf]
  %v53 = vld [vmem:[%s1 + $0x7c] sm:$0xf]
  %v54 = vld [vmem:[%s2] sm:$0x1]
  %v56 = vperm.slane %v54, 0
  %v66 = vunpack.c.l.b16 %v14
  %v67 = vunpack.c.h.b16 %v14
  %v68 = vunpack.c.l.b16 %v15
  %v69 = vunpack.c.h.b16 %v15
  %v70 = vunpack.c.l.b16 %v16
  %v71 = vunpack.c.h.b16 %v16
  %v72 = vunpack.c.l.b16 %v17
  %v73 = vunpack.c.h.b16 %v17
  %v74 = vunpack.c.l.b16 %v18
  %v75 = vunpack.c.h.b16 %v18
  %v76 = vunpack.c.l.b16 %v19
  %v77 = vunpack.c.h.b16 %v19
  %v78 = vunpack.c.l.b16 %v20
  %v79 = vunpack.c.h.b16 %v20
  %v80 = vunpack.c.l.b16 %v21
  %v81 = vunpack.c.h.b16 %v21
  %v82 = vpack.c.b16 %v68, %v66
  %v83 = vpack.c.b16 %v69, %v67
  %v84 = vpack.c.b16 %v72, %v70
  %v85 = vpack.c.b16 %v73, %v71
  %v86 = vpack.c.b16 %v76, %v74
  %v87 = vpack.c.b16 %v77, %v75
  %v88 = vpack.c.b16 %v80, %v78
  %v89 = vpack.c.b16 %v81, %v79
  %v130 = vunpack.c.l.b16 %v22
  %v131 = vunpack.c.l.b16 %v23
  %v132 = vunpack.c.l.b16 %v24
  %v133 = vunpack.c.l.b16 %v25
  %v134 = vunpack.c.l.b16 %v26
  %v135 = vunpack.c.l.b16 %v27
  %v136 = vunpack.c.l.b16 %v28
  %v137 = vunpack.c.l.b16 %v29
  %v138 = vunpack.c.l.b16 %v30
  %v139 = vunpack.c.l.b16 %v31
  %v140 = vunpack.c.l.b16 %v32
  %v141 = vunpack.c.l.b16 %v33
  %v142 = vunpack.c.l.b16 %v34
  %v143 = vunpack.c.l.b16 %v35
  %v144 = vunpack.c.l.b16 %v36
  %v145 = vunpack.c.l.b16 %v37
  %v146 = vunpack.c.l.b16 %v38
  %v147 = vunpack.c.l.b16 %v39
  %v148 = vunpack.c.l.b16 %v40
  %v149 = vunpack.c.l.b16 %v41
  %v150 = vunpack.c.l.b16 %v42
  %v151 = vunpack.c.l.b16 %v43
  %v152 = vunpack.c.l.b16 %v44
  %v153 = vunpack.c.l.b16 %v45
  %v154 = vunpack.c.l.b16 %v46
  %v155 = vunpack.c.l.b16 %v47
  %v156 = vunpack.c.l.b16 %v48
  %v157 = vunpack.c.l.b16 %v49
  %v158 = vunpack.c.l.b16 %v50
  %v159 = vunpack.c.l.b16 %v51
  %v160 = vunpack.c.l.b16 %v52
  %v161 = vunpack.c.l.b16 %v53
  %v162 = vpack.c.b16 %v131, %v130
  %v163 = vpack.c.b16 %v133, %v132
  %v164 = vpack.c.b16 %v135, %v134
  %v165 = vpack.c.b16 %v137, %v136
  %v166 = vpack.c.b16 %v139, %v138
  %v167 = vpack.c.b16 %v141, %v140
  %v168 = vpack.c.b16 %v143, %v142
  %v169 = vpack.c.b16 %v145, %v144
  %v170 = vpack.c.b16 %v147, %v146
  %v171 = vpack.c.b16 %v149, %v148
  %v172 = vpack.c.b16 %v151, %v150
  %v173 = vpack.c.b16 %v153, %v152
  %v174 = vpack.c.b16 %v155, %v154
  %v175 = vpack.c.b16 %v157, %v156
  %v176 = vpack.c.b16 %v159, %v158
  %v177 = vpack.c.b16 %v161, %v160
  %194 = vmatpush.bf16.msra.mxu0 %v169
  %195 = vmatpush.bf16.msra.mxu0 %v168
  %196 = vmatpush.bf16.msra.mxu0 %v167
  %197 = vmatpush.bf16.msra.mxu0 %v166
  %198 = vmatpush.bf16.msra.mxu0 %v165
  %199 = vmatpush.bf16.msra.mxu0 %v164
  %200 = vmatpush.bf16.msra.mxu0 %v163
  %201 = vmatpush.bf16.msra.mxu0 %v162
  %202 = vmatmul.bf16.gmra.mxu0 %v82
  %v203 = vpop.f32.mrf.mxu0
  %v204 = vadd.f32 %v56, %v203
  %v205 = vpop.f32.mrf.mxu0
  %v206 = vadd.f32 %v56, %v205
  %207 = vmatmul.bf16.gmra.mxu0 %v84
  %v208 = vpop.f32.mrf.mxu0
  %v209 = vadd.f32 %v56, %v208
  %v210 = vpop.f32.mrf.mxu0
  %v211 = vadd.f32 %v56, %v210
  %212 = vmatmul.bf16.gmra.mxu0 %v86
  %v213 = vpop.f32.mrf.mxu0
  %v214 = vadd.f32 %v56, %v213
  %v215 = vpop.f32.mrf.mxu0
  %v216 = vadd.f32 %v56, %v215
  %217 = vmatmul.bf16.gmra.mxu0 %v88
  %v218 = vpop.f32.mrf.mxu0
  %v219 = vadd.f32 %v56, %v218
  %v220 = vpop.f32.mrf.mxu0
  %v221 = vadd.f32 %v56, %v220
  %222 = vdwg.mxu0
  %223 = vmatpush.bf16.msra.mxu0 %v177
  %224 = vmatpush.bf16.msra.mxu0 %v176
  %225 = vmatpush.bf16.msra.mxu0 %v175
  %226 = vmatpush.bf16.msra.mxu0 %v174
  %227 = vmatpush.bf16.msra.mxu0 %v173
  %228 = vmatpush.bf16.msra.mxu0 %v172
  %229 = vmatpush.bf16.msra.mxu0 %v171
  %230 = vmatpush.bf16.msra.mxu0 %v170
  %231 = vmatmul.bf16.gmra.mxu0 %v83
  %v232 = vpop.f32.mrf.mxu0
  %v233 = vadd.f32 %v204, %v232
  %v234 = vpop.f32.mrf.mxu0
  %v235 = vadd.f32 %v206, %v234
  %236 = vmatmul.bf16.gmra.mxu0 %v85
  %v237 = vpop.f32.mrf.mxu0
  %v238 = vadd.f32 %v209, %v237
  %v239 = vpop.f32.mrf.mxu0
  %v240 = vadd.f32 %v211, %v239
  %241 = vmatmul.bf16.gmra.mxu0 %v87
  %v242 = vpop.f32.mrf.mxu0
  %v243 = vadd.f32 %v214, %v242
  %v244 = vpop.f32.mrf.mxu0
  %v245 = vadd.f32 %v216, %v244
  %246 = vmatmul.bf16.gmra.mxu0 %v89
  %v247 = vpop.f32.mrf.mxu0
  %v248 = vadd.f32 %v219, %v247
  %v249 = vpop.f32.mrf.mxu0
  %v250 = vadd.f32 %v221, %v249
  %251 = vdwg.mxu0
  %252 = vst [vmem:[%s3] sm:$0xff] %v233
  %253 = vst [vmem:[%s3 + $0x8] sm:$0xff] %v235
  %254 = vst [vmem:[%s3 + $0x10] sm:$0xff] %v238
  %255 = vst [vmem:[%s3 + $0x18] sm:$0xff] %v240
  %256 = vst [vmem:[%s3 + $0x20] sm:$0xff] %v243
  %257 = vst [vmem:[%s3 + $0x28] sm:$0xff] %v245
  %258 = vst [vmem:[%s3 + $0x30] sm:$0xff] %v248
  %259 = vst [vmem:[%s3 + $0x38] sm:$0xff] %v250
  // Predicated region
  $region14: #{_seq2seq_apply.3} parent=0 // pred_check
    _
  $region15: #{_seq2seq_apply.3} parent=0 // pred_check_branch
    %261 = sbr.rel (0) target = $region17
  $region16: #{_seq2seq_apply.3} parent=0 // pred_region
    _
  $region17: #{_seq2seq_apply.3} parent=0 // pred_fallthru
    _
  // Predicated region
  $region18: #{_seq2seq_apply.3} parent=0 // pred_check
    _
  $region19: #{_seq2seq_apply.3} parent=0 // pred_check_branch
    %263 = sbr.rel (0) target = $region21
  $region20: #{_seq2seq_apply.3} parent=0 // pred_region
    _
  $region21: #{_seq2seq_apply.3} parent=0 // pred_fallthru
    _

// kernel: _seq2seq_apply.2
$region0: #{_seq2seq_apply.2}
  #allocation0 [shape = 'u32[]', space=smem, size = 0x4, offset = 0x4, fixed_abs, tag = 'smem constant byte address 0x4 - core index']
  #allocation1 [shape = 'u32[72,128]{1,0:T(1,128)}', space=vmem, size = 0x9000, scoped, tag = 'internal scratch']
  #allocation2 [shape = 'bf16[8,128,128]{2,1,0:T(8,128)(2,1)}', space=vmem, size = 0x40000, scoped, tag = 'scratch operand']
  #allocation3 [shape = 'bf16[8,8,128]{2,1,0:T(8,128)(2,1)}', space=vmem, size = 0x4000, scoped, tag = 'scratch operand']
  %s0 = inlined_call_operand.vmem [shape: bf16[8,8,128], index: 0, kind: input, shape index: {}]
  %s1 = inlined_call_operand.vmem [shape: bf16[8,8,128], index: 1, kind: input, shape index: {}]
  %s2 = inlined_call_operand.vmem [shape: f32[8,128], index: 2, kind: input, shape index: {}]
  %s3 = inlined_call_operand.vmem [shape: bf16[128,128], index: 3, kind: input, shape index: {}]
  %s4 = inlined_call_operand.vmem [shape: bf16[128,128], index: 4, kind: input, shape index: {}]
  %s5 = inlined_call_operand.vmem [shape: f32[1,128], index: 5, kind: input, shape index: {}]
  %s6 = inlined_call_operand.hbm [shape: bf16[128,128], index: 6, kind: input, shape index: {}]
  %s7 = inlined_call_operand.hbm [shape: bf16[128,128], index: 7, kind: input, shape index: {}]
  %s8 = inlined_call_operand.vmem [shape: f32[1,128], index: 8, kind: input, shape index: {}]
  %s9 = inlined_call_operand.vmem [shape: f32[8,8,128], index: 9, kind: output, shape index: {0}]
  %s10 = inlined_call_operand.vmem [shape: bf16[64,256], index: 10, kind: output, shape index: {1}]
  %11 = xla_tuple %s9, %s10
  %s12 = sld [smem:[#allocation0]]
  $region62: #{_seq2seq_apply.2} parent=0
    _
  %s14 = ssub.s32 1, %s12
  %s15 = scalar_select 0, %s14, %s12
  $region1: #{_seq2seq_apply.2} parent=0
    #allocation4 [shape = 'u8[32768]{0}', space=vmem, size = 0x8000, scoped, tag = 'input window, operand 6, single buffered']
    #allocation5 [shape = 's32[1]{0}', space=sflag, size = 0x4, scoped, tag = 'scoped memory for _seq2seq_apply.2']
    #allocation6 [shape = 'u8[32768]{0}', space=vmem, size = 0x8000, scoped, tag = 'input window, operand 7, single buffered']
    #allocation7 [shape = 's32[1]{0}', space=sflag, size = 0x4, scoped, tag = 'scoped memory for _seq2seq_apply.2']
    %16 = vsyncpa [#allocation5], 0
    %17 = vsyncpa [#allocation7], 0
    // Predicated region
    $region2: #{_seq2seq_apply.2} parent=1 // pred_check
      _
    $region3: #{_seq2seq_apply.2} parent=1 // pred_check_branch
      %19 = sbr.rel (0) target = $region5
    $region4: #{_seq2seq_apply.2} parent=1 // pred_region
      _
    $region5: #{_seq2seq_apply.2} parent=1 // pred_fallthru
      _
    // Predicated region
    $region6: #{_seq2seq_apply.2} parent=1 // pred_check
      _
    $region7: #{_seq2seq_apply.2} parent=1 // pred_check_branch
      %21 = sbr.rel (0) target = $region9
    $region8: #{_seq2seq_apply.2} parent=1 // pred_region
      _
    $region9: #{_seq2seq_apply.2} parent=1 // pred_fallthru
      _
    // Predicated region
    $region10: #{_seq2seq_apply.2} parent=1 // pred_check
      _
    $region11: #{_seq2seq_apply.2} parent=1 // pred_check_branch
      %23 = sbr.rel (0) target = $region13
    $region12: #{_seq2seq_apply.2} parent=1 // pred_region
      _
    $region13: #{_seq2seq_apply.2} parent=1 // pred_fallthru
      _
    // Predicated region
    $region14: #{_seq2seq_apply.2} parent=1 // pred_check
      _
    $region15: #{_seq2seq_apply.2} parent=1 // pred_check_branch
      %25 = sbr.rel (0) target = $region17
    $region16: #{_seq2seq_apply.2} parent=1 // pred_region
      _
    $region17: #{_seq2seq_apply.2} parent=1 // pred_fallthru
      _
    // Predicated region
    $region18: #{_seq2seq_apply.2} parent=1 // pred_check
      _
    $region19: #{_seq2seq_apply.2} parent=1 // pred_check_branch
      %27 = sbr.rel (0) target = $region21
    $region20: #{_seq2seq_apply.2} parent=1 // pred_region
      _
    $region21: #{_seq2seq_apply.2} parent=1 // pred_fallthru
      _
    // Predicated region
    $region22: #{_seq2seq_apply.2} parent=1 // pred_check
      _
    $region23: #{_seq2seq_apply.2} parent=1 // pred_check_branch
      %29 = sbr.rel (0) target = $region25
    $region24: #{_seq2seq_apply.2} parent=1 // pred_region
      _
    $region25: #{_seq2seq_apply.2} parent=1 // pred_fallthru
      _
    // Predicated region
    $region26: #{_seq2seq_apply.2} parent=1 // pred_check
      _
    $region27: #{_seq2seq_apply.2} parent=1 // pred_check_branch
      %31 = sbr.rel (0) target = $region29
    $region28: #{_seq2seq_apply.2} parent=1 // pred_region
      %33 = vsyncadd [#allocation5], 0
      %s34 = sshll.u32 %s6, 4
      %s35 = int_to_ptr.hbm [resolvable:$true] %s34
      %s36 = sshll.u32 [#allocation4], 4
      %s37 = int_to_ptr.vmem [resolvable:$true] %s36
      %42 = dma.hbm_to_vmem [thread:$0]  %s35, 1024, %s37, [#allocation5], 64, 64, 4
    $region29: #{_seq2seq_apply.2} parent=1 // pred_fallthru
      _
    // Predicated region
    $region30: #{_seq2seq_apply.2} parent=1 // pred_check
      _
    $region31: #{_seq2seq_apply.2} parent=1 // pred_check_branch
      %44 = sbr.rel (0) target = $region33
    $region32: #{_seq2seq_apply.2} parent=1 // pred_region
      %46 = vsyncadd [#allocation7], 0
      %s47 = sshll.u32 %s7, 4
      %s48 = int_to_ptr.hbm [resolvable:$true] %s47
      %s49 = sshll.u32 [#allocation6], 4
      %s50 = int_to_ptr.vmem [resolvable:$true] %s49
      %55 = dma.hbm_to_vmem [thread:$0]  %s48, 1024, %s50, [#allocation7], 64, 64, 4
    $region33: #{_seq2seq_apply.2} parent=1 // pred_fallthru
      _
    // Predicated region
    $region34: #{_seq2seq_apply.2} parent=1 // pred_check
      _
    $region35: #{_seq2seq_apply.2} parent=1 // pred_check_branch
      %57 = sbr.rel (0) target = $region37
    $region36: #{_seq2seq_apply.2} parent=1 // pred_region
      _
    $region37: #{_seq2seq_apply.2} parent=1 // pred_fallthru
      _
    // Predicated region
    $region38: #{_seq2seq_apply.2} parent=1 // pred_check
      _
    $region39: #{_seq2seq_apply.2} parent=1 // pred_check_branch
      %59 = sbr.rel (0) target = $region41
    $region40: #{_seq2seq_apply.2} parent=1 // pred_region
      %61 = dma.done [#allocation5], 1024
    $region41: #{_seq2seq_apply.2} parent=1 // pred_fallthru
      _
    // Predicated region
    $region42: #{_seq2seq_apply.2} parent=1 // pred_check
      _
    $region43: #{_seq2seq_apply.2} parent=1 // pred_check_branch
      %63 = sbr.rel (0) target = $region45
    $region44: #{_seq2seq_apply.2} parent=1 // pred_region
      %65 = dma.done [#allocation7], 1024
    $region45: #{_seq2seq_apply.2} parent=1 // pred_fallthru
      _
    %67 = vst [vmem:[#allocation2] sm:$0xf] 0
    %68 = vst [vmem:[#allocation2 + $0x4] sm:$0xf] 0
    %69 = vst [vmem:[#allocation2 + $0x8] sm:$0xf] 0
    %70 = vst [vmem:[#allocation2 + $0xc] sm:$0xf] 0
    %71 = vst [vmem:[#allocation2 + $0x10] sm:$0xf] 0
    %72 = vst [vmem:[#allocation2 + $0x14] sm:$0xf] 0
    %73 = vst [vmem:[#allocation2 + $0x18] sm:$0xf] 0
    %74 = vst [vmem:[#allocation2 + $0x1c] sm:$0xf] 0
    %75 = vst [vmem:[#allocation2 + $0x20] sm:$0xf] 0
    %76 = vst [vmem:[#allocation2 + $0x24] sm:$0xf] 0
    %77 = vst [vmem:[#allocation2 + $0x28] sm:$0xf] 0
    %78 = vst [vmem:[#allocation2 + $0x2c] sm:$0xf] 0
    %79 = vst [vmem:[#allocation2 + $0x30] sm:$0xf] 0
    %80 = vst [vmem:[#allocation2 + $0x34] sm:$0xf] 0
    %81 = vst [vmem:[#allocation2 + $0x38] sm:$0xf] 0
    %82 = vst [vmem:[#allocation2 + $0x3c] sm:$0xf] 0
    %83 = vst [vmem:[#allocation2 + $0x40] sm:$0xf] 0
    %84 = vst [vmem:[#allocation2 + $0x44] sm:$0xf] 0
    %85 = vst [vmem:[#allocation2 + $0x48] sm:$0xf] 0
    %86 = vst [vmem:[#allocation2 + $0x4c] sm:$0xf] 0
    %87 = vst [vmem:[#allocation2 + $0x50] sm:$0xf] 0
    %88 = vst [vmem:[#allocation2 + $0x54] sm:$0xf] 0
    %89 = vst [vmem:[#allocation2 + $0x58] sm:$0xf] 0
    %90 = vst [vmem:[#allocation2 + $0x5c] sm:$0xf] 0
    %91 = vst [vmem:[#allocation2 + $0x60] sm:$0xf] 0
    %92 = vst [vmem:[#allocation2 + $0x64] sm:$0xf] 0
    %93 = vst [vmem:[#allocation2 + $0x68] sm:$0xf] 0
    %94 = vst [vmem:[#allocation2 + $0x6c] sm:$0xf] 0
    %95 = vst [vmem:[#allocation2 + $0x70] sm:$0xf] 0
    %96 = vst [vmem:[#allocation2 + $0x74] sm:$0xf] 0
    %97 = vst [vmem:[#allocation2 + $0x78] sm:$0xf] 0
    %98 = vst [vmem:[#allocation2 + $0x7c] sm:$0xf] 0
    %99 = vst [vmem:[#allocation2 + $0x80] sm:$0xf] 0
    %100 = vst [vmem:[#allocation2 + $0x84] sm:$0xf] 0
    %101 = vst [vmem:[#allocation2 + $0x88] sm:$0xf] 0
    %102 = vst [vmem:[#allocation2 + $0x8c] sm:$0xf] 0
    %103 = vst [vmem:[#allocation2 + $0x90] sm:$0xf] 0
    %104 = vst [vmem:[#allocation2 + $0x94] sm:$0xf] 0
    %105 = vst [vmem:[#allocation2 + $0x98] sm:$0xf] 0
    %106 = vst [vmem:[#allocation2 + $0x9c] sm:$0xf] 0
    %107 = vst [vmem:[#allocation2 + $0xa0] sm:$0xf] 0
    %108 = vst [vmem:[#allocation2 + $0xa4] sm:$0xf] 0
    %109 = vst [vmem:[#allocation2 + $0xa8] sm:$0xf] 0
    %110 = vst [vmem:[#allocation2 + $0xac] sm:$0xf] 0
    %111 = vst [vmem:[#allocation2 + $0xb0] sm:$0xf] 0
    %112 = vst [vmem:[#allocation2 + $0xb4] sm:$0xf] 0
    %113 = vst [vmem:[#allocation2 + $0xb8] sm:$0xf] 0
    %114 = vst [vmem:[#allocation2 + $0xbc] sm:$0xf] 0
    %115 = vst [vmem:[#allocation2 + $0xc0] sm:$0xf] 0
    %116 = vst [vmem:[#allocation2 + $0xc4] sm:$0xf] 0
    %117 = vst [vmem:[#allocation2 + $0xc8] sm:$0xf] 0
    %118 = vst [vmem:[#allocation2 + $0xcc] sm:$0xf] 0
    %119 = vst [vmem:[#allocation2 + $0xd0] sm:$0xf] 0
    %120 = vst [vmem:[#allocation2 + $0xd4] sm:$0xf] 0
    %121 = vst [vmem:[#allocation2 + $0xd8] sm:$0xf] 0
    %122 = vst [vmem:[#allocation2 + $0xdc] sm:$0xf] 0
    %123 = vst [vmem:[#allocation2 + $0xe0] sm:$0xf] 0
    %124 = vst [vmem:[#allocation2 + $0xe4] sm:$0xf] 0
    %125 = vst [vmem:[#allocation2 + $0xe8] sm:$0xf] 0
    %126 = vst [vmem:[#allocation2 + $0xec] sm:$0xf] 0
    %127 = vst [vmem:[#allocation2 + $0xf0] sm:$0xf] 0
    %128 = vst [vmem:[#allocation2 + $0xf4] sm:$0xf] 0
    %129 = vst [vmem:[#allocation2 + $0xf8] sm:$0xf] 0
    %130 = vst [vmem:[#allocation2 + $0xfc] sm:$0xf] 0
    %131 = vst [vmem:[#allocation2 + $0x100] sm:$0xf] 0
    %132 = vst [vmem:[#allocation2 + $0x104] sm:$0xf] 0
    %133 = vst [vmem:[#allocation2 + $0x108] sm:$0xf] 0
    %134 = vst [vmem:[#allocation2 + $0x10c] sm:$0xf] 0
    %135 = vst [vmem:[#allocation2 + $0x110] sm:$0xf] 0
    %136 = vst [vmem:[#allocation2 + $0x114] sm:$0xf] 0
    %137 = vst [vmem:[#allocation2 + $0x118] sm:$0xf] 0
    %138 = vst [vmem:[#allocation2 + $0x11c] sm:$0xf] 0
    %139 = vst [vmem:[#allocation2 + $0x120] sm:$0xf] 0
    %140 = vst [vmem:[#allocation2 + $0x124] sm:$0xf] 0
    %141 = vst [vmem:[#allocation2 + $0x128] sm:$0xf] 0
    %142 = vst [vmem:[#allocation2 + $0x12c] sm:$0xf] 0
    %143 = vst [vmem:[#allocation2 + $0x130] sm:$0xf] 0
    %144 = vst [vmem:[#allocation2 + $0x134] sm:$0xf] 0
    %145 = vst [vmem:[#allocation2 + $0x138] sm:$0xf] 0
    %146 = vst [vmem:[#allocation2 + $0x13c] sm:$0xf] 0
    %147 = vst [vmem:[#allocation2 + $0x140] sm:$0xf] 0
    %148 = vst [vmem:[#allocation2 + $0x144] sm:$0xf] 0
    %149 = vst [vmem:[#allocation2 + $0x148] sm:$0xf] 0
    %150 = vst [vmem:[#allocation2 + $0x14c] sm:$0xf] 0
    %151 = vst [vmem:[#allocation2 + $0x150] sm:$0xf] 0
    %152 = vst [vmem:[#allocation2 + $0x154] sm:$0xf] 0
    %153 = vst [vmem:[#allocation2 + $0x158] sm:$0xf] 0
    %154 = vst [vmem:[#allocation2 + $0x15c] sm:$0xf] 0
    %155 = vst [vmem:[#allocation2 + $0x160] sm:$0xf] 0
    %156 = vst [vmem:[#allocation2 + $0x164] sm:$0xf] 0
    %157 = vst [vmem:[#allocation2 + $0x168] sm:$0xf] 0
    %158 = vst [vmem:[#allocation2 + $0x16c] sm:$0xf] 0
    %159 = vst [vmem:[#allocation2 + $0x170] sm:$0xf] 0
    %160 = vst [vmem:[#allocation2 + $0x174] sm:$0xf] 0
    %161 = vst [vmem:[#allocation2 + $0x178] sm:$0xf] 0
    %162 = vst [vmem:[#allocation2 + $0x17c] sm:$0xf] 0
    %163 = vst [vmem:[#allocation2 + $0x180] sm:$0xf] 0
    %164 = vst [vmem:[#allocation2 + $0x184] sm:$0xf] 0
    %165 = vst [vmem:[#allocation2 + $0x188] sm:$0xf] 0
    %166 = vst [vmem:[#allocation2 + $0x18c] sm:$0xf] 0
    %167 = vst [vmem:[#allocation2 + $0x190] sm:$0xf] 0
    %168 = vst [vmem:[#allocation2 + $0x194] sm:$0xf] 0
    %169 = vst [vmem:[#allocation2 + $0x198] sm:$0xf] 0
    %170 = vst [vmem:[#allocation2 + $0x19c] sm:$0xf] 0
    %171 = vst [vmem:[#allocation2 + $0x1a0] sm:$0xf] 0
    %172 = vst [vmem:[#allocation2 + $0x1a4] sm:$0xf] 0
    %173 = vst [vmem:[#allocation2 + $0x1a8] sm:$0xf] 0
    %174 = vst [vmem:[#allocation2 + $0x1ac] sm:$0xf] 0
    %175 = vst [vmem:[#allocation2 + $0x1b0] sm:$0xf] 0
    %176 = vst [vmem:[#allocation2 + $0x1b4] sm:$0xf] 0
    %177 = vst [vmem:[#allocation2 + $0x1b8] sm:$0xf] 0
    %178 = vst [vmem:[#allocation2 + $0x1bc] sm:$0xf] 0
    %179 = vst [vmem:[#allocation2 + $0x1c0] sm:$0xf] 0
    %180 = vst [vmem:[#allocation2 + $0x1c4] sm:$0xf] 0
    %181 = vst [vmem:[#allocation2 + $0x1c8] sm:$0xf] 0
    %182 = vst [vmem:[#allocation2 + $0x1cc] sm:$0xf] 0
    %183 = vst [vmem:[#allocation2 + $0x1d0] sm:$0xf] 0
    %184 = vst [vmem:[#allocation2 + $0x1d4] sm:$0xf] 0
    %185 = vst [vmem:[#allocation2 + $0x1d8] sm:$0xf] 0
    %186 = vst [vmem:[#allocation2 + $0x1dc] sm:$0xf] 0
    %187 = vst [vmem:[#allocation2 + $0x1e0] sm:$0xf] 0
    %188 = vst [vmem:[#allocation2 + $0x1e4] sm:$0xf] 0
    %189 = vst [vmem:[#allocation2 + $0x1e8] sm:$0xf] 0
    %190 = vst [vmem:[#allocation2 + $0x1ec] sm:$0xf] 0
    %191 = vst [vmem:[#allocation2 + $0x1f0] sm:$0xf] 0
    %192 = vst [vmem:[#allocation2 + $0x1f4] sm:$0xf] 0
    %193 = vst [vmem:[#allocation2 + $0x1f8] sm:$0xf] 0
    %194 = vst [vmem:[#allocation2 + $0x1fc] sm:$0xf] 0
    %195 = vst [vmem:[#allocation3] sm:$0xf] 0
    %196 = vst [vmem:[#allocation3 + $0x4] sm:$0xf] 0
    %197 = vst [vmem:[#allocation3 + $0x8] sm:$0xf] 0
    %198 = vst [vmem:[#allocation3 + $0xc] sm:$0xf] 0
    %199 = vst [vmem:[#allocation3 + $0x10] sm:$0xf] 0
    %200 = vst [vmem:[#allocation3 + $0x14] sm:$0xf] 0
    %201 = vst [vmem:[#allocation3 + $0x18] sm:$0xf] 0
    %202 = vst [vmem:[#allocation3 + $0x1c] sm:$0xf] 0
    %v203 = vld [vmem:[%s0] sm:$0xf]
    %v204 = vld [vmem:[%s0 + $0x4] sm:$0xf]
    %v205 = vld [vmem:[%s0 + $0x8] sm:$0xf]
    %v206 = vld [vmem:[%s0 + $0xc] sm:$0xf]
    %v207 = vld [vmem:[%s0 + $0x10] sm:$0xf]
    %v208 = vld [vmem:[%s0 + $0x14] sm:$0xf]
    %v209 = vld [vmem:[%s0 + $0x18] sm:$0xf]
    %v210 = vld [vmem:[%s0 + $0x1c] sm:$0xf]
    %v211 = vld [vmem:[%s3] sm:$0xf]
    %v212 = vld [vmem:[%s3 + $0x4] sm:$0xf]
    %v213 = vld [vmem:[%s3 + $0x8] sm:$0xf]
    %v214 = vld [vmem:[%s3 + $0xc] sm:$0xf]
    %v215 = vld [vmem:[%s3 + $0x10] sm:$0xf]
    %v216 = vld [vmem:[%s3 + $0x14] sm:$0xf]
    %v217 = vld [vmem:[%s3 + $0x18] sm:$0xf]
    %v218 = vld [vmem:[%s3 + $0x1c] sm:$0xf]
    %v219 = vld [vmem:[%s3 + $0x20] sm:$0xf]
    %v220 = vld [vmem:[%s3 + $0x24] sm:$0xf]
    %v221 = vld [vmem:[%s3 + $0x28] sm:$0xf]
    %v222 = vld [vmem:[%s3 + $0x2c] sm:$0xf]
    %v223 = vld [vmem:[%s3 + $0x30] sm:$0xf]
    %v224 = vld [vmem:[%s3 + $0x34] sm:$0xf]
    %v225 = vld [vmem:[%s3 + $0x38] sm:$0xf]
    %v226 = vld [vmem:[%s3 + $0x3c] sm:$0xf]
    %v227 = vld [vmem:[%s5] sm:$0x1]
    %v229 = vperm.slane %v227, 0
    %v239 = vunpack.c.l.b16 %v203
    %v240 = vunpack.c.l.b16 %v204
    %v241 = vunpack.c.l.b16 %v205
    %v242 = vunpack.c.l.b16 %v206
    %v243 = vunpack.c.l.b16 %v207
    %v244 = vunpack.c.l.b16 %v208
    %v245 = vunpack.c.l.b16 %v209
    %v246 = vunpack.c.l.b16 %v210
    %v247 = vpack.c.b16 %v240, %v239
    %v248 = vpack.c.b16 %v242, %v241
    %v249 = vpack.c.b16 %v244, %v243
    %v250 = vpack.c.b16 %v246, %v245
    %v271 = vunpack.c.l.b16 %v211
    %v272 = vunpack.c.l.b16 %v212
    %v273 = vunpack.c.l.b16 %v213
    %v274 = vunpack.c.l.b16 %v214
    %v275 = vunpack.c.l.b16 %v215
    %v276 = vunpack.c.l.b16 %v216
    %v277 = vunpack.c.l.b16 %v217
    %v278 = vunpack.c.l.b16 %v218
    %v279 = vunpack.c.l.b16 %v219
    %v280 = vunpack.c.l.b16 %v220
    %v281 = vunpack.c.l.b16 %v221
    %v282 = vunpack.c.l.b16 %v222
    %v283 = vunpack.c.l.b16 %v223
    %v284 = vunpack.c.l.b16 %v224
    %v285 = vunpack.c.l.b16 %v225
    %v286 = vunpack.c.l.b16 %v226
    %v287 = vpack.c.b16 %v272, %v271
    %v288 = vpack.c.b16 %v274, %v273
    %v289 = vpack.c.b16 %v276, %v275
    %v290 = vpack.c.b16 %v278, %v277
    %v291 = vpack.c.b16 %v280, %v279
    %v292 = vpack.c.b16 %v282, %v281
    %v293 = vpack.c.b16 %v284, %v283
    %v294 = vpack.c.b16 %v286, %v285
    %303 = vmatpush.bf16.msra.mxu0 %v294
    %304 = vmatpush.bf16.msra.mxu0 %v293
    %305 = vmatpush.bf16.msra.mxu0 %v292
    %306 = vmatpush.bf16.msra.mxu0 %v291
    %307 = vmatpush.bf16.msra.mxu0 %v290
    %308 = vmatpush.bf16.msra.mxu0 %v289
    %309 = vmatpush.bf16.msra.mxu0 %v288
    %310 = vmatpush.bf16.msra.mxu0 %v287
    %311 = vmatmul.bf16.gmra.mxu0 %v247
    %v312 = vpop.f32.mrf.mxu0
    %v313 = vadd.f32 %v229, %v312
    %v314 = vpop.f32.mrf.mxu0
    %v315 = vadd.f32 %v229, %v314
    %316 = vmatmul.bf16.gmra.mxu0 %v248
    %v317 = vpop.f32.mrf.mxu0
    %v318 = vadd.f32 %v229, %v317
    %v319 = vpop.f32.mrf.mxu0
    %v320 = vadd.f32 %v229, %v319
    %321 = vmatmul.bf16.gmra.mxu0 %v249
    %v322 = vpop.f32.mrf.mxu0
    %v323 = vadd.f32 %v229, %v322
    %v324 = vpop.f32.mrf.mxu0
    %v325 = vadd.f32 %v229, %v324
    %326 = vmatmul.bf16.gmra.mxu0 %v250
    %v327 = vpop.f32.mrf.mxu0
    %v328 = vadd.f32 %v229, %v327
    %v329 = vpop.f32.mrf.mxu0
    %v330 = vadd.f32 %v229, %v329
    %331 = vdwg.mxu0
    %v332 = vld [vmem:[%s4] sm:$0xf]
    %v333 = vld [vmem:[%s4 + $0x4] sm:$0xf]
    %v334 = vld [vmem:[%s4 + $0x8] sm:$0xf]
    %v335 = vld [vmem:[%s4 + $0xc] sm:$0xf]
    %v336 = vld [vmem:[%s4 + $0x10] sm:$0xf]
    %v337 = vld [vmem:[%s4 + $0x14] sm:$0xf]
    %v338 = vld [vmem:[%s4 + $0x18] sm:$0xf]
    %v339 = vld [vmem:[%s4 + $0x1c] sm:$0xf]
    %v340 = vld [vmem:[%s4 + $0x20] sm:$0xf]
    %v341 = vld [vmem:[%s4 + $0x24] sm:$0xf]
    %v342 = vld [vmem:[%s4 + $0x28] sm:$0xf]
    %v343 = vld [vmem:[%s4 + $0x2c] sm:$0xf]
    %v344 = vld [vmem:[%s4 + $0x30] sm:$0xf]
    %v345 = vld [vmem:[%s4 + $0x34] sm:$0xf]
    %v346 = vld [vmem:[%s4 + $0x38] sm:$0xf]
    %v347 = vld [vmem:[%s4 + $0x3c] sm:$0xf]
    %v364 = vunpack.c.l.b16 %v332
    %v365 = vunpack.c.l.b16 %v333
    %v366 = vunpack.c.l.b16 %v334
    %v367 = vunpack.c.l.b16 %v335
    %v368 = vunpack.c.l.b16 %v336
    %v369 = vunpack.c.l.b16 %v337
    %v370 = vunpack.c.l.b16 %v338
    %v371 = vunpack.c.l.b16 %v339
    %v372 = vunpack.c.l.b16 %v340
    %v373 = vunpack.c.l.b16 %v341
    %v374 = vunpack.c.l.b16 %v342
    %v375 = vunpack.c.l.b16 %v343
    %v376 = vunpack.c.l.b16 %v344
    %v377 = vunpack.c.l.b16 %v345
    %v378 = vunpack.c.l.b16 %v346
    %v379 = vunpack.c.l.b16 %v347
    %v380 = vpack.c.b16 %v365, %v364
    %v381 = vpack.c.b16 %v367, %v366
    %v382 = vpack.c.b16 %v369, %v368
    %v383 = vpack.c.b16 %v371, %v370
    %v384 = vpack.c.b16 %v373, %v372
    %v385 = vpack.c.b16 %v375, %v374
    %v386 = vpack.c.b16 %v377, %v376
    %v387 = vpack.c.b16 %v379, %v378
    %396 = vmatpush.bf16.msra.mxu0 %v387
    %397 = vmatpush.bf16.msra.mxu0 %v386
    %398 = vmatpush.bf16.msra.mxu0 %v385
    %399 = vmatpush.bf16.msra.mxu0 %v384
    %400 = vmatpush.bf16.msra.mxu0 %v383
    %401 = vmatpush.bf16.msra.mxu0 %v382
    %402 = vmatpush.bf16.msra.mxu0 %v381
    %403 = vmatpush.bf16.msra.mxu0 %v380
    %404 = vmatmul.bf16.gmra.mxu0 0
    %v405 = vpop.f32.mrf.mxu0
    %v406 = vadd.f32 0.0, %v405
    %v407 = vpop.f32.mrf.mxu0
    %408 = vdwg.mxu0
    %v410 = vrot.slane %v406, 1
    %v411 = vrot.slane %v406, 2
    %v412 = vrot.slane %v406, 3
    %v413 = vrot.slane %v406, 4
    %v414 = vrot.slane %v406, 5
    %v415 = vrot.slane %v406, 6
    %v416 = vrot.slane %v406, 7
    %v425 = vadd.f32 %v313, %v406
    %v426 = vadd.f32 %v315, %v410
    %v427 = vadd.f32 %v318, %v411
    %v428 = vadd.f32 %v320, %v412
    %v429 = vadd.f32 %v323, %v413
    %v430 = vadd.f32 %v325, %v414
    %v431 = vadd.f32 %v328, %v415
    %v432 = vadd.f32 %v330, %v416
    %v433 = vtanh.pop %v425
    %v434 = vtanh.pop %v426
    %v435 = vtanh.pop %v427
    %v436 = vtanh.pop %v428
    %v437 = vtanh.pop %v429
    %v438 = vtanh.pop %v430
    %v439 = vtanh.pop %v431
    %v440 = vtanh.pop %v432
    %v441 = vpack.c.bf16 %v433, %v433
    %v442 = vpack.c.bf16 %v434, %v434
    %v443 = vpack.c.bf16 %v435, %v435
    %v444 = vpack.c.bf16 %v436, %v436
    %v445 = vpack.c.bf16 %v437, %v437
    %v446 = vpack.c.bf16 %v438, %v438
    %v447 = vpack.c.bf16 %v439, %v439
    %v448 = vpack.c.bf16 %v440, %v440
    %vm449 = vcmask 1040384
    %vm450 = vsmask.f32 256
    %vm451 = vmand %vm449, %vm450
    %v452 = vld [vmem:[#allocation2] sm:$0x1]
    %v453 = vsel %vm451, %v441, %v452
    %454 = vst [vmem:[#allocation2] sm:$0x1] %v453
    %v455 = vld [vmem:[#allocation2 + $0x40] sm:$0x1]
    %v456 = vsel %vm451, %v442, %v455
    %457 = vst [vmem:[#allocation2 + $0x40] sm:$0x1] %v456
    %v458 = vld [vmem:[#allocation2 + $0x80] sm:$0x1]
    %v459 = vsel %vm451, %v443, %v458
    %460 = vst [vmem:[#allocation2 + $0x80] sm:$0x1] %v459
    %v461 = vld [vmem:[#allocation2 + $0xc0] sm:$0x1]
    %v462 = vsel %vm451, %v444, %v461
    %463 = vst [vmem:[#allocation2 + $0xc0] sm:$0x1] %v462
    %v464 = vld [vmem:[#allocation2 + $0x100] sm:$0x1]
    %v465 = vsel %vm451, %v445, %v464
    %466 = vst [vmem:[#allocation2 + $0x100] sm:$0x1] %v465
    %v467 = vld [vmem:[#allocation2 + $0x140] sm:$0x1]
    %v468 = vsel %vm451, %v446, %v467
    %469 = vst [vmem:[#allocation2 + $0x140] sm:$0x1] %v468
    %v470 = vld [vmem:[#allocation2 + $0x180] sm:$0x1]
    %v471 = vsel %vm451, %v447, %v470
    %472 = vst [vmem:[#allocation2 + $0x180] sm:$0x1] %v471
    %v473 = vld [vmem:[#allocation2 + $0x1c0] sm:$0x1]
    %v474 = vsel %vm451, %v448, %v473
    %475 = vst [vmem:[#allocation2 + $0x1c0] sm:$0x1] %v474
    %v484 = vunpack.c.l.b16 %v441
    %v485 = vunpack.c.l.b16 %v442
    %v486 = vunpack.c.l.b16 %v443
    %v487 = vunpack.c.l.b16 %v444
    %v488 = vunpack.c.l.b16 %v445
    %v489 = vunpack.c.l.b16 %v446
    %v490 = vunpack.c.l.b16 %v447
    %v491 = vunpack.c.l.b16 %v448
    %v492 = vpack.c.b16 %v484, %v484
    %v493 = vpack.c.b16 %v485, %v485
    %v494 = vpack.c.b16 %v486, %v486
    %v495 = vpack.c.b16 %v487, %v487
    %v496 = vpack.c.b16 %v488, %v488
    %v497 = vpack.c.b16 %v489, %v489
    %v498 = vpack.c.b16 %v490, %v490
    %v499 = vpack.c.b16 %v491, %v491
    %v500 = vunpack.c.l.b16 %v492
    %v501 = vunpack.c.l.b16 %v493
    %v502 = vunpack.c.l.b16 %v494
    %v503 = vunpack.c.l.b16 %v495
    %v504 = vunpack.c.l.b16 %v496
    %v505 = vunpack.c.l.b16 %v497
    %v506 = vunpack.c.l.b16 %v498
    %v507 = vunpack.c.l.b16 %v499
    %v508 = vrot.slane %v501, 7
    %vm509 = vcmask 1041409
    %v510 = vsel %vm509, %v508, %v500
    %v511 = vrot.slane %v502, 6
    %vm512 = vcmask 1042434
    %v513 = vsel %vm512, %v511, %v510
    %v514 = vrot.slane %v503, 5
    %vm515 = vcmask 1043459
    %v516 = vsel %vm515, %v514, %v513
    %v517 = vrot.slane %v504, 4
    %vm518 = vcmask 1044484
    %v519 = vsel %vm518, %v517, %v516
    %v520 = vrot.slane %v505, 3
    %vm521 = vcmask 1045509
    %v522 = vsel %vm521, %v520, %v519
    %v523 = vrot.slane %v506, 2
    %vm524 = vcmask 1046534
    %v525 = vsel %vm524, %v523, %v522
    %v526 = vrot.slane %v507, 1
    %vm527 = vcmask 1047559
    %v528 = vsel %vm527, %v526, %v525
    %v529 = vpack.c.b16 %v528, %v528
    %531 = vmatpush.bf16.msra.mxu0 %v387
    %532 = vmatpush.bf16.msra.mxu0 %v386
    %533 = vmatpush.bf16.msra.mxu0 %v385
    %534 = vmatpush.bf16.msra.mxu0 %v384
    %535 = vmatpush.bf16.msra.mxu0 %v383
    %536 = vmatpush.bf16.msra.mxu0 %v382
    %537 = vmatpush.bf16.msra.mxu0 %v381
    %538 = vmatpush.bf16.msra.mxu0 %v380
    %539 = vmatmul.bf16.gmra.mxu0 %v529
    %v540 = vpop.f32.mrf.mxu0
    %v541 = vadd.f32 0.0, %v540
    %v542 = vpop.f32.mrf.mxu0
    %543 = vdwg.mxu0
    %v545 = vrot.slane %v541, 7
    %v546 = vrot.slane %v541, 1
    %v547 = vrot.slane %v541, 2
    %v548 = vrot.slane %v541, 3
    %v549 = vrot.slane %v541, 4
    %v550 = vrot.slane %v541, 5
    %v551 = vrot.slane %v541, 6
    %v560 = vadd.f32 %v313, %v545
    %v561 = vadd.f32 %v315, %v541
    %v562 = vadd.f32 %v318, %v546
    %v563 = vadd.f32 %v320, %v547
    %v564 = vadd.f32 %v323, %v548
    %v565 = vadd.f32 %v325, %v549
    %v566 = vadd.f32 %v328, %v550
    %v567 = vadd.f32 %v330, %v551
    %v568 = vtanh.pop %v560
    %v569 = vtanh.pop %v561
    %v570 = vtanh.pop %v562
    %v571 = vtanh.pop %v563
    %v572 = vtanh.pop %v564
    %v573 = vtanh.pop %v565
    %v574 = vtanh.pop %v566
    %v575 = vtanh.pop %v567
    %v576 = vpack.c.bf16 %v568, %v568
    %v577 = vpack.c.bf16 %v569, %v569
    %v578 = vpack.c.bf16 %v570, %v570
    %v579 = vpack.c.bf16 %v571, %v571
    %v580 = vpack.c.bf16 %v572, %v572
    %v581 = vpack.c.bf16 %v573, %v573
    %v582 = vpack.c.bf16 %v574, %v574
    %v583 = vpack.c.bf16 %v575, %v575
    %vm584 = vsmask.f32 7938
    %vm585 = vmand %vm449, %vm584
    %v586 = vld [vmem:[#allocation2] sm:$0x1]
    %v587 = vsel %vm585, %v576, %v586
    %588 = vst [vmem:[#allocation2] sm:$0x1] %v587
    %v589 = vld [vmem:[#allocation2 + $0x40] sm:$0x1]
    %v590 = vsel %vm585, %v577, %v589
    %591 = vst [vmem:[#allocation2 + $0x40] sm:$0x1] %v590
    %v592 = vld [vmem:[#allocation2 + $0x80] sm:$0x1]
    %v593 = vsel %vm585, %v578, %v592
    %594 = vst [vmem:[#allocation2 + $0x80] sm:$0x1] %v593
    %v595 = vld [vmem:[#allocation2 + $0xc0] sm:$0x1]
    %v596 = vsel %vm585, %v579, %v595
    %597 = vst [vmem:[#allocation2 + $0xc0] sm:$0x1] %v596
    %v598 = vld [vmem:[#allocation2 + $0x100] sm:$0x1]
    %v599 = vsel %vm585, %v580, %v598
    %600 = vst [vmem:[#allocation2 + $0x100] sm:$0x1] %v599
    %v601 = vld [vmem:[#allocation2 + $0x140] sm:$0x1]
    %v602 = vsel %vm585, %v581, %v601
    %603 = vst [vmem:[#allocation2 + $0x140] sm:$0x1] %v602
    %v604 = vld [vmem:[#allocation2 + $0x180] sm:$0x1]
    %v605 = vsel %vm585, %v582, %v604
    %606 = vst [vmem:[#allocation2 + $0x180] sm:$0x1] %v605
    %v607 = vld [vmem:[#allocation2 + $0x1c0] sm:$0x1]
    %v608 = vsel %vm585, %v583, %v607
    %609 = vst [vmem:[#allocation2 + $0x1c0] sm:$0x1] %v608
    %v618 = vunpack.c.l.b16 %v576
    %v619 = vunpack.c.l.b16 %v577
    %v620 = vunpack.c.l.b16 %v578
    %v621 = vunpack.c.l.b16 %v579
    %v622 = vunpack.c.l.b16 %v580
    %v623 = vunpack.c.l.b16 %v581
    %v624 = vunpack.c.l.b16 %v582
    %v625 = vunpack.c.l.b16 %v583
    %v626 = vpack.c.b16 %v618, %v618
    %v627 = vpack.c.b16 %v619, %v619
    %v628 = vpack.c.b16 %v620, %v620
    %v629 = vpack.c.b16 %v621, %v621
    %v630 = vpack.c.b16 %v622, %v622
    %v631 = vpack.c.b16 %v623, %v623
    %v632 = vpack.c.b16 %v624, %v624
    %v633 = vpack.c.b16 %v625, %v625
    %v634 = vunpack.c.l.b16 %v626
    %v635 = vunpack.c.l.b16 %v627
    %v636 = vunpack.c.l.b16 %v628
    %v637 = vunpack.c.l.b16 %v629
    %v638 = vunpack.c.l.b16 %v630
    %v639 = vunpack.c.l.b16 %v631
    %v640 = vunpack.c.l.b16 %v632
    %v641 = vunpack.c.l.b16 %v633
    %v642 = vrot.slane %v634, 1
    %v643 = vsel %vm509, %v635, %v642
    %v644 = vrot.slane %v636, 7
    %v645 = vsel %vm512, %v644, %v643
    %v646 = vrot.slane %v637, 6
    %v647 = vsel %vm515, %v646, %v645
    %v648 = vrot.slane %v638, 5
    %v649 = vsel %vm518, %v648, %v647
    %v650 = vrot.slane %v639, 4
    %v651 = vsel %vm521, %v650, %v649
    %v652 = vrot.slane %v640, 3
    %v653 = vsel %vm524, %v652, %v651
    %v654 = vrot.slane %v641, 2
    %v655 = vsel %vm527, %v654, %v653
    %v656 = vpack.c.b16 %v655, %v655
    %658 = vmatpush.bf16.msra.mxu0 %v387
    %659 = vmatpush.bf16.msra.mxu0 %v386
    %660 = vmatpush.bf16.msra.mxu0 %v385
    %661 = vmatpush.bf16.msra.mxu0 %v384
    %662 = vmatpush.bf16.msra.mxu0 %v383
    %663 = vmatpush.bf16.msra.mxu0 %v382
    %664 = vmatpush.bf16.msra.mxu0 %v381
    %665 = vmatpush.bf16.msra.mxu0 %v380
    %666 = vmatmul.bf16.gmra.mxu0 %v656
    %v667 = vpop.f32.mrf.mxu0
    %v668 = vadd.f32 0.0, %v667
    %v669 = vpop.f32.mrf.mxu0
    %670 = vdwg.mxu0
    %v672 = vrot.slane %v668, 6
    %v673 = vrot.slane %v668, 7
    %v674 = vrot.slane %v668, 1
    %v675 = vrot.slane %v668, 2
    %v676 = vrot.slane %v668, 3
    %v677 = vrot.slane %v668, 4
    %v678 = vrot.slane %v668, 5
    %v687 = vadd.f32 %v313, %v672
    %v688 = vadd.f32 %v315, %v673
    %v689 = vadd.f32 %v318, %v668
    %v690 = vadd.f32 %v320, %v674
    %v691 = vadd.f32 %v323, %v675
    %v692 = vadd.f32 %v325, %v676
    %v693 = vadd.f32 %v328, %v677
    %v694 = vadd.f32 %v330, %v678
    %v695 = vtanh.pop %v687
    %v696 = vtanh.pop %v688
    %v697 = vtanh.pop %v689
    %v698 = vtanh.pop %v690
    %v699 = vtanh.pop %v691
    %v700 = vtanh.pop %v692
    %v701 = vtanh.pop %v693
    %v702 = vtanh.pop %v694
    %v703 = vpack.c.bf16 %v695, %v695
    %v704 = vpack.c.bf16 %v696, %v696
    %v705 = vpack.c.bf16 %v697, %v697
    %v706 = vpack.c.bf16 %v698, %v698
    %v707 = vpack.c.bf16 %v699, %v699
    %v708 = vpack.c.bf16 %v700, %v700
    %v709 = vpack.c.bf16 %v701, %v701
    %v710 = vpack.c.bf16 %v702, %v702
    %vm711 = vcmask 1041409
    %vm712 = vsmask.f32 1280
    %vm713 = vmand %vm711, %vm712
    %v714 = vld [vmem:[#allocation2] sm:$0x2]
    %v715 = vsel %vm713, %v703, %v714
    %716 = vst [vmem:[#allocation2] sm:$0x2] %v715
    %v717 = vld [vmem:[#allocation2 + $0x40] sm:$0x2]
    %v718 = vsel %vm713, %v704, %v717
    %719 = vst [vmem:[#allocation2 + $0x40] sm:$0x2] %v718
    %v720 = vld [vmem:[#allocation2 + $0x80] sm:$0x2]
    %v721 = vsel %vm713, %v705, %v720
    %722 = vst [vmem:[#allocation2 + $0x80] sm:$0x2] %v721
    %v723 = vld [vmem:[#allocation2 + $0xc0] sm:$0x2]
    %v724 = vsel %vm713, %v706, %v723
    %725 = vst [vmem:[#allocation2 + $0xc0] sm:$0x2] %v724
    %v726 = vld [vmem:[#allocation2 + $0x100] sm:$0x2]
    %v727 = vsel %vm713, %v707, %v726
    %728 = vst [vmem:[#allocation2 + $0x100] sm:$0x2] %v727
    %v729 = vld [vmem:[#allocation2 + $0x140] sm:$0x2]
    %v730 = vsel %vm713, %v708, %v729
    %731 = vst [vmem:[#allocation2 + $0x140] sm:$0x2] %v730
    %v732 = vld [vmem:[#allocation2 + $0x180] sm:$0x2]
    %v733 = vsel %vm713, %v709, %v732
    %734 = vst [vmem:[#allocation2 + $0x180] sm:$0x2] %v733
    %v735 = vld [vmem:[#allocation2 + $0x1c0] sm:$0x2]
    %v736 = vsel %vm713, %v710, %v735
    %737 = vst [vmem:[#allocation2 + $0x1c0] sm:$0x2] %v736
    %v746 = vunpack.c.l.b16 %v703
    %v747 = vunpack.c.l.b16 %v704
    %v748 = vunpack.c.l.b16 %v705
    %v749 = vunpack.c.l.b16 %v706
    %v750 = vunpack.c.l.b16 %v707
    %v751 = vunpack.c.l.b16 %v708
    %v752 = vunpack.c.l.b16 %v709
    %v753 = vunpack.c.l.b16 %v710
    %v754 = vpack.c.b16 %v746, %v746
    %v755 = vpack.c.b16 %v747, %v747
    %v756 = vpack.c.b16 %v748, %v748
    %v757 = vpack.c.b16 %v749, %v749
    %v758 = vpack.c.b16 %v750, %v750
    %v759 = vpack.c.b16 %v751, %v751
    %v760 = vpack.c.b16 %v752, %v752
    %v761 = vpack.c.b16 %v753, %v753
    %v762 = vunpack.c.l.b16 %v754
    %v763 = vunpack.c.l.b16 %v755
    %v764 = vunpack.c.l.b16 %v756
    %v765 = vunpack.c.l.b16 %v757
    %v766 = vunpack.c.l.b16 %v758
    %v767 = vunpack.c.l.b16 %v759
    %v768 = vunpack.c.l.b16 %v760
    %v769 = vunpack.c.l.b16 %v761
    %v770 = vrot.slane %v762, 2
    %v771 = vrot.slane %v763, 1
    %v772 = vsel %vm509, %v771, %v770
    %v773 = vsel %vm512, %v764, %v772
    %v774 = vrot.slane %v765, 7
    %v775 = vsel %vm515, %v774, %v773
    %v776 = vrot.slane %v766, 6
    %v777 = vsel %vm518, %v776, %v775
    %v778 = vrot.slane %v767, 5
    %v779 = vsel %vm521, %v778, %v777
    %v780 = vrot.slane %v768, 4
    %v781 = vsel %vm524, %v780, %v779
    %v782 = vrot.slane %v769, 3
    %v783 = vsel %vm527, %v782, %v781
    %v784 = vpack.c.b16 %v783, %v783
    %786 = vmatpush.bf16.msra.mxu0 %v387
    %787 = vmatpush.bf16.msra.mxu0 %v386
    %788 = vmatpush.bf16.msra.mxu0 %v385
    %789 = vmatpush.bf16.msra.mxu0 %v384
    %790 = vmatpush.bf16.msra.mxu0 %v383
    %791 = vmatpush.bf16.msra.mxu0 %v382
    %792 = vmatpush.bf16.msra.mxu0 %v381
    %793 = vmatpush.bf16.msra.mxu0 %v380
    %794 = vmatmul.bf16.gmra.mxu0 %v784
    %v795 = vpop.f32.mrf.mxu0
    %v796 = vadd.f32 0.0, %v795
    %v797 = vpop.f32.mrf.mxu0
    %798 = vdwg.mxu0
    %v800 = vrot.slane %v796, 5
    %v801 = vrot.slane %v796, 6
    %v802 = vrot.slane %v796, 7
    %v803 = vrot.slane %v796, 1
    %v804 = vrot.slane %v796, 2
    %v805 = vrot.slane %v796, 3
    %v806 = vrot.slane %v796, 4
    %v815 = vadd.f32 %v313, %v800
    %v816 = vadd.f32 %v315, %v801
    %v817 = vadd.f32 %v318, %v802
    %v818 = vadd.f32 %v320, %v796
    %v819 = vadd.f32 %v323, %v803
    %v820 = vadd.f32 %v325, %v804
    %v821 = vadd.f32 %v328, %v805
    %v822 = vadd.f32 %v330, %v806
    %v823 = vtanh.pop %v815
    %v824 = vtanh.pop %v816
    %v825 = vtanh.pop %v817
    %v826 = vtanh.pop %v818
    %v827 = vtanh.pop %v819
    %v828 = vtanh.pop %v820
    %v829 = vtanh.pop %v821
    %v830 = vtanh.pop %v822
    %v831 = vpack.c.bf16 %v823, %v823
    %v832 = vpack.c.bf16 %v824, %v824
    %v833 = vpack.c.bf16 %v825, %v825
    %v834 = vpack.c.bf16 %v826, %v826
    %v835 = vpack.c.bf16 %v827, %v827
    %v836 = vpack.c.bf16 %v828, %v828
    %v837 = vpack.c.bf16 %v829, %v829
    %v838 = vpack.c.bf16 %v830, %v830
    %vm839 = vsmask.f32 7942
    %vm840 = vmand %vm711, %vm839
    %v841 = vld [vmem:[#allocation2] sm:$0x2]
    %v842 = vsel %vm840, %v831, %v841
    %843 = vst [vmem:[#allocation2] sm:$0x2] %v842
    %v844 = vld [vmem:[#allocation2 + $0x40] sm:$0x2]
    %v845 = vsel %vm840, %v832, %v844
    %846 = vst [vmem:[#allocation2 + $0x40] sm:$0x2] %v845
    %v847 = vld [vmem:[#allocation2 + $0x80] sm:$0x2]
    %v848 = vsel %vm840, %v833, %v847
    %849 = vst [vmem:[#allocation2 + $0x80] sm:$0x2] %v848
    %v850 = vld [vmem:[#allocation2 + $0xc0] sm:$0x2]
    %v851 = vsel %vm840, %v834, %v850
    %852 = vst [vmem:[#allocation2 + $0xc0] sm:$0x2] %v851
    %v853 = vld [vmem:[#allocation2 + $0x100] sm:$0x2]
    %v854 = vsel %vm840, %v835, %v853
    %855 = vst [vmem:[#allocation2 + $0x100] sm:$0x2] %v854
    %v856 = vld [vmem:[#allocation2 + $0x140] sm:$0x2]
    %v857 = vsel %vm840, %v836, %v856
    %858 = vst [vmem:[#allocation2 + $0x140] sm:$0x2] %v857
    %v859 = vld [vmem:[#allocation2 + $0x180] sm:$0x2]
    %v860 = vsel %vm840, %v837, %v859
    %861 = vst [vmem:[#allocation2 + $0x180] sm:$0x2] %v860
    %v862 = vld [vmem:[#allocation2 + $0x1c0] sm:$0x2]
    %v863 = vsel %vm840, %v838, %v862
    %864 = vst [vmem:[#allocation2 + $0x1c0] sm:$0x2] %v863
    %v873 = vunpack.c.l.b16 %v831
    %v874 = vunpack.c.l.b16 %v832
    %v875 = vunpack.c.l.b16 %v833
    %v876 = vunpack.c.l.b16 %v834
    %v877 = vunpack.c.l.b16 %v835
    %v878 = vunpack.c.l.b16 %v836
    %v879 = vunpack.c.l.b16 %v837
    %v880 = vunpack.c.l.b16 %v838
    %v881 = vpack.c.b16 %v873, %v873
    %v882 = vpack.c.b16 %v874, %v874
    %v883 = vpack.c.b16 %v875, %v875
    %v884 = vpack.c.b16 %v876, %v876
    %v885 = vpack.c.b16 %v877, %v877
    %v886 = vpack.c.b16 %v878, %v878
    %v887 = vpack.c.b16 %v879, %v879
    %v888 = vpack.c.b16 %v880, %v880
    %v889 = vunpack.c.l.b16 %v881
    %v890 = vunpack.c.l.b16 %v882
    %v891 = vunpack.c.l.b16 %v883
    %v892 = vunpack.c.l.b16 %v884
    %v893 = vunpack.c.l.b16 %v885
    %v894 = vunpack.c.l.b16 %v886
    %v895 = vunpack.c.l.b16 %v887
    %v896 = vunpack.c.l.b16 %v888
    %v897 = vrot.slane %v889, 3
    %v898 = vrot.slane %v890, 2
    %v899 = vsel %vm509, %v898, %v897
    %v900 = vrot.slane %v891, 1
    %v901 = vsel %vm512, %v900, %v899
    %v902 = vsel %vm515, %v892, %v901
    %v903 = vrot.slane %v893, 7
    %v904 = vsel %vm518, %v903, %v902
    %v905 = vrot.slane %v894, 6
    %v906 = vsel %vm521, %v905, %v904
    %v907 = vrot.slane %v895, 5
    %v908 = vsel %vm524, %v907, %v906
    %v909 = vrot.slane %v896, 4
    %v910 = vsel %vm527, %v909, %v908
    %v911 = vpack.c.b16 %v910, %v910
    %913 = vmatpush.bf16.msra.mxu0 %v387
    %914 = vmatpush.bf16.msra.mxu0 %v386
    %915 = vmatpush.bf16.msra.mxu0 %v385
    %916 = vmatpush.bf16.msra.mxu0 %v384
    %917 = vmatpush.bf16.msra.mxu0 %v383
    %918 = vmatpush.bf16.msra.mxu0 %v382
    %919 = vmatpush.bf16.msra.mxu0 %v381
    %920 = vmatpush.bf16.msra.mxu0 %v380
    %921 = vmatmul.bf16.gmra.mxu0 %v911
    %v922 = vpop.f32.mrf.mxu0
    %v923 = vadd.f32 0.0, %v922
    %v924 = vpop.f32.mrf.mxu0
    %925 = vdwg.mxu0
    %v927 = vrot.slane %v923, 4
    %v928 = vrot.slane %v923, 5
    %v929 = vrot.slane %v923, 6
    %v930 = vrot.slane %v923, 7
    %v931 = vrot.slane %v923, 1
    %v932 = vrot.slane %v923, 2
    %v933 = vrot.slane %v923, 3
    %v942 = vadd.f32 %v313, %v927
    %v943 = vadd.f32 %v315, %v928
    %v944 = vadd.f32 %v318, %v929
    %v945 = vadd.f32 %v320, %v930
    %v946 = vadd.f32 %v323, %v923
    %v947 = vadd.f32 %v325, %v931
    %v948 = vadd.f32 %v328, %v932
    %v949 = vadd.f32 %v330, %v933
    %v950 = vtanh.pop %v942
    %v951 = vtanh.pop %v943
    %v952 = vtanh.pop %v944
    %v953 = vtanh.pop %v945
    %v954 = vtanh.pop %v946
    %v955 = vtanh.pop %v947
    %v956 = vtanh.pop %v948
    %v957 = vtanh.pop %v949
    %v958 = vpack.c.bf16 %v950, %v950
    %v959 = vpack.c.bf16 %v951, %v951
    %v960 = vpack.c.bf16 %v952, %v952
    %v961 = vpack.c.bf16 %v953, %v953
    %v962 = vpack.c.bf16 %v954, %v954
    %v963 = vpack.c.bf16 %v955, %v955
    %v964 = vpack.c.bf16 %v956, %v956
    %v965 = vpack.c.bf16 %v957, %v957
    %vm966 = vcmask 1042434
    %vm967 = vsmask.f32 2304
    %vm968 = vmand %vm966, %vm967
    %v969 = vld [vmem:[#allocation2] sm:$0x4]
    %v970 = vsel %vm968, %v958, %v969
    %971 = vst [vmem:[#allocation2] sm:$0x4] %v970
    %v972 = vld [vmem:[#allocation2 + $0x40] sm:$0x4]
    %v973 = vsel %vm968, %v959, %v972
    %974 = vst [vmem:[#allocation2 + $0x40] sm:$0x4] %v973
    %v975 = vld [vmem:[#allocation2 + $0x80] sm:$0x4]
    %v976 = vsel %vm968, %v960, %v975
    %977 = vst [vmem:[#allocation2 + $0x80] sm:$0x4] %v976
    %v978 = vld [vmem:[#allocation2 + $0xc0] sm:$0x4]
    %v979 = vsel %vm968, %v961, %v978
    %980 = vst [vmem:[#allocation2 + $0xc0] sm:$0x4] %v979
    %v981 = vld [vmem:[#allocation2 + $0x100] sm:$0x4]
    %v982 = vsel %vm968, %v962, %v981
    %983 = vst [vmem:[#allocation2 + $0x100] sm:$0x4] %v982
    %v984 = vld [vmem:[#allocation2 + $0x140] sm:$0x4]
    %v985 = vsel %vm968, %v963, %v984
    %986 = vst [vmem:[#allocation2 + $0x140] sm:$0x4] %v985
    %v987 = vld [vmem:[#allocation2 + $0x180] sm:$0x4]
    %v988 = vsel %vm968, %v964, %v987
    %989 = vst [vmem:[#allocation2 + $0x180] sm:$0x4] %v988
    %v990 = vld [vmem:[#allocation2 + $0x1c0] sm:$0x4]
    %v991 = vsel %vm968, %v965, %v990
    %992 = vst [vmem:[#allocation2 + $0x1c0] sm:$0x4] %v991
    %v1001 = vunpack.c.l.b16 %v958
    %v1002 = vunpack.c.l.b16 %v959
    %v1003 = vunpack.c.l.b16 %v960
    %v1004 = vunpack.c.l.b16 %v961
    %v1005 = vunpack.c.l.b16 %v962
    %v1006 = vunpack.c.l.b16 %v963
    %v1007 = vunpack.c.l.b16 %v964
    %v1008 = vunpack.c.l.b16 %v965
    %v1009 = vpack.c.b16 %v1001, %v1001
    %v1010 = vpack.c.b16 %v1002, %v1002
    %v1011 = vpack.c.b16 %v1003, %v1003
    %v1012 = vpack.c.b16 %v1004, %v1004
    %v1013 = vpack.c.b16 %v1005, %v1005
    %v1014 = vpack.c.b16 %v1006, %v1006
    %v1015 = vpack.c.b16 %v1007, %v1007
    %v1016 = vpack.c.b16 %v1008, %v1008
    %v1017 = vunpack.c.l.b16 %v1009
    %v1018 = vunpack.c.l.b16 %v1010
    %v1019 = vunpack.c.l.b16 %v1011
    %v1020 = vunpack.c.l.b16 %v1012
    %v1021 = vunpack.c.l.b16 %v1013
    %v1022 = vunpack.c.l.b16 %v1014
    %v1023 = vunpack.c.l.b16 %v1015
    %v1024 = vunpack.c.l.b16 %v1016
    %v1025 = vrot.slane %v1017, 4
    %v1026 = vrot.slane %v1018, 3
    %v1027 = vsel %vm509, %v1026, %v1025
    %v1028 = vrot.slane %v1019, 2
    %v1029 = vsel %vm512, %v1028, %v1027
    %v1030 = vrot.slane %v1020, 1
    %v1031 = vsel %vm515, %v1030, %v1029
    %v1032 = vsel %vm518, %v1021, %v1031
    %v1033 = vrot.slane %v1022, 7
    %v1034 = vsel %vm521, %v1033, %v1032
    %v1035 = vrot.slane %v1023, 6
    %v1036 = vsel %vm524, %v1035, %v1034
    %v1037 = vrot.slane %v1024, 5
    %v1038 = vsel %vm527, %v1037, %v1036
    %v1039 = vpack.c.b16 %v1038, %v1038
    %1041 = vmatpush.bf16.msra.mxu0 %v387
    %1042 = vmatpush.bf16.msra.mxu0 %v386
    %1043 = vmatpush.bf16.msra.mxu0 %v385
    %1044 = vmatpush.bf16.msra.mxu0 %v384
    %1045 = vmatpush.bf16.msra.mxu0 %v383
    %1046 = vmatpush.bf16.msra.mxu0 %v382
    %1047 = vmatpush.bf16.msra.mxu0 %v381
    %1048 = vmatpush.bf16.msra.mxu0 %v380
    %1049 = vmatmul.bf16.gmra.mxu0 %v1039
    %v1050 = vpop.f32.mrf.mxu0
    %v1051 = vadd.f32 0.0, %v1050
    %v1052 = vpop.f32.mrf.mxu0
    %1053 = vdwg.mxu0
    %v1055 = vrot.slane %v1051, 3
    %v1056 = vrot.slane %v1051, 4
    %v1057 = vrot.slane %v1051, 5
    %v1058 = vrot.slane %v1051, 6
    %v1059 = vrot.slane %v1051, 7
    %v1060 = vrot.slane %v1051, 1
    %v1061 = vrot.slane %v1051, 2
    %v1070 = vadd.f32 %v313, %v1055
    %v1071 = vadd.f32 %v315, %v1056
    %v1072 = vadd.f32 %v318, %v1057
    %v1073 = vadd.f32 %v320, %v1058
    %v1074 = vadd.f32 %v323, %v1059
    %v1075 = vadd.f32 %v325, %v1051
    %v1076 = vadd.f32 %v328, %v1060
    %v1077 = vadd.f32 %v330, %v1061
    %v1078 = vtanh.pop %v1070
    %v1079 = vtanh.pop %v1071
    %v1080 = vtanh.pop %v1072
    %v1081 = vtanh.pop %v1073
    %v1082 = vtanh.pop %v1074
    %v1083 = vtanh.pop %v1075
    %v1084 = vtanh.pop %v1076
    %v1085 = vtanh.pop %v1077
    %v1086 = vpack.c.bf16 %v1078, %v1078
    %v1087 = vpack.c.bf16 %v1079, %v1079
    %v1088 = vpack.c.bf16 %v1080, %v1080
    %v1089 = vpack.c.bf16 %v1081, %v1081
    %v1090 = vpack.c.bf16 %v1082, %v1082
    %v1091 = vpack.c.bf16 %v1083, %v1083
    %v1092 = vpack.c.bf16 %v1084, %v1084
    %v1093 = vpack.c.bf16 %v1085, %v1085
    %vm1094 = vsmask.f32 7946
    %vm1095 = vmand %vm966, %vm1094
    %v1096 = vld [vmem:[#allocation2] sm:$0x4]
    %v1097 = vsel %vm1095, %v1086, %v1096
    %1098 = vst [vmem:[#allocation2] sm:$0x4] %v1097
    %v1099 = vld [vmem:[#allocation2 + $0x40] sm:$0x4]
    %v1100 = vsel %vm1095, %v1087, %v1099
    %1101 = vst [vmem:[#allocation2 + $0x40] sm:$0x4] %v1100
    %v1102 = vld [vmem:[#allocation2 + $0x80] sm:$0x4]
    %v1103 = vsel %vm1095, %v1088, %v1102
    %1104 = vst [vmem:[#allocation2 + $0x80] sm:$0x4] %v1103
    %v1105 = vld [vmem:[#allocation2 + $0xc0] sm:$0x4]
    %v1106 = vsel %vm1095, %v1089, %v1105
    %1107 = vst [vmem:[#allocation2 + $0xc0] sm:$0x4] %v1106
    %v1108 = vld [vmem:[#allocation2 + $0x100] sm:$0x4]
    %v1109 = vsel %vm1095, %v1090, %v1108
    %1110 = vst [vmem:[#allocation2 + $0x100] sm:$0x4] %v1109
    %v1111 = vld [vmem:[#allocation2 + $0x140] sm:$0x4]
    %v1112 = vsel %vm1095, %v1091, %v1111
    %1113 = vst [vmem:[#allocation2 + $0x140] sm:$0x4] %v1112
    %v1114 = vld [vmem:[#allocation2 + $0x180] sm:$0x4]
    %v1115 = vsel %vm1095, %v1092, %v1114
    %1116 = vst [vmem:[#allocation2 + $0x180] sm:$0x4] %v1115
    %v1117 = vld [vmem:[#allocation2 + $0x1c0] sm:$0x4]
    %v1118 = vsel %vm1095, %v1093, %v1117
    %1119 = vst [vmem:[#allocation2 + $0x1c0] sm:$0x4] %v1118
    %v1128 = vunpack.c.l.b16 %v1086
    %v1129 = vunpack.c.l.b16 %v1087
    %v1130 = vunpack.c.l.b16 %v1088
    %v1131 = vunpack.c.l.b16 %v1089
    %v1132 = vunpack.c.l.b16 %v1090
    %v1133 = vunpack.c.l.b16 %v1091
    %v1134 = vunpack.c.l.b16 %v1092
    %v1135 = vunpack.c.l.b16 %v1093
    %v1136 = vpack.c.b16 %v1128, %v1128
    %v1137 = vpack.c.b16 %v1129, %v1129
    %v1138 = vpack.c.b16 %v1130, %v1130
    %v1139 = vpack.c.b16 %v1131, %v1131
    %v1140 = vpack.c.b16 %v1132, %v1132
    %v1141 = vpack.c.b16 %v1133, %v1133
    %v1142 = vpack.c.b16 %v1134, %v1134
    %v1143 = vpack.c.b16 %v1135, %v1135
    %v1144 = vunpack.c.l.b16 %v1136
    %v1145 = vunpack.c.l.b16 %v1137
    %v1146 = vunpack.c.l.b16 %v1138
    %v1147 = vunpack.c.l.b16 %v1139
    %v1148 = vunpack.c.l.b16 %v1140
    %v1149 = vunpack.c.l.b16 %v1141
    %v1150 = vunpack.c.l.b16 %v1142
    %v1151 = vunpack.c.l.b16 %v1143
    %v1152 = vrot.slane %v1144, 5
    %v1153 = vrot.slane %v1145, 4
    %v1154 = vsel %vm509, %v1153, %v1152
    %v1155 = vrot.slane %v1146, 3
    %v1156 = vsel %vm512, %v1155, %v1154
    %v1157 = vrot.slane %v1147, 2
    %v1158 = vsel %vm515, %v1157, %v1156
    %v1159 = vrot.slane %v1148, 1
    %v1160 = vsel %vm518, %v1159, %v1158
    %v1161 = vsel %vm521, %v1149, %v1160
    %v1162 = vrot.slane %v1150, 7
    %v1163 = vsel %vm524, %v1162, %v1161
    %v1164 = vrot.slane %v1151, 6
    %v1165 = vsel %vm527, %v1164, %v1163
    %v1166 = vpack.c.b16 %v1165, %v1165
    %1168 = vmatpush.bf16.msra.mxu0 %v387
    %1169 = vmatpush.bf16.msra.mxu0 %v386
    %1170 = vmatpush.bf16.msra.mxu0 %v385
    %1171 = vmatpush.bf16.msra.mxu0 %v384
    %1172 = vmatpush.bf16.msra.mxu0 %v383
    %1173 = vmatpush.bf16.msra.mxu0 %v382
    %1174 = vmatpush.bf16.msra.mxu0 %v381
    %1175 = vmatpush.bf16.msra.mxu0 %v380
    %1176 = vmatmul.bf16.gmra.mxu0 %v1166
    %v1177 = vpop.f32.mrf.mxu0
    %v1178 = vadd.f32 0.0, %v1177
    %v1179 = vpop.f32.mrf.mxu0
    %1180 = vdwg.mxu0
    %v1182 = vrot.slane %v1178, 2
    %v1183 = vrot.slane %v1178, 3
    %v1184 = vrot.slane %v1178, 4
    %v1185 = vrot.slane %v1178, 5
    %v1186 = vrot.slane %v1178, 6
    %v1187 = vrot.slane %v1178, 7
    %v1188 = vrot.slane %v1178, 1
    %v1197 = vadd.f32 %v313, %v1182
    %v1198 = vadd.f32 %v315, %v1183
    %v1199 = vadd.f32 %v318, %v1184
    %v1200 = vadd.f32 %v320, %v1185
    %v1201 = vadd.f32 %v323, %v1186
    %v1202 = vadd.f32 %v325, %v1187
    %v1203 = vadd.f32 %v328, %v1178
    %v1204 = vadd.f32 %v330, %v1188
    %v1205 = vtanh.pop %v1197
    %v1206 = vtanh.pop %v1198
    %v1207 = vtanh.pop %v1199
    %v1208 = vtanh.pop %v1200
    %v1209 = vtanh.pop %v1201
    %v1210 = vtanh.pop %v1202
    %v1211 = vtanh.pop %v1203
    %v1212 = vtanh.pop %v1204
    %v1213 = vpack.c.bf16 %v1205, %v1205
    %v1214 = vpack.c.bf16 %v1206, %v1206
    %v1215 = vpack.c.bf16 %v1207, %v1207
    %v1216 = vpack.c.bf16 %v1208, %v1208
    %v1217 = vpack.c.bf16 %v1209, %v1209
    %v1218 = vpack.c.bf16 %v1210, %v1210
    %v1219 = vpack.c.bf16 %v1211, %v1211
    %v1220 = vpack.c.bf16 %v1212, %v1212
    %vm1221 = vcmask 1043459
    %vm1222 = vsmask.f32 3328
    %vm1223 = vmand %vm1221, %vm1222
    %v1224 = vld [vmem:[#allocation2] sm:$0x8]
    %v1225 = vsel %vm1223, %v1213, %v1224
    %1226 = vst [vmem:[#allocation2] sm:$0x8] %v1225
    %v1227 = vld [vmem:[#allocation2 + $0x40] sm:$0x8]
    %v1228 = vsel %vm1223, %v1214, %v1227
    %1229 = vst [vmem:[#allocation2 + $0x40] sm:$0x8] %v1228
    %v1230 = vld [vmem:[#allocation2 + $0x80] sm:$0x8]
    %v1231 = vsel %vm1223, %v1215, %v1230
    %1232 = vst [vmem:[#allocation2 + $0x80] sm:$0x8] %v1231
    %v1233 = vld [vmem:[#allocation2 + $0xc0] sm:$0x8]
    %v1234 = vsel %vm1223, %v1216, %v1233
    %1235 = vst [vmem:[#allocation2 + $0xc0] sm:$0x8] %v1234
    %v1236 = vld [vmem:[#allocation2 + $0x100] sm:$0x8]
    %v1237 = vsel %vm1223, %v1217, %v1236
    %1238 = vst [vmem:[#allocation2 + $0x100] sm:$0x8] %v1237
    %v1239 = vld [vmem:[#allocation2 + $0x140] sm:$0x8]
    %v1240 = vsel %vm1223, %v1218, %v1239
    %1241 = vst [vmem:[#allocation2 + $0x140] sm:$0x8] %v1240
    %v1242 = vld [vmem:[#allocation2 + $0x180] sm:$0x8]
    %v1243 = vsel %vm1223, %v1219, %v1242
    %1244 = vst [vmem:[#allocation2 + $0x180] sm:$0x8] %v1243
    %v1245 = vld [vmem:[#allocation2 + $0x1c0] sm:$0x8]
    %v1246 = vsel %vm1223, %v1220, %v1245
    %1247 = vst [vmem:[#allocation2 + $0x1c0] sm:$0x8] %v1246
    %v1256 = vunpack.c.l.b16 %v1213
    %v1257 = vunpack.c.l.b16 %v1214
    %v1258 = vunpack.c.l.b16 %v1215
    %v1259 = vunpack.c.l.b16 %v1216
    %v1260 = vunpack.c.l.b16 %v1217
    %v1261 = vunpack.c.l.b16 %v1218
    %v1262 = vunpack.c.l.b16 %v1219
    %v1263 = vunpack.c.l.b16 %v1220
    %v1264 = vpack.c.b16 %v1256, %v1256
    %v1265 = vpack.c.b16 %v1257, %v1257
    %v1266 = vpack.c.b16 %v1258, %v1258
    %v1267 = vpack.c.b16 %v1259, %v1259
    %v1268 = vpack.c.b16 %v1260, %v1260
    %v1269 = vpack.c.b16 %v1261, %v1261
    %v1270 = vpack.c.b16 %v1262, %v1262
    %v1271 = vpack.c.b16 %v1263, %v1263
    %v1272 = vunpack.c.l.b16 %v1264
    %v1273 = vunpack.c.l.b16 %v1265
    %v1274 = vunpack.c.l.b16 %v1266
    %v1275 = vunpack.c.l.b16 %v1267
    %v1276 = vunpack.c.l.b16 %v1268
    %v1277 = vunpack.c.l.b16 %v1269
    %v1278 = vunpack.c.l.b16 %v1270
    %v1279 = vunpack.c.l.b16 %v1271
    %v1280 = vrot.slane %v1272, 6
    %v1281 = vrot.slane %v1273, 5
    %v1282 = vsel %vm509, %v1281, %v1280
    %v1283 = vrot.slane %v1274, 4
    %v1284 = vsel %vm512, %v1283, %v1282
    %v1285 = vrot.slane %v1275, 3
    %v1286 = vsel %vm515, %v1285, %v1284
    %v1287 = vrot.slane %v1276, 2
    %v1288 = vsel %vm518, %v1287, %v1286
    %v1289 = vrot.slane %v1277, 1
    %v1290 = vsel %vm521, %v1289, %v1288
    %v1291 = vsel %vm524, %v1278, %v1290
    %v1292 = vrot.slane %v1279, 7
    %v1293 = vsel %vm527, %v1292, %v1291
    %v1294 = vpack.c.b16 %v1293, %v1293
    %1296 = vmatpush.bf16.msra.mxu0 %v387
    %1297 = vmatpush.bf16.msra.mxu0 %v386
    %1298 = vmatpush.bf16.msra.mxu0 %v385
    %1299 = vmatpush.bf16.msra.mxu0 %v384
    %1300 = vmatpush.bf16.msra.mxu0 %v383
    %1301 = vmatpush.bf16.msra.mxu0 %v382
    %1302 = vmatpush.bf16.msra.mxu0 %v381
    %1303 = vmatpush.bf16.msra.mxu0 %v380
    %1304 = vmatmul.bf16.gmra.mxu0 %v1294
    %v1305 = vpop.f32.mrf.mxu0
    %v1306 = vadd.f32 0.0, %v1305
    %v1307 = vpop.f32.mrf.mxu0
    %1308 = vdwg.mxu0
    %v1310 = vrot.slane %v1306, 1
    %v1311 = vrot.slane %v1306, 2
    %v1312 = vrot.slane %v1306, 3
    %v1313 = vrot.slane %v1306, 4
    %v1314 = vrot.slane %v1306, 5
    %v1315 = vrot.slane %v1306, 6
    %v1316 = vrot.slane %v1306, 7
    %v1325 = vadd.f32 %v313, %v1310
    %v1326 = vadd.f32 %v315, %v1311
    %v1327 = vadd.f32 %v318, %v1312
    %v1328 = vadd.f32 %v320, %v1313
    %v1329 = vadd.f32 %v323, %v1314
    %v1330 = vadd.f32 %v325, %v1315
    %v1331 = vadd.f32 %v328, %v1316
    %v1332 = vadd.f32 %v330, %v1306
    %v1333 = vtanh.pop %v1325
    %v1334 = vtanh.pop %v1326
    %v1335 = vtanh.pop %v1327
    %v1336 = vtanh.pop %v1328
    %v1337 = vtanh.pop %v1329
    %v1338 = vtanh.pop %v1330
    %v1339 = vtanh.pop %v1331
    %v1340 = vtanh.pop %v1332
    %v1341 = vpack.c.bf16 %v1333, %v1333
    %v1342 = vpack.c.bf16 %v1334, %v1334
    %v1343 = vpack.c.bf16 %v1335, %v1335
    %v1344 = vpack.c.bf16 %v1336, %v1336
    %v1345 = vpack.c.bf16 %v1337, %v1337
    %v1346 = vpack.c.bf16 %v1338, %v1338
    %v1347 = vpack.c.bf16 %v1339, %v1339
    %v1348 = vpack.c.bf16 %v1340, %v1340
    %vm1349 = vsmask.f32 7950
    %vm1350 = vmand %vm1221, %vm1349
    %v1351 = vld [vmem:[#allocation2] sm:$0x8]
    %v1352 = vsel %vm1350, %v1341, %v1351
    %1353 = vst [vmem:[#allocation2] sm:$0x8] %v1352
    %v1354 = vld [vmem:[#allocation2 + $0x40] sm:$0x8]
    %v1355 = vsel %vm1350, %v1342, %v1354
    %1356 = vst [vmem:[#allocation2 + $0x40] sm:$0x8] %v1355
    %v1357 = vld [vmem:[#allocation2 + $0x80] sm:$0x8]
    %v1358 = vsel %vm1350, %v1343, %v1357
    %1359 = vst [vmem:[#allocation2 + $0x80] sm:$0x8] %v1358
    %v1360 = vld [vmem:[#allocation2 + $0xc0] sm:$0x8]
    %v1361 = vsel %vm1350, %v1344, %v1360
    %1362 = vst [vmem:[#allocation2 + $0xc0] sm:$0x8] %v1361
    %v1363 = vld [vmem:[#allocation2 + $0x100] sm:$0x8]
    %v1364 = vsel %vm1350, %v1345, %v1363
    %1365 = vst [vmem:[#allocation2 + $0x100] sm:$0x8] %v1364
    %v1366 = vld [vmem:[#allocation2 + $0x140] sm:$0x8]
    %v1367 = vsel %vm1350, %v1346, %v1366
    %1368 = vst [vmem:[#allocation2 + $0x140] sm:$0x8] %v1367
    %v1369 = vld [vmem:[#allocation2 + $0x180] sm:$0x8]
    %v1370 = vsel %vm1350, %v1347, %v1369
    %1371 = vst [vmem:[#allocation2 + $0x180] sm:$0x8] %v1370
    %v1372 = vld [vmem:[#allocation2 + $0x1c0] sm:$0x8]
    %v1373 = vsel %vm1350, %v1348, %v1372
    %1374 = vst [vmem:[#allocation2 + $0x1c0] sm:$0x8] %v1373
    %v1375 = vld [vmem:[%s1] sm:$0xf]
    %v1376 = vld [vmem:[%s1 + $0x4] sm:$0xf]
    %v1377 = vld [vmem:[%s1 + $0x8] sm:$0xf]
    %v1378 = vld [vmem:[%s1 + $0xc] sm:$0xf]
    %v1379 = vld [vmem:[%s1 + $0x10] sm:$0xf]
    %v1380 = vld [vmem:[%s1 + $0x14] sm:$0xf]
    %v1381 = vld [vmem:[%s1 + $0x18] sm:$0xf]
    %v1382 = vld [vmem:[%s1 + $0x1c] sm:$0xf]
    %v1383 = vld [vmem:[#allocation4] sm:$0xf]
    %v1384 = vld [vmem:[#allocation4 + $0x4] sm:$0xf]
    %v1385 = vld [vmem:[#allocation4 + $0x8] sm:$0xf]
    %v1386 = vld [vmem:[#allocation4 + $0xc] sm:$0xf]
    %v1387 = vld [vmem:[#allocation4 + $0x10] sm:$0xf]
    %v1388 = vld [vmem:[#allocation4 + $0x14] sm:$0xf]
    %v1389 = vld [vmem:[#allocation4 + $0x18] sm:$0xf]
    %v1390 = vld [vmem:[#allocation4 + $0x1c] sm:$0xf]
    %v1391 = vld [vmem:[#allocation4 + $0x20] sm:$0xf]
    %v1392 = vld [vmem:[#allocation4 + $0x24] sm:$0xf]
    %v1393 = vld [vmem:[#allocation4 + $0x28] sm:$0xf]
    %v1394 = vld [vmem:[#allocation4 + $0x2c] sm:$0xf]
    %v1395 = vld [vmem:[#allocation4 + $0x30] sm:$0xf]
    %v1396 = vld [vmem:[#allocation4 + $0x34] sm:$0xf]
    %v1397 = vld [vmem:[#allocation4 + $0x38] sm:$0xf]
    %v1398 = vld [vmem:[#allocation4 + $0x3c] sm:$0xf]
    %v1399 = vld [vmem:[%s8] sm:$0x1]
    %v1401 = vperm.slane %v1399, 0
    %v1411 = vunpack.c.l.b16 %v1375
    %v1412 = vunpack.c.l.b16 %v1376
    %v1413 = vunpack.c.l.b16 %v1377
    %v1414 = vunpack.c.l.b16 %v1378
    %v1415 = vunpack.c.l.b16 %v1379
    %v1416 = vunpack.c.l.b16 %v1380
    %v1417 = vunpack.c.l.b16 %v1381
    %v1418 = vunpack.c.l.b16 %v1382
    %v1419 = vpack.c.b16 %v1412, %v1411
    %v1420 = vpack.c.b16 %v1414, %v1413
    %v1421 = vpack.c.b16 %v1416, %v1415
    %v1422 = vpack.c.b16 %v1418, %v1417
    %v1443 = vunpack.c.l.b16 %v1383
    %v1444 = vunpack.c.l.b16 %v1384
    %v1445 = vunpack.c.l.b16 %v1385
    %v1446 = vunpack.c.l.b16 %v1386
    %v1447 = vunpack.c.l.b16 %v1387
    %v1448 = vunpack.c.l.b16 %v1388
    %v1449 = vunpack.c.l.b16 %v1389
    %v1450 = vunpack.c.l.b16 %v1390
    %v1451 = vunpack.c.l.b16 %v1391
    %v1452 = vunpack.c.l.b16 %v1392
    %v1453 = vunpack.c.l.b16 %v1393
    %v1454 = vunpack.c.l.b16 %v1394
    %v1455 = vunpack.c.l.b16 %v1395
    %v1456 = vunpack.c.l.b16 %v1396
    %v1457 = vunpack.c.l.b16 %v1397
    %v1458 = vunpack.c.l.b16 %v1398
    %v1459 = vpack.c.b16 %v1444, %v1443
    %v1460 = vpack.c.b16 %v1446, %v1445
    %v1461 = vpack.c.b16 %v1448, %v1447
    %v1462 = vpack.c.b16 %v1450, %v1449
    %v1463 = vpack.c.b16 %v1452, %v1451
    %v1464 = vpack.c.b16 %v1454, %v1453
    %v1465 = vpack.c.b16 %v1456, %v1455
    %v1466 = vpack.c.b16 %v1458, %v1457
    %1475 = vmatpush.bf16.msra.mxu0 %v1466
    %1476 = vmatpush.bf16.msra.mxu0 %v1465
    %1477 = vmatpush.bf16.msra.mxu0 %v1464
    %1478 = vmatpush.bf16.msra.mxu0 %v1463
    %1479 = vmatpush.bf16.msra.mxu0 %v1462
    %1480 = vmatpush.bf16.msra.mxu0 %v1461
    %1481 = vmatpush.bf16.msra.mxu0 %v1460
    %1482 = vmatpush.bf16.msra.mxu0 %v1459
    %1483 = vmatmul.bf16.gmra.mxu0 %v1419
    %v1484 = vpop.f32.mrf.mxu0
    %v1485 = vadd.f32 %v1401, %v1484
    %v1486 = vpop.f32.mrf.mxu0
    %v1487 = vadd.f32 %v1401, %v1486
    %1488 = vmatmul.bf16.gmra.mxu0 %v1420
    %v1489 = vpop.f32.mrf.mxu0
    %v1490 = vadd.f32 %v1401, %v1489
    %v1491 = vpop.f32.mrf.mxu0
    %v1492 = vadd.f32 %v1401, %v1491
    %1493 = vmatmul.bf16.gmra.mxu0 %v1421
    %v1494 = vpop.f32.mrf.mxu0
    %v1495 = vadd.f32 %v1401, %v1494
    %v1496 = vpop.f32.mrf.mxu0
    %v1497 = vadd.f32 %v1401, %v1496
    %1498 = vmatmul.bf16.gmra.mxu0 %v1422
    %v1499 = vpop.f32.mrf.mxu0
    %v1500 = vadd.f32 %v1401, %v1499
    %v1501 = vpop.f32.mrf.mxu0
    %v1502 = vadd.f32 %v1401, %v1501
    %1503 = vdwg.mxu0
    %v1504 = vld [vmem:[#allocation6] sm:$0xf]
    %v1505 = vld [vmem:[#allocation6 + $0x4] sm:$0xf]
    %v1506 = vld [vmem:[#allocation6 + $0x8] sm:$0xf]
    %v1507 = vld [vmem:[#allocation6 + $0xc] sm:$0xf]
    %v1508 = vld [vmem:[#allocation6 + $0x10] sm:$0xf]
    %v1509 = vld [vmem:[#allocation6 + $0x14] sm:$0xf]
    %v1510 = vld [vmem:[#allocation6 + $0x18] sm:$0xf]
    %v1511 = vld [vmem:[#allocation6 + $0x1c] sm:$0xf]
    %v1512 = vld [vmem:[#allocation6 + $0x20] sm:$0xf]
    %v1513 = vld [vmem:[#allocation6 + $0x24] sm:$0xf]
    %v1514 = vld [vmem:[#allocation6 + $0x28] sm:$0xf]
    %v1515 = vld [vmem:[#allocation6 + $0x2c] sm:$0xf]
    %v1516 = vld [vmem:[#allocation6 + $0x30] sm:$0xf]
    %v1517 = vld [vmem:[#allocation6 + $0x34] sm:$0xf]
    %v1518 = vld [vmem:[#allocation6 + $0x38] sm:$0xf]
    %v1519 = vld [vmem:[#allocation6 + $0x3c] sm:$0xf]
    %v1528 = vunpack.c.l.b16 %v1341
    %v1529 = vunpack.c.l.b16 %v1342
    %v1530 = vunpack.c.l.b16 %v1343
    %v1531 = vunpack.c.l.b16 %v1344
    %v1532 = vunpack.c.l.b16 %v1345
    %v1533 = vunpack.c.l.b16 %v1346
    %v1534 = vunpack.c.l.b16 %v1347
    %v1535 = vunpack.c.l.b16 %v1348
    %v1536 = vpack.c.b16 %v1528, %v1528
    %v1537 = vpack.c.b16 %v1529, %v1529
    %v1538 = vpack.c.b16 %v1530, %v1530
    %v1539 = vpack.c.b16 %v1531, %v1531
    %v1540 = vpack.c.b16 %v1532, %v1532
    %v1541 = vpack.c.b16 %v1533, %v1533
    %v1542 = vpack.c.b16 %v1534, %v1534
    %v1543 = vpack.c.b16 %v1535, %v1535
    %v1544 = vunpack.c.l.b16 %v1536
    %v1545 = vunpack.c.l.b16 %v1537
    %v1546 = vunpack.c.l.b16 %v1538
    %v1547 = vunpack.c.l.b16 %v1539
    %v1548 = vunpack.c.l.b16 %v1540
    %v1549 = vunpack.c.l.b16 %v1541
    %v1550 = vunpack.c.l.b16 %v1542
    %v1551 = vunpack.c.l.b16 %v1543
    %v1552 = vrot.slane %v1544, 7
    %v1553 = vrot.slane %v1545, 6
    %v1554 = vsel %vm509, %v1553, %v1552
    %v1555 = vrot.slane %v1546, 5
    %v1556 = vsel %vm512, %v1555, %v1554
    %v1557 = vrot.slane %v1547, 4
    %v1558 = vsel %vm515, %v1557, %v1556
    %v1559 = vrot.slane %v1548, 3
    %v1560 = vsel %vm518, %v1559, %v1558
    %v1561 = vrot.slane %v1549, 2
    %v1562 = vsel %vm521, %v1561, %v1560
    %v1563 = vrot.slane %v1550, 1
    %v1564 = vsel %vm524, %v1563, %v1562
    %v1565 = vsel %vm527, %v1551, %v1564
    %v1566 = vpack.c.b16 %v1565, %v1565
    %v1584 = vunpack.c.l.b16 %v1504
    %v1585 = vunpack.c.l.b16 %v1505
    %v1586 = vunpack.c.l.b16 %v1506
    %v1587 = vunpack.c.l.b16 %v1507
    %v1588 = vunpack.c.l.b16 %v1508
    %v1589 = vunpack.c.l.b16 %v1509
    %v1590 = vunpack.c.l.b16 %v1510
    %v1591 = vunpack.c.l.b16 %v1511
    %v1592 = vunpack.c.l.b16 %v1512
    %v1593 = vunpack.c.l.b16 %v1513
    %v1594 = vunpack.c.l.b16 %v1514
    %v1595 = vunpack.c.l.b16 %v1515
    %v1596 = vunpack.c.l.b16 %v1516
    %v1597 = vunpack.c.l.b16 %v1517
    %v1598 = vunpack.c.l.b16 %v1518
    %v1599 = vunpack.c.l.b16 %v1519
    %v1600 = vpack.c.b16 %v1585, %v1584
    %v1601 = vpack.c.b16 %v1587, %v1586
    %v1602 = vpack.c.b16 %v1589, %v1588
    %v1603 = vpack.c.b16 %v1591, %v1590
    %v1604 = vpack.c.b16 %v1593, %v1592
    %v1605 = vpack.c.b16 %v1595, %v1594
    %v1606 = vpack.c.b16 %v1597, %v1596
    %v1607 = vpack.c.b16 %v1599, %v1598
    %1616 = vmatpush.bf16.msra.mxu0 %v1607
    %1617 = vmatpush.bf16.msra.mxu0 %v1606
    %1618 = vmatpush.bf16.msra.mxu0 %v1605
    %1619 = vmatpush.bf16.msra.mxu0 %v1604
    %1620 = vmatpush.bf16.msra.mxu0 %v1603
    %1621 = vmatpush.bf16.msra.mxu0 %v1602
    %1622 = vmatpush.bf16.msra.mxu0 %v1601
    %1623 = vmatpush.bf16.msra.mxu0 %v1600
    %1624 = vmatmul.bf16.gmra.mxu0 %v1566
    %v1625 = vpop.f32.mrf.mxu0
    %v1626 = vadd.f32 0.0, %v1625
    %v1627 = vpop.f32.mrf.mxu0
    %1628 = vdwg.mxu0
    %v1630 = vrot.slane %v1626, 1
    %v1631 = vrot.slane %v1626, 2
    %v1632 = vrot.slane %v1626, 3
    %v1633 = vrot.slane %v1626, 4
    %v1634 = vrot.slane %v1626, 5
    %v1635 = vrot.slane %v1626, 6
    %v1636 = vrot.slane %v1626, 7
    %v1645 = vadd.f32 %v1485, %v1626
    %v1646 = vadd.f32 %v1487, %v1630
    %v1647 = vadd.f32 %v1490, %v1631
    %v1648 = vadd.f32 %v1492, %v1632
    %v1649 = vadd.f32 %v1495, %v1633
    %v1650 = vadd.f32 %v1497, %v1634
    %v1651 = vadd.f32 %v1500, %v1635
    %v1652 = vadd.f32 %v1502, %v1636
    %v1653 = vtanh.pop %v1645
    %v1654 = vtanh.pop %v1646
    %v1655 = vtanh.pop %v1647
    %v1656 = vtanh.pop %v1648
    %v1657 = vtanh.pop %v1649
    %v1658 = vtanh.pop %v1650
    %v1659 = vtanh.pop %v1651
    %v1660 = vtanh.pop %v1652
    %v1661 = vpack.c.bf16 %v1653, %v1653
    %v1662 = vpack.c.bf16 %v1654, %v1654
    %v1663 = vpack.c.bf16 %v1655, %v1655
    %v1664 = vpack.c.bf16 %v1656, %v1656
    %v1665 = vpack.c.bf16 %v1657, %v1657
    %v1666 = vpack.c.bf16 %v1658, %v1658
    %v1667 = vpack.c.bf16 %v1659, %v1659
    %v1668 = vpack.c.bf16 %v1660, %v1660
    %v1669 = vld [vmem:[#allocation3] sm:$0x1]
    %v1670 = vsel %vm451, %v1661, %v1669
    %1671 = vst [vmem:[#allocation3] sm:$0x1] %v1670
    %v1672 = vld [vmem:[#allocation3 + $0x4] sm:$0x1]
    %v1673 = vsel %vm451, %v1662, %v1672
    %1674 = vst [vmem:[#allocation3 + $0x4] sm:$0x1] %v1673
    %v1675 = vld [vmem:[#allocation3 + $0x8] sm:$0x1]
    %v1676 = vsel %vm451, %v1663, %v1675
    %1677 = vst [vmem:[#allocation3 + $0x8] sm:$0x1] %v1676
    %v1678 = vld [vmem:[#allocation3 + $0xc] sm:$0x1]
    %v1679 = vsel %vm451, %v1664, %v1678
    %1680 = vst [vmem:[#allocation3 + $0xc] sm:$0x1] %v1679
    %v1681 = vld [vmem:[#allocation3 + $0x10] sm:$0x1]
    %v1682 = vsel %vm451, %v1665, %v1681
    %1683 = vst [vmem:[#allocation3 + $0x10] sm:$0x1] %v1682
    %v1684 = vld [vmem:[#allocation3 + $0x14] sm:$0x1]
    %v1685 = vsel %vm451, %v1666, %v1684
    %1686 = vst [vmem:[#allocation3 + $0x14] sm:$0x1] %v1685
    %v1687 = vld [vmem:[#allocation3 + $0x18] sm:$0x1]
    %v1688 = vsel %vm451, %v1667, %v1687
    %1689 = vst [vmem:[#allocation3 + $0x18] sm:$0x1] %v1688
    %v1690 = vld [vmem:[#allocation3 + $0x1c] sm:$0x1]
    %v1691 = vsel %vm451, %v1668, %v1690
    %1692 = vst [vmem:[#allocation3 + $0x1c] sm:$0x1] %v1691
    %v1701 = vunpack.c.l.b16 %v1661
    %v1702 = vunpack.c.l.b16 %v1662
    %v1703 = vunpack.c.l.b16 %v1663
    %v1704 = vunpack.c.l.b16 %v1664
    %v1705 = vunpack.c.l.b16 %v1665
    %v1706 = vunpack.c.l.b16 %v1666
    %v1707 = vunpack.c.l.b16 %v1667
    %v1708 = vunpack.c.l.b16 %v1668
    %v1709 = vpack.c.b16 %v1701, %v1701
    %v1710 = vpack.c.b16 %v1702, %v1702
    %v1711 = vpack.c.b16 %v1703, %v1703
    %v1712 = vpack.c.b16 %v1704, %v1704
    %v1713 = vpack.c.b16 %v1705, %v1705
    %v1714 = vpack.c.b16 %v1706, %v1706
    %v1715 = vpack.c.b16 %v1707, %v1707
    %v1716 = vpack.c.b16 %v1708, %v1708
    %v1717 = vunpack.c.l.b16 %v1709
    %v1718 = vunpack.c.l.b16 %v1710
    %v1719 = vunpack.c.l.b16 %v1711
    %v1720 = vunpack.c.l.b16 %v1712
    %v1721 = vunpack.c.l.b16 %v1713
    %v1722 = vunpack.c.l.b16 %v1714
    %v1723 = vunpack.c.l.b16 %v1715
    %v1724 = vunpack.c.l.b16 %v1716
    %v1725 = vrot.slane %v1718, 7
    %v1726 = vsel %vm509, %v1725, %v1717
    %v1727 = vrot.slane %v1719, 6
    %v1728 = vsel %vm512, %v1727, %v1726
    %v1729 = vrot.slane %v1720, 5
    %v1730 = vsel %vm515, %v1729, %v1728
    %v1731 = vrot.slane %v1721, 4
    %v1732 = vsel %vm518, %v1731, %v1730
    %v1733 = vrot.slane %v1722, 3
    %v1734 = vsel %vm521, %v1733, %v1732
    %v1735 = vrot.slane %v1723, 2
    %v1736 = vsel %vm524, %v1735, %v1734
    %v1737 = vrot.slane %v1724, 1
    %v1738 = vsel %vm527, %v1737, %v1736
    %v1739 = vpack.c.b16 %v1738, %v1738
    %1741 = vmatpush.bf16.msra.mxu0 %v1607
    %1742 = vmatpush.bf16.msra.mxu0 %v1606
    %1743 = vmatpush.bf16.msra.mxu0 %v1605
    %1744 = vmatpush.bf16.msra.mxu0 %v1604
    %1745 = vmatpush.bf16.msra.mxu0 %v1603
    %1746 = vmatpush.bf16.msra.mxu0 %v1602
    %1747 = vmatpush.bf16.msra.mxu0 %v1601
    %1748 = vmatpush.bf16.msra.mxu0 %v1600
    %1749 = vmatmul.bf16.gmra.mxu0 %v1739
    %v1750 = vpop.f32.mrf.mxu0
    %v1751 = vadd.f32 0.0, %v1750
    %v1752 = vpop.f32.mrf.mxu0
    %1753 = vdwg.mxu0
    %v1755 = vrot.slane %v1751, 7
    %v1756 = vrot.slane %v1751, 1
    %v1757 = vrot.slane %v1751, 2
    %v1758 = vrot.slane %v1751, 3
    %v1759 = vrot.slane %v1751, 4
    %v1760 = vrot.slane %v1751, 5
    %v1761 = vrot.slane %v1751, 6
    %v1770 = vadd.f32 %v1485, %v1755
    %v1771 = vadd.f32 %v1487, %v1751
    %v1772 = vadd.f32 %v1490, %v1756
    %v1773 = vadd.f32 %v1492, %v1757
    %v1774 = vadd.f32 %v1495, %v1758
    %v1775 = vadd.f32 %v1497, %v1759
    %v1776 = vadd.f32 %v1500, %v1760
    %v1777 = vadd.f32 %v1502, %v1761
    %v1778 = vtanh.pop %v1770
    %v1779 = vtanh.pop %v1771
    %v1780 = vtanh.pop %v1772
    %v1781 = vtanh.pop %v1773
    %v1782 = vtanh.pop %v1774
    %v1783 = vtanh.pop %v1775
    %v1784 = vtanh.pop %v1776
    %v1785 = vtanh.pop %v1777
    %v1786 = vpack.c.bf16 %v1778, %v1778
    %v1787 = vpack.c.bf16 %v1779, %v1779
    %v1788 = vpack.c.bf16 %v1780, %v1780
    %v1789 = vpack.c.bf16 %v1781, %v1781
    %v1790 = vpack.c.bf16 %v1782, %v1782
    %v1791 = vpack.c.bf16 %v1783, %v1783
    %v1792 = vpack.c.bf16 %v1784, %v1784
    %v1793 = vpack.c.bf16 %v1785, %v1785
    %v1794 = vld [vmem:[#allocation3] sm:$0x1]
    %v1795 = vsel %vm585, %v1786, %v1794
    %1796 = vst [vmem:[#allocation3] sm:$0x1] %v1795
    %v1797 = vld [vmem:[#allocation3 + $0x4] sm:$0x1]
    %v1798 = vsel %vm585, %v1787, %v1797
    %1799 = vst [vmem:[#allocation3 + $0x4] sm:$0x1] %v1798
    %v1800 = vld [vmem:[#allocation3 + $0x8] sm:$0x1]
    %v1801 = vsel %vm585, %v1788, %v1800
    %1802 = vst [vmem:[#allocation3 + $0x8] sm:$0x1] %v1801
    %v1803 = vld [vmem:[#allocation3 + $0xc] sm:$0x1]
    %v1804 = vsel %vm585, %v1789, %v1803
    %1805 = vst [vmem:[#allocation3 + $0xc] sm:$0x1] %v1804
    %v1806 = vld [vmem:[#allocation3 + $0x10] sm:$0x1]
    %v1807 = vsel %vm585, %v1790, %v1806
    %1808 = vst [vmem:[#allocation3 + $0x10] sm:$0x1] %v1807
    %v1809 = vld [vmem:[#allocation3 + $0x14] sm:$0x1]
    %v1810 = vsel %vm585, %v1791, %v1809
    %1811 = vst [vmem:[#allocation3 + $0x14] sm:$0x1] %v1810
    %v1812 = vld [vmem:[#allocation3 + $0x18] sm:$0x1]
    %v1813 = vsel %vm585, %v1792, %v1812
    %1814 = vst [vmem:[#allocation3 + $0x18] sm:$0x1] %v1813
    %v1815 = vld [vmem:[#allocation3 + $0x1c] sm:$0x1]
    %v1816 = vsel %vm585, %v1793, %v1815
    %1817 = vst [vmem:[#allocation3 + $0x1c] sm:$0x1] %v1816
    %v1826 = vunpack.c.l.b16 %v1786
    %v1827 = vunpack.c.l.b16 %v1787
    %v1828 = vunpack.c.l.b16 %v1788
    %v1829 = vunpack.c.l.b16 %v1789
    %v1830 = vunpack.c.l.b16 %v1790
    %v1831 = vunpack.c.l.b16 %v1791
    %v1832 = vunpack.c.l.b16 %v1792
    %v1833 = vunpack.c.l.b16 %v1793
    %v1834 = vpack.c.b16 %v1826, %v1826
    %v1835 = vpack.c.b16 %v1827, %v1827
    %v1836 = vpack.c.b16 %v1828, %v1828
    %v1837 = vpack.c.b16 %v1829, %v1829
    %v1838 = vpack.c.b16 %v1830, %v1830
    %v1839 = vpack.c.b16 %v1831, %v1831
    %v1840 = vpack.c.b16 %v1832, %v1832
    %v1841 = vpack.c.b16 %v1833, %v1833
    %v1842 = vunpack.c.l.b16 %v1834
    %v1843 = vunpack.c.l.b16 %v1835
    %v1844 = vunpack.c.l.b16 %v1836
    %v1845 = vunpack.c.l.b16 %v1837
    %v1846 = vunpack.c.l.b16 %v1838
    %v1847 = vunpack.c.l.b16 %v1839
    %v1848 = vunpack.c.l.b16 %v1840
    %v1849 = vunpack.c.l.b16 %v1841
    %v1850 = vrot.slane %v1842, 1
    %v1851 = vsel %vm509, %v1843, %v1850
    %v1852 = vrot.slane %v1844, 7
    %v1853 = vsel %vm512, %v1852, %v1851
    %v1854 = vrot.slane %v1845, 6
    %v1855 = vsel %vm515, %v1854, %v1853
    %v1856 = vrot.slane %v1846, 5
    %v1857 = vsel %vm518, %v1856, %v1855
    %v1858 = vrot.slane %v1847, 4
    %v1859 = vsel %vm521, %v1858, %v1857
    %v1860 = vrot.slane %v1848, 3
    %v1861 = vsel %vm524, %v1860, %v1859
    %v1862 = vrot.slane %v1849, 2
    %v1863 = vsel %vm527, %v1862, %v1861
    %v1864 = vpack.c.b16 %v1863, %v1863
    %1866 = vmatpush.bf16.msra.mxu0 %v1607
    %1867 = vmatpush.bf16.msra.mxu0 %v1606
    %1868 = vmatpush.bf16.msra.mxu0 %v1605
    %1869 = vmatpush.bf16.msra.mxu0 %v1604
    %1870 = vmatpush.bf16.msra.mxu0 %v1603
    %1871 = vmatpush.bf16.msra.mxu0 %v1602
    %1872 = vmatpush.bf16.msra.mxu0 %v1601
    %1873 = vmatpush.bf16.msra.mxu0 %v1600
    %1874 = vmatmul.bf16.gmra.mxu0 %v1864
    %v1875 = vpop.f32.mrf.mxu0
    %v1876 = vadd.f32 0.0, %v1875
    %v1877 = vpop.f32.mrf.mxu0
    %1878 = vdwg.mxu0
    %v1880 = vrot.slane %v1876, 6
    %v1881 = vrot.slane %v1876, 7
    %v1882 = vrot.slane %v1876, 1
    %v1883 = vrot.slane %v1876, 2
    %v1884 = vrot.slane %v1876, 3
    %v1885 = vrot.slane %v1876, 4
    %v1886 = vrot.slane %v1876, 5
    %v1895 = vadd.f32 %v1485, %v1880
    %v1896 = vadd.f32 %v1487, %v1881
    %v1897 = vadd.f32 %v1490, %v1876
    %v1898 = vadd.f32 %v1492, %v1882
    %v1899 = vadd.f32 %v1495, %v1883
    %v1900 = vadd.f32 %v1497, %v1884
    %v1901 = vadd.f32 %v1500, %v1885
    %v1902 = vadd.f32 %v1502, %v1886
    %v1903 = vtanh.pop %v1895
    %v1904 = vtanh.pop %v1896
    %v1905 = vtanh.pop %v1897
    %v1906 = vtanh.pop %v1898
    %v1907 = vtanh.pop %v1899
    %v1908 = vtanh.pop %v1900
    %v1909 = vtanh.pop %v1901
    %v1910 = vtanh.pop %v1902
    %v1911 = vpack.c.bf16 %v1903, %v1903
    %v1912 = vpack.c.bf16 %v1904, %v1904
    %v1913 = vpack.c.bf16 %v1905, %v1905
    %v1914 = vpack.c.bf16 %v1906, %v1906
    %v1915 = vpack.c.bf16 %v1907, %v1907
    %v1916 = vpack.c.bf16 %v1908, %v1908
    %v1917 = vpack.c.bf16 %v1909, %v1909
    %v1918 = vpack.c.bf16 %v1910, %v1910
    %v1919 = vld [vmem:[#allocation3] sm:$0x2]
    %v1920 = vsel %vm713, %v1911, %v1919
    %1921 = vst [vmem:[#allocation3] sm:$0x2] %v1920
    %v1922 = vld [vmem:[#allocation3 + $0x4] sm:$0x2]
    %v1923 = vsel %vm713, %v1912, %v1922
    %1924 = vst [vmem:[#allocation3 + $0x4] sm:$0x2] %v1923
    %v1925 = vld [vmem:[#allocation3 + $0x8] sm:$0x2]
    %v1926 = vsel %vm713, %v1913, %v1925
    %1927 = vst [vmem:[#allocation3 + $0x8] sm:$0x2] %v1926
    %v1928 = vld [vmem:[#allocation3 + $0xc] sm:$0x2]
    %v1929 = vsel %vm713, %v1914, %v1928
    %1930 = vst [vmem:[#allocation3 + $0xc] sm:$0x2] %v1929
    %v1931 = vld [vmem:[#allocation3 + $0x10] sm:$0x2]
    %v1932 = vsel %vm713, %v1915, %v1931
    %1933 = vst [vmem:[#allocation3 + $0x10] sm:$0x2] %v1932
    %v1934 = vld [vmem:[#allocation3 + $0x14] sm:$0x2]
    %v1935 = vsel %vm713, %v1916, %v1934
    %1936 = vst [vmem:[#allocation3 + $0x14] sm:$0x2] %v1935
    %v1937 = vld [vmem:[#allocation3 + $0x18] sm:$0x2]
    %v1938 = vsel %vm713, %v1917, %v1937
    %1939 = vst [vmem:[#allocation3 + $0x18] sm:$0x2] %v1938
    %v1940 = vld [vmem:[#allocation3 + $0x1c] sm:$0x2]
    %v1941 = vsel %vm713, %v1918, %v1940
    %1942 = vst [vmem:[#allocation3 + $0x1c] sm:$0x2] %v1941
    %v1951 = vunpack.c.l.b16 %v1911
    %v1952 = vunpack.c.l.b16 %v1912
    %v1953 = vunpack.c.l.b16 %v1913
    %v1954 = vunpack.c.l.b16 %v1914
    %v1955 = vunpack.c.l.b16 %v1915
    %v1956 = vunpack.c.l.b16 %v1916
    %v1957 = vunpack.c.l.b16 %v1917
    %v1958 = vunpack.c.l.b16 %v1918
    %v1959 = vpack.c.b16 %v1951, %v1951
    %v1960 = vpack.c.b16 %v1952, %v1952
    %v1961 = vpack.c.b16 %v1953, %v1953
    %v1962 = vpack.c.b16 %v1954, %v1954
    %v1963 = vpack.c.b16 %v1955, %v1955
    %v1964 = vpack.c.b16 %v1956, %v1956
    %v1965 = vpack.c.b16 %v1957, %v1957
    %v1966 = vpack.c.b16 %v1958, %v1958
    %v1967 = vunpack.c.l.b16 %v1959
    %v1968 = vunpack.c.l.b16 %v1960
    %v1969 = vunpack.c.l.b16 %v1961
    %v1970 = vunpack.c.l.b16 %v1962
    %v1971 = vunpack.c.l.b16 %v1963
    %v1972 = vunpack.c.l.b16 %v1964
    %v1973 = vunpack.c.l.b16 %v1965
    %v1974 = vunpack.c.l.b16 %v1966
    %v1975 = vrot.slane %v1967, 2
    %v1976 = vrot.slane %v1968, 1
    %v1977 = vsel %vm509, %v1976, %v1975
    %v1978 = vsel %vm512, %v1969, %v1977
    %v1979 = vrot.slane %v1970, 7
    %v1980 = vsel %vm515, %v1979, %v1978
    %v1981 = vrot.slane %v1971, 6
    %v1982 = vsel %vm518, %v1981, %v1980
    %v1983 = vrot.slane %v1972, 5
    %v1984 = vsel %vm521, %v1983, %v1982
    %v1985 = vrot.slane %v1973, 4
    %v1986 = vsel %vm524, %v1985, %v1984
    %v1987 = vrot.slane %v1974, 3
    %v1988 = vsel %vm527, %v1987, %v1986
    %v1989 = vpack.c.b16 %v1988, %v1988
    %1991 = vmatpush.bf16.msra.mxu0 %v1607
    %1992 = vmatpush.bf16.msra.mxu0 %v1606
    %1993 = vmatpush.bf16.msra.mxu0 %v1605
    %1994 = vmatpush.bf16.msra.mxu0 %v1604
    %1995 = vmatpush.bf16.msra.mxu0 %v1603
    %1996 = vmatpush.bf16.msra.mxu0 %v1602
    %1997 = vmatpush.bf16.msra.mxu0 %v1601
    %1998 = vmatpush.bf16.msra.mxu0 %v1600
    %1999 = vmatmul.bf16.gmra.mxu0 %v1989
    %v2000 = vpop.f32.mrf.mxu0
    %v2001 = vadd.f32 0.0, %v2000
    %v2002 = vpop.f32.mrf.mxu0
    %2003 = vdwg.mxu0
    %v2005 = vrot.slane %v2001, 5
    %v2006 = vrot.slane %v2001, 6
    %v2007 = vrot.slane %v2001, 7
    %v2008 = vrot.slane %v2001, 1
    %v2009 = vrot.slane %v2001, 2
    %v2010 = vrot.slane %v2001, 3
    %v2011 = vrot.slane %v2001, 4
    %v2020 = vadd.f32 %v1485, %v2005
    %v2021 = vadd.f32 %v1487, %v2006
    %v2022 = vadd.f32 %v1490, %v2007
    %v2023 = vadd.f32 %v1492, %v2001
    %v2024 = vadd.f32 %v1495, %v2008
    %v2025 = vadd.f32 %v1497, %v2009
    %v2026 = vadd.f32 %v1500, %v2010
    %v2027 = vadd.f32 %v1502, %v2011
    %v2028 = vtanh.pop %v2020
    %v2029 = vtanh.pop %v2021
    %v2030 = vtanh.pop %v2022
    %v2031 = vtanh.pop %v2023
    %v2032 = vtanh.pop %v2024
    %v2033 = vtanh.pop %v2025
    %v2034 = vtanh.pop %v2026
    %v2035 = vtanh.pop %v2027
    %v2036 = vpack.c.bf16 %v2028, %v2028
    %v2037 = vpack.c.bf16 %v2029, %v2029
    %v2038 = vpack.c.bf16 %v2030, %v2030
    %v2039 = vpack.c.bf16 %v2031, %v2031
    %v2040 = vpack.c.bf16 %v2032, %v2032
    %v2041 = vpack.c.bf16 %v2033, %v2033
    %v2042 = vpack.c.bf16 %v2034, %v2034
    %v2043 = vpack.c.bf16 %v2035, %v2035
    %v2044 = vld [vmem:[#allocation3] sm:$0x2]
    %v2045 = vsel %vm840, %v2036, %v2044
    %2046 = vst [vmem:[#allocation3] sm:$0x2] %v2045
    %v2047 = vld [vmem:[#allocation3 + $0x4] sm:$0x2]
    %v2048 = vsel %vm840, %v2037, %v2047
    %2049 = vst [vmem:[#allocation3 + $0x4] sm:$0x2] %v2048
    %v2050 = vld [vmem:[#allocation3 + $0x8] sm:$0x2]
    %v2051 = vsel %vm840, %v2038, %v2050
    %2052 = vst [vmem:[#allocation3 + $0x8] sm:$0x2] %v2051
    %v2053 = vld [vmem:[#allocation3 + $0xc] sm:$0x2]
    %v2054 = vsel %vm840, %v2039, %v2053
    %2055 = vst [vmem:[#allocation3 + $0xc] sm:$0x2] %v2054
    %v2056 = vld [vmem:[#allocation3 + $0x10] sm:$0x2]
    %v2057 = vsel %vm840, %v2040, %v2056
    %2058 = vst [vmem:[#allocation3 + $0x10] sm:$0x2] %v2057
    %v2059 = vld [vmem:[#allocation3 + $0x14] sm:$0x2]
    %v2060 = vsel %vm840, %v2041, %v2059
    %2061 = vst [vmem:[#allocation3 + $0x14] sm:$0x2] %v2060
    %v2062 = vld [vmem:[#allocation3 + $0x18] sm:$0x2]
    %v2063 = vsel %vm840, %v2042, %v2062
    %2064 = vst [vmem:[#allocation3 + $0x18] sm:$0x2] %v2063
    %v2065 = vld [vmem:[#allocation3 + $0x1c] sm:$0x2]
    %v2066 = vsel %vm840, %v2043, %v2065
    %2067 = vst [vmem:[#allocation3 + $0x1c] sm:$0x2] %v2066
    %v2076 = vunpack.c.l.b16 %v2036
    %v2077 = vunpack.c.l.b16 %v2037
    %v2078 = vunpack.c.l.b16 %v2038
    %v2079 = vunpack.c.l.b16 %v2039
    %v2080 = vunpack.c.l.b16 %v2040
    %v2081 = vunpack.c.l.b16 %v2041
    %v2082 = vunpack.c.l.b16 %v2042
    %v2083 = vunpack.c.l.b16 %v2043
    %v2084 = vpack.c.b16 %v2076, %v2076
    %v2085 = vpack.c.b16 %v2077, %v2077
    %v2086 = vpack.c.b16 %v2078, %v2078
    %v2087 = vpack.c.b16 %v2079, %v2079
    %v2088 = vpack.c.b16 %v2080, %v2080
    %v2089 = vpack.c.b16 %v2081, %v2081
    %v2090 = vpack.c.b16 %v2082, %v2082
    %v2091 = vpack.c.b16 %v2083, %v2083
    %v2092 = vunpack.c.l.b16 %v2084
    %v2093 = vunpack.c.l.b16 %v2085
    %v2094 = vunpack.c.l.b16 %v2086
    %v2095 = vunpack.c.l.b16 %v2087
    %v2096 = vunpack.c.l.b16 %v2088
    %v2097 = vunpack.c.l.b16 %v2089
    %v2098 = vunpack.c.l.b16 %v2090
    %v2099 = vunpack.c.l.b16 %v2091
    %v2100 = vrot.slane %v2092, 3
    %v2101 = vrot.slane %v2093, 2
    %v2102 = vsel %vm509, %v2101, %v2100
    %v2103 = vrot.slane %v2094, 1
    %v2104 = vsel %vm512, %v2103, %v2102
    %v2105 = vsel %vm515, %v2095, %v2104
    %v2106 = vrot.slane %v2096, 7
    %v2107 = vsel %vm518, %v2106, %v2105
    %v2108 = vrot.slane %v2097, 6
    %v2109 = vsel %vm521, %v2108, %v2107
    %v2110 = vrot.slane %v2098, 5
    %v2111 = vsel %vm524, %v2110, %v2109
    %v2112 = vrot.slane %v2099, 4
    %v2113 = vsel %vm527, %v2112, %v2111
    %v2114 = vpack.c.b16 %v2113, %v2113
    %2116 = vmatpush.bf16.msra.mxu0 %v1607
    %2117 = vmatpush.bf16.msra.mxu0 %v1606
    %2118 = vmatpush.bf16.msra.mxu0 %v1605
    %2119 = vmatpush.bf16.msra.mxu0 %v1604
    %2120 = vmatpush.bf16.msra.mxu0 %v1603
    %2121 = vmatpush.bf16.msra.mxu0 %v1602
    %2122 = vmatpush.bf16.msra.mxu0 %v1601
    %2123 = vmatpush.bf16.msra.mxu0 %v1600
    %2124 = vmatmul.bf16.gmra.mxu0 %v2114
    %v2125 = vpop.f32.mrf.mxu0
    %v2126 = vadd.f32 0.0, %v2125
    %v2127 = vpop.f32.mrf.mxu0
    %2128 = vdwg.mxu0
    %v2130 = vrot.slane %v2126, 4
    %v2131 = vrot.slane %v2126, 5
    %v2132 = vrot.slane %v2126, 6
    %v2133 = vrot.slane %v2126, 7
    %v2134 = vrot.slane %v2126, 1
    %v2135 = vrot.slane %v2126, 2
    %v2136 = vrot.slane %v2126, 3
    %v2145 = vadd.f32 %v1485, %v2130
    %v2146 = vadd.f32 %v1487, %v2131
    %v2147 = vadd.f32 %v1490, %v2132
    %v2148 = vadd.f32 %v1492, %v2133
    %v2149 = vadd.f32 %v1495, %v2126
    %v2150 = vadd.f32 %v1497, %v2134
    %v2151 = vadd.f32 %v1500, %v2135
    %v2152 = vadd.f32 %v1502, %v2136
    %v2153 = vtanh.pop %v2145
    %v2154 = vtanh.pop %v2146
    %v2155 = vtanh.pop %v2147
    %v2156 = vtanh.pop %v2148
    %v2157 = vtanh.pop %v2149
    %v2158 = vtanh.pop %v2150
    %v2159 = vtanh.pop %v2151
    %v2160 = vtanh.pop %v2152
    %v2161 = vpack.c.bf16 %v2153, %v2153
    %v2162 = vpack.c.bf16 %v2154, %v2154
    %v2163 = vpack.c.bf16 %v2155, %v2155
    %v2164 = vpack.c.bf16 %v2156, %v2156
    %v2165 = vpack.c.bf16 %v2157, %v2157
    %v2166 = vpack.c.bf16 %v2158, %v2158
    %v2167 = vpack.c.bf16 %v2159, %v2159
    %v2168 = vpack.c.bf16 %v2160, %v2160
    %v2169 = vld [vmem:[#allocation3] sm:$0x4]
    %v2170 = vsel %vm968, %v2161, %v2169
    %2171 = vst [vmem:[#allocation3] sm:$0x4] %v2170
    %v2172 = vld [vmem:[#allocation3 + $0x4] sm:$0x4]
    %v2173 = vsel %vm968, %v2162, %v2172
    %2174 = vst [vmem:[#allocation3 + $0x4] sm:$0x4] %v2173
    %v2175 = vld [vmem:[#allocation3 + $0x8] sm:$0x4]
    %v2176 = vsel %vm968, %v2163, %v2175
    %2177 = vst [vmem:[#allocation3 + $0x8] sm:$0x4] %v2176
    %v2178 = vld [vmem:[#allocation3 + $0xc] sm:$0x4]
    %v2179 = vsel %vm968, %v2164, %v2178
    %2180 = vst [vmem:[#allocation3 + $0xc] sm:$0x4] %v2179
    %v2181 = vld [vmem:[#allocation3 + $0x10] sm:$0x4]
    %v2182 = vsel %vm968, %v2165, %v2181
    %2183 = vst [vmem:[#allocation3 + $0x10] sm:$0x4] %v2182
    %v2184 = vld [vmem:[#allocation3 + $0x14] sm:$0x4]
    %v2185 = vsel %vm968, %v2166, %v2184
    %2186 = vst [vmem:[#allocation3 + $0x14] sm:$0x4] %v2185
    %v2187 = vld [vmem:[#allocation3 + $0x18] sm:$0x4]
    %v2188 = vsel %vm968, %v2167, %v2187
    %2189 = vst [vmem:[#allocation3 + $0x18] sm:$0x4] %v2188
    %v2190 = vld [vmem:[#allocation3 + $0x1c] sm:$0x4]
    %v2191 = vsel %vm968, %v2168, %v2190
    %2192 = vst [vmem:[#allocation3 + $0x1c] sm:$0x4] %v2191
    %v2201 = vunpack.c.l.b16 %v2161
    %v2202 = vunpack.c.l.b16 %v2162
    %v2203 = vunpack.c.l.b16 %v2163
    %v2204 = vunpack.c.l.b16 %v2164
    %v2205 = vunpack.c.l.b16 %v2165
    %v2206 = vunpack.c.l.b16 %v2166
    %v2207 = vunpack.c.l.b16 %v2167
    %v2208 = vunpack.c.l.b16 %v2168
    %v2209 = vpack.c.b16 %v2201, %v2201
    %v2210 = vpack.c.b16 %v2202, %v2202
    %v2211 = vpack.c.b16 %v2203, %v2203
    %v2212 = vpack.c.b16 %v2204, %v2204
    %v2213 = vpack.c.b16 %v2205, %v2205
    %v2214 = vpack.c.b16 %v2206, %v2206
    %v2215 = vpack.c.b16 %v2207, %v2207
    %v2216 = vpack.c.b16 %v2208, %v2208
    %v2217 = vunpack.c.l.b16 %v2209
    %v2218 = vunpack.c.l.b16 %v2210
    %v2219 = vunpack.c.l.b16 %v2211
    %v2220 = vunpack.c.l.b16 %v2212
    %v2221 = vunpack.c.l.b16 %v2213
    %v2222 = vunpack.c.l.b16 %v2214
    %v2223 = vunpack.c.l.b16 %v2215
    %v2224 = vunpack.c.l.b16 %v2216
    %v2225 = vrot.slane %v2217, 4
    %v2226 = vrot.slane %v2218, 3
    %v2227 = vsel %vm509, %v2226, %v2225
    %v2228 = vrot.slane %v2219, 2
    %v2229 = vsel %vm512, %v2228, %v2227
    %v2230 = vrot.slane %v2220, 1
    %v2231 = vsel %vm515, %v2230, %v2229
    %v2232 = vsel %vm518, %v2221, %v2231
    %v2233 = vrot.slane %v2222, 7
    %v2234 = vsel %vm521, %v2233, %v2232
    %v2235 = vrot.slane %v2223, 6
    %v2236 = vsel %vm524, %v2235, %v2234
    %v2237 = vrot.slane %v2224, 5
    %v2238 = vsel %vm527, %v2237, %v2236
    %v2239 = vpack.c.b16 %v2238, %v2238
    %2241 = vmatpush.bf16.msra.mxu0 %v1607
    %2242 = vmatpush.bf16.msra.mxu0 %v1606
    %2243 = vmatpush.bf16.msra.mxu0 %v1605
    %2244 = vmatpush.bf16.msra.mxu0 %v1604
    %2245 = vmatpush.bf16.msra.mxu0 %v1603
    %2246 = vmatpush.bf16.msra.mxu0 %v1602
    %2247 = vmatpush.bf16.msra.mxu0 %v1601
    %2248 = vmatpush.bf16.msra.mxu0 %v1600
    %2249 = vmatmul.bf16.gmra.mxu0 %v2239
    %v2250 = vpop.f32.mrf.mxu0
    %v2251 = vadd.f32 0.0, %v2250
    %v2252 = vpop.f32.mrf.mxu0
    %2253 = vdwg.mxu0
    %v2255 = vrot.slane %v2251, 3
    %v2256 = vrot.slane %v2251, 4
    %v2257 = vrot.slane %v2251, 5
    %v2258 = vrot.slane %v2251, 6
    %v2259 = vrot.slane %v2251, 7
    %v2260 = vrot.slane %v2251, 1
    %v2261 = vrot.slane %v2251, 2
    %v2270 = vadd.f32 %v1485, %v2255
    %v2271 = vadd.f32 %v1487, %v2256
    %v2272 = vadd.f32 %v1490, %v2257
    %v2273 = vadd.f32 %v1492, %v2258
    %v2274 = vadd.f32 %v1495, %v2259
    %v2275 = vadd.f32 %v1497, %v2251
    %v2276 = vadd.f32 %v1500, %v2260
    %v2277 = vadd.f32 %v1502, %v2261
    %v2278 = vtanh.pop %v2270
    %v2279 = vtanh.pop %v2271
    %v2280 = vtanh.pop %v2272
    %v2281 = vtanh.pop %v2273
    %v2282 = vtanh.pop %v2274
    %v2283 = vtanh.pop %v2275
    %v2284 = vtanh.pop %v2276
    %v2285 = vtanh.pop %v2277
    %v2286 = vpack.c.bf16 %v2278, %v2278
    %v2287 = vpack.c.bf16 %v2279, %v2279
    %v2288 = vpack.c.bf16 %v2280, %v2280
    %v2289 = vpack.c.bf16 %v2281, %v2281
    %v2290 = vpack.c.bf16 %v2282, %v2282
    %v2291 = vpack.c.bf16 %v2283, %v2283
    %v2292 = vpack.c.bf16 %v2284, %v2284
    %v2293 = vpack.c.bf16 %v2285, %v2285
    %v2294 = vld [vmem:[#allocation3] sm:$0x4]
    %v2295 = vsel %vm1095, %v2286, %v2294
    %2296 = vst [vmem:[#allocation3] sm:$0x4] %v2295
    %v2297 = vld [vmem:[#allocation3 + $0x4] sm:$0x4]
    %v2298 = vsel %vm1095, %v2287, %v2297
    %2299 = vst [vmem:[#allocation3 + $0x4] sm:$0x4] %v2298
    %v2300 = vld [vmem:[#allocation3 + $0x8] sm:$0x4]
    %v2301 = vsel %vm1095, %v2288, %v2300
    %2302 = vst [vmem:[#allocation3 + $0x8] sm:$0x4] %v2301
    %v2303 = vld [vmem:[#allocation3 + $0xc] sm:$0x4]
    %v2304 = vsel %vm1095, %v2289, %v2303
    %2305 = vst [vmem:[#allocation3 + $0xc] sm:$0x4] %v2304
    %v2306 = vld [vmem:[#allocation3 + $0x10] sm:$0x4]
    %v2307 = vsel %vm1095, %v2290, %v2306
    %2308 = vst [vmem:[#allocation3 + $0x10] sm:$0x4] %v2307
    %v2309 = vld [vmem:[#allocation3 + $0x14] sm:$0x4]
    %v2310 = vsel %vm1095, %v2291, %v2309
    %2311 = vst [vmem:[#allocation3 + $0x14] sm:$0x4] %v2310
    %v2312 = vld [vmem:[#allocation3 + $0x18] sm:$0x4]
    %v2313 = vsel %vm1095, %v2292, %v2312
    %2314 = vst [vmem:[#allocation3 + $0x18] sm:$0x4] %v2313
    %v2315 = vld [vmem:[#allocation3 + $0x1c] sm:$0x4]
    %v2316 = vsel %vm1095, %v2293, %v2315
    %2317 = vst [vmem:[#allocation3 + $0x1c] sm:$0x4] %v2316
    %v2326 = vunpack.c.l.b16 %v2286
    %v2327 = vunpack.c.l.b16 %v2287
    %v2328 = vunpack.c.l.b16 %v2288
    %v2329 = vunpack.c.l.b16 %v2289
    %v2330 = vunpack.c.l.b16 %v2290
    %v2331 = vunpack.c.l.b16 %v2291
    %v2332 = vunpack.c.l.b16 %v2292
    %v2333 = vunpack.c.l.b16 %v2293
    %v2334 = vpack.c.b16 %v2326, %v2326
    %v2335 = vpack.c.b16 %v2327, %v2327
    %v2336 = vpack.c.b16 %v2328, %v2328
    %v2337 = vpack.c.b16 %v2329, %v2329
    %v2338 = vpack.c.b16 %v2330, %v2330
    %v2339 = vpack.c.b16 %v2331, %v2331
    %v2340 = vpack.c.b16 %v2332, %v2332
    %v2341 = vpack.c.b16 %v2333, %v2333
    %v2342 = vunpack.c.l.b16 %v2334
    %v2343 = vunpack.c.l.b16 %v2335
    %v2344 = vunpack.c.l.b16 %v2336
    %v2345 = vunpack.c.l.b16 %v2337
    %v2346 = vunpack.c.l.b16 %v2338
    %v2347 = vunpack.c.l.b16 %v2339
    %v2348 = vunpack.c.l.b16 %v2340
    %v2349 = vunpack.c.l.b16 %v2341
    %v2350 = vrot.slane %v2342, 5
    %v2351 = vrot.slane %v2343, 4
    %v2352 = vsel %vm509, %v2351, %v2350
    %v2353 = vrot.slane %v2344, 3
    %v2354 = vsel %vm512, %v2353, %v2352
    %v2355 = vrot.slane %v2345, 2
    %v2356 = vsel %vm515, %v2355, %v2354
    %v2357 = vrot.slane %v2346, 1
    %v2358 = vsel %vm518, %v2357, %v2356
    %v2359 = vsel %vm521, %v2347, %v2358
    %v2360 = vrot.slane %v2348, 7
    %v2361 = vsel %vm524, %v2360, %v2359
    %v2362 = vrot.slane %v2349, 6
    %v2363 = vsel %vm527, %v2362, %v2361
    %v2364 = vpack.c.b16 %v2363, %v2363
    %2366 = vmatpush.bf16.msra.mxu0 %v1607
    %2367 = vmatpush.bf16.msra.mxu0 %v1606
    %2368 = vmatpush.bf16.msra.mxu0 %v1605
    %2369 = vmatpush.bf16.msra.mxu0 %v1604
    %2370 = vmatpush.bf16.msra.mxu0 %v1603
    %2371 = vmatpush.bf16.msra.mxu0 %v1602
    %2372 = vmatpush.bf16.msra.mxu0 %v1601
    %2373 = vmatpush.bf16.msra.mxu0 %v1600
    %2374 = vmatmul.bf16.gmra.mxu0 %v2364
    %v2375 = vpop.f32.mrf.mxu0
    %v2376 = vadd.f32 0.0, %v2375
    %v2377 = vpop.f32.mrf.mxu0
    %2378 = vdwg.mxu0
    %v2380 = vrot.slane %v2376, 2
    %v2381 = vrot.slane %v2376, 3
    %v2382 = vrot.slane %v2376, 4
    %v2383 = vrot.slane %v2376, 5
    %v2384 = vrot.slane %v2376, 6
    %v2385 = vrot.slane %v2376, 7
    %v2386 = vrot.slane %v2376, 1
    %v2395 = vadd.f32 %v1485, %v2380
    %v2396 = vadd.f32 %v1487, %v2381
    %v2397 = vadd.f32 %v1490, %v2382
    %v2398 = vadd.f32 %v1492, %v2383
    %v2399 = vadd.f32 %v1495, %v2384
    %v2400 = vadd.f32 %v1497, %v2385
    %v2401 = vadd.f32 %v1500, %v2376
    %v2402 = vadd.f32 %v1502, %v2386
    %v2403 = vtanh.pop %v2395
    %v2404 = vtanh.pop %v2396
    %v2405 = vtanh.pop %v2397
    %v2406 = vtanh.pop %v2398
    %v2407 = vtanh.pop %v2399
    %v2408 = vtanh.pop %v2400
    %v2409 = vtanh.pop %v2401
    %v2410 = vtanh.pop %v2402
    %v2411 = vpack.c.bf16 %v2403, %v2403
    %v2412 = vpack.c.bf16 %v2404, %v2404
    %v2413 = vpack.c.bf16 %v2405, %v2405
    %v2414 = vpack.c.bf16 %v2406, %v2406
    %v2415 = vpack.c.bf16 %v2407, %v2407
    %v2416 = vpack.c.bf16 %v2408, %v2408
    %v2417 = vpack.c.bf16 %v2409, %v2409
    %v2418 = vpack.c.bf16 %v2410, %v2410
    %v2419 = vld [vmem:[#allocation3] sm:$0x8]
    %v2420 = vsel %vm1223, %v2411, %v2419
    %2421 = vst [vmem:[#allocation3] sm:$0x8] %v2420
    %v2422 = vld [vmem:[#allocation3 + $0x4] sm:$0x8]
    %v2423 = vsel %vm1223, %v2412, %v2422
    %2424 = vst [vmem:[#allocation3 + $0x4] sm:$0x8] %v2423
    %v2425 = vld [vmem:[#allocation3 + $0x8] sm:$0x8]
    %v2426 = vsel %vm1223, %v2413, %v2425
    %2427 = vst [vmem:[#allocation3 + $0x8] sm:$0x8] %v2426
    %v2428 = vld [vmem:[#allocation3 + $0xc] sm:$0x8]
    %v2429 = vsel %vm1223, %v2414, %v2428
    %2430 = vst [vmem:[#allocation3 + $0xc] sm:$0x8] %v2429
    %v2431 = vld [vmem:[#allocation3 + $0x10] sm:$0x8]
    %v2432 = vsel %vm1223, %v2415, %v2431
    %2433 = vst [vmem:[#allocation3 + $0x10] sm:$0x8] %v2432
    %v2434 = vld [vmem:[#allocation3 + $0x14] sm:$0x8]
    %v2435 = vsel %vm1223, %v2416, %v2434
    %2436 = vst [vmem:[#allocation3 + $0x14] sm:$0x8] %v2435
    %v2437 = vld [vmem:[#allocation3 + $0x18] sm:$0x8]
    %v2438 = vsel %vm1223, %v2417, %v2437
    %2439 = vst [vmem:[#allocation3 + $0x18] sm:$0x8] %v2438
    %v2440 = vld [vmem:[#allocation3 + $0x1c] sm:$0x8]
    %v2441 = vsel %vm1223, %v2418, %v2440
    %2442 = vst [vmem:[#allocation3 + $0x1c] sm:$0x8] %v2441
    %v2443 = vld [vmem:[#allocation3] sm:$0xf]
    %v2444 = vld [vmem:[#allocation3 + $0x4] sm:$0xf]
    %v2445 = vld [vmem:[#allocation3 + $0x8] sm:$0xf]
    %v2446 = vld [vmem:[#allocation3 + $0xc] sm:$0xf]
    %v2447 = vld [vmem:[#allocation3 + $0x10] sm:$0xf]
    %v2448 = vld [vmem:[#allocation3 + $0x14] sm:$0xf]
    %v2449 = vld [vmem:[#allocation3 + $0x18] sm:$0xf]
    %v2450 = vld [vmem:[#allocation3 + $0x1c] sm:$0xf]
    %v2451 = vld [vmem:[#allocation2] sm:$0xf]
    %v2452 = vld [vmem:[#allocation2 + $0x4] sm:$0xf]
    %v2453 = vld [vmem:[#allocation2 + $0x8] sm:$0xf]
    %v2454 = vld [vmem:[#allocation2 + $0xc] sm:$0xf]
    %v2455 = vld [vmem:[#allocation2 + $0x10] sm:$0xf]
    %v2456 = vld [vmem:[#allocation2 + $0x14] sm:$0xf]
    %v2457 = vld [vmem:[#allocation2 + $0x18] sm:$0xf]
    %v2458 = vld [vmem:[#allocation2 + $0x1c] sm:$0xf]
    %v2459 = vld [vmem:[#allocation2 + $0x20] sm:$0xf]
    %v2460 = vld [vmem:[#allocation2 + $0x24] sm:$0xf]
    %v2461 = vld [vmem:[#allocation2 + $0x28] sm:$0xf]
    %v2462 = vld [vmem:[#allocation2 + $0x2c] sm:$0xf]
    %v2463 = vld [vmem:[#allocation2 + $0x30] sm:$0xf]
    %v2464 = vld [vmem:[#allocation2 + $0x34] sm:$0xf]
    %v2465 = vld [vmem:[#allocation2 + $0x38] sm:$0xf]
    %v2466 = vld [vmem:[#allocation2 + $0x3c] sm:$0xf]
    %v2467 = vld [vmem:[#allocation2 + $0x40] sm:$0xf]
    %v2468 = vld [vmem:[#allocation2 + $0x44] sm:$0xf]
    %v2469 = vld [vmem:[#allocation2 + $0x48] sm:$0xf]
    %v2470 = vld [vmem:[#allocation2 + $0x4c] sm:$0xf]
    %v2471 = vld [vmem:[#allocation2 + $0x50] sm:$0xf]
    %v2472 = vld [vmem:[#allocation2 + $0x54] sm:$0xf]
    %v2473 = vld [vmem:[#allocation2 + $0x58] sm:$0xf]
    %v2474 = vld [vmem:[#allocation2 + $0x5c] sm:$0xf]
    %v2475 = vld [vmem:[#allocation2 + $0x60] sm:$0xf]
    %v2476 = vld [vmem:[#allocation2 + $0x64] sm:$0xf]
    %v2477 = vld [vmem:[#allocation2 + $0x68] sm:$0xf]
    %v2478 = vld [vmem:[#allocation2 + $0x6c] sm:$0xf]
    %v2479 = vld [vmem:[#allocation2 + $0x70] sm:$0xf]
    %v2480 = vld [vmem:[#allocation2 + $0x74] sm:$0xf]
    %v2481 = vld [vmem:[#allocation2 + $0x78] sm:$0xf]
    %v2482 = vld [vmem:[#allocation2 + $0x7c] sm:$0xf]
    %v2483 = vld [vmem:[#allocation2 + $0x80] sm:$0xf]
    %v2484 = vld [vmem:[#allocation2 + $0x84] sm:$0xf]
    %v2485 = vld [vmem:[#allocation2 + $0x88] sm:$0xf]
    %v2486 = vld [vmem:[#allocation2 + $0x8c] sm:$0xf]
    %v2487 = vld [vmem:[#allocation2 + $0x90] sm:$0xf]
    %v2488 = vld [vmem:[#allocation2 + $0x94] sm:$0xf]
    %v2489 = vld [vmem:[#allocation2 + $0x98] sm:$0xf]
    %v2490 = vld [vmem:[#allocation2 + $0x9c] sm:$0xf]
    %v2491 = vld [vmem:[#allocation2 + $0xa0] sm:$0xf]
    %v2492 = vld [vmem:[#allocation2 + $0xa4] sm:$0xf]
    %v2493 = vld [vmem:[#allocation2 + $0xa8] sm:$0xf]
    %v2494 = vld [vmem:[#allocation2 + $0xac] sm:$0xf]
    %v2495 = vld [vmem:[#allocation2 + $0xb0] sm:$0xf]
    %v2496 = vld [vmem:[#allocation2 + $0xb4] sm:$0xf]
    %v2497 = vld [vmem:[#allocation2 + $0xb8] sm:$0xf]
    %v2498 = vld [vmem:[#allocation2 + $0xbc] sm:$0xf]
    %v2499 = vld [vmem:[#allocation2 + $0xc0] sm:$0xf]
    %v2500 = vld [vmem:[#allocation2 + $0xc4] sm:$0xf]
    %v2501 = vld [vmem:[#allocation2 + $0xc8] sm:$0xf]
    %v2502 = vld [vmem:[#allocation2 + $0xcc] sm:$0xf]
    %v2503 = vld [vmem:[#allocation2 + $0xd0] sm:$0xf]
    %v2504 = vld [vmem:[#allocation2 + $0xd4] sm:$0xf]
    %v2505 = vld [vmem:[#allocation2 + $0xd8] sm:$0xf]
    %v2506 = vld [vmem:[#allocation2 + $0xdc] sm:$0xf]
    %v2507 = vld [vmem:[#allocation2 + $0xe0] sm:$0xf]
    %v2508 = vld [vmem:[#allocation2 + $0xe4] sm:$0xf]
    %v2509 = vld [vmem:[#allocation2 + $0xe8] sm:$0xf]
    %v2510 = vld [vmem:[#allocation2 + $0xec] sm:$0xf]
    %v2511 = vld [vmem:[#allocation2 + $0xf0] sm:$0xf]
    %v2512 = vld [vmem:[#allocation2 + $0xf4] sm:$0xf]
    %v2513 = vld [vmem:[#allocation2 + $0xf8] sm:$0xf]
    %v2514 = vld [vmem:[#allocation2 + $0xfc] sm:$0xf]
    %v2515 = vld [vmem:[#allocation2 + $0x100] sm:$0xf]
    %v2516 = vld [vmem:[#allocation2 + $0x104] sm:$0xf]
    %v2517 = vld [vmem:[#allocation2 + $0x108] sm:$0xf]
    %v2518 = vld [vmem:[#allocation2 + $0x10c] sm:$0xf]
    %v2519 = vld [vmem:[#allocation2 + $0x110] sm:$0xf]
    %v2520 = vld [vmem:[#allocation2 + $0x114] sm:$0xf]
    %v2521 = vld [vmem:[#allocation2 + $0x118] sm:$0xf]
    %v2522 = vld [vmem:[#allocation2 + $0x11c] sm:$0xf]
    %v2523 = vld [vmem:[#allocation2 + $0x120] sm:$0xf]
    %v2524 = vld [vmem:[#allocation2 + $0x124] sm:$0xf]
    %v2525 = vld [vmem:[#allocation2 + $0x128] sm:$0xf]
    %v2526 = vld [vmem:[#allocation2 + $0x12c] sm:$0xf]
    %v2527 = vld [vmem:[#allocation2 + $0x130] sm:$0xf]
    %v2528 = vld [vmem:[#allocation2 + $0x134] sm:$0xf]
    %v2529 = vld [vmem:[#allocation2 + $0x138] sm:$0xf]
    %v2530 = vld [vmem:[#allocation2 + $0x13c] sm:$0xf]
    %v2531 = vld [vmem:[#allocation2 + $0x140] sm:$0xf]
    %v2532 = vld [vmem:[#allocation2 + $0x144] sm:$0xf]
    %v2533 = vld [vmem:[#allocation2 + $0x148] sm:$0xf]
    %v2534 = vld [vmem:[#allocation2 + $0x14c] sm:$0xf]
    %v2535 = vld [vmem:[#allocation2 + $0x150] sm:$0xf]
    %v2536 = vld [vmem:[#allocation2 + $0x154] sm:$0xf]
    %v2537 = vld [vmem:[#allocation2 + $0x158] sm:$0xf]
    %v2538 = vld [vmem:[#allocation2 + $0x15c] sm:$0xf]
    %v2539 = vld [vmem:[#allocation2 + $0x160] sm:$0xf]
    %v2540 = vld [vmem:[#allocation2 + $0x164] sm:$0xf]
    %v2541 = vld [vmem:[#allocation2 + $0x168] sm:$0xf]
    %v2542 = vld [vmem:[#allocation2 + $0x16c] sm:$0xf]
    %v2543 = vld [vmem:[#allocation2 + $0x170] sm:$0xf]
    %v2544 = vld [vmem:[#allocation2 + $0x174] sm:$0xf]
    %v2545 = vld [vmem:[#allocation2 + $0x178] sm:$0xf]
    %v2546 = vld [vmem:[#allocation2 + $0x17c] sm:$0xf]
    %v2547 = vld [vmem:[#allocation2 + $0x180] sm:$0xf]
    %v2548 = vld [vmem:[#allocation2 + $0x184] sm:$0xf]
    %v2549 = vld [vmem:[#allocation2 + $0x188] sm:$0xf]
    %v2550 = vld [vmem:[#allocation2 + $0x18c] sm:$0xf]
    %v2551 = vld [vmem:[#allocation2 + $0x190] sm:$0xf]
    %v2552 = vld [vmem:[#allocation2 + $0x194] sm:$0xf]
    %v2553 = vld [vmem:[#allocation2 + $0x198] sm:$0xf]
    %v2554 = vld [vmem:[#allocation2 + $0x19c] sm:$0xf]
    %v2555 = vld [vmem:[#allocation2 + $0x1a0] sm:$0xf]
    %v2556 = vld [vmem:[#allocation2 + $0x1a4] sm:$0xf]
    %v2557 = vld [vmem:[#allocation2 + $0x1a8] sm:$0xf]
    %v2558 = vld [vmem:[#allocation2 + $0x1ac] sm:$0xf]
    %v2559 = vld [vmem:[#allocation2 + $0x1b0] sm:$0xf]
    %v2560 = vld [vmem:[#allocation2 + $0x1b4] sm:$0xf]
    %v2561 = vld [vmem:[#allocation2 + $0x1b8] sm:$0xf]
    %v2562 = vld [vmem:[#allocation2 + $0x1bc] sm:$0xf]
    %v2563 = vld [vmem:[#allocation2 + $0x1c0] sm:$0xf]
    %v2564 = vld [vmem:[#allocation2 + $0x1c4] sm:$0xf]
    %v2565 = vld [vmem:[#allocation2 + $0x1c8] sm:$0xf]
    %v2566 = vld [vmem:[#allocation2 + $0x1cc] sm:$0xf]
    %v2567 = vld [vmem:[#allocation2 + $0x1d0] sm:$0xf]
    %v2568 = vld [vmem:[#allocation2 + $0x1d4] sm:$0xf]
    %v2569 = vld [vmem:[#allocation2 + $0x1d8] sm:$0xf]
    %v2570 = vld [vmem:[#allocation2 + $0x1dc] sm:$0xf]
    %v2571 = vld [vmem:[#allocation2 + $0x1e0] sm:$0xf]
    %v2572 = vld [vmem:[#allocation2 + $0x1e4] sm:$0xf]
    %v2573 = vld [vmem:[#allocation2 + $0x1e8] sm:$0xf]
    %v2574 = vld [vmem:[#allocation2 + $0x1ec] sm:$0xf]
    %v2575 = vld [vmem:[#allocation2 + $0x1f0] sm:$0xf]
    %v2576 = vld [vmem:[#allocation2 + $0x1f4] sm:$0xf]
    %v2577 = vld [vmem:[#allocation2 + $0x1f8] sm:$0xf]
    %v2578 = vld [vmem:[#allocation2 + $0x1fc] sm:$0xf]
    %v2579 = vld [vmem:[%s2] sm:$0xff]
    %v2581 = vrot.slane %v2579, 1
    %v2582 = vrot.slane %v2579, 2
    %v2583 = vrot.slane %v2579, 3
    %v2584 = vrot.slane %v2579, 4
    %v2585 = vrot.slane %v2579, 5
    %v2586 = vrot.slane %v2579, 6
    %v2587 = vrot.slane %v2579, 7
    %v2588 = vperm.slane %v2579, 0
    %v2589 = vperm.slane %v2581, 0
    %v2590 = vperm.slane %v2582, 0
    %v2591 = vperm.slane %v2583, 0
    %v2592 = vperm.slane %v2584, 0
    %v2593 = vperm.slane %v2585, 0
    %v2594 = vperm.slane %v2586, 0
    %v2595 = vperm.slane %v2587, 0
    %v2620 = vunpack.c.l.b16 %v2451
    %v2621 = vunpack.c.l.b16 %v2452
    %v2622 = vunpack.c.l.b16 %v2453
    %v2623 = vunpack.c.l.b16 %v2454
    %v2624 = vunpack.c.l.b16 %v2455
    %v2625 = vunpack.c.l.b16 %v2456
    %v2626 = vunpack.c.l.b16 %v2457
    %v2627 = vunpack.c.l.b16 %v2458
    %v2628 = vunpack.c.l.b16 %v2459
    %v2629 = vunpack.c.l.b16 %v2460
    %v2630 = vunpack.c.l.b16 %v2461
    %v2631 = vunpack.c.l.b16 %v2462
    %v2632 = vunpack.c.l.b16 %v2463
    %v2633 = vunpack.c.l.b16 %v2464
    %v2634 = vunpack.c.l.b16 %v2465
    %v2635 = vunpack.c.l.b16 %v2466
    %v2636 = vpack.c.b16 %v2621, %v2620
    %v2637 = vpack.c.b16 %v2623, %v2622
    %v2638 = vpack.c.b16 %v2625, %v2624
    %v2639 = vpack.c.b16 %v2627, %v2626
    %v2640 = vpack.c.b16 %v2629, %v2628
    %v2641 = vpack.c.b16 %v2631, %v2630
    %v2642 = vpack.c.b16 %v2633, %v2632
    %v2643 = vpack.c.b16 %v2635, %v2634
    %2652 = vmatpush.bf16.xpose.msra.mxu0 %v2643
    %2653 = vmatpush.bf16.xpose.msra.mxu0 %v2642
    %2654 = vmatpush.bf16.xpose.msra.mxu0 %v2641
    %2655 = vmatpush.bf16.xpose.msra.mxu0 %v2640
    %2656 = vmatpush.bf16.xpose.msra.mxu0 %v2639
    %2657 = vmatpush.bf16.xpose.msra.mxu0 %v2638
    %2658 = vmatpush.bf16.xpose.msra.mxu0 %v2637
    %2659 = vmatpush.bf16.xpose.msra.mxu0 %v2636
    %2660 = vmatmul.bf16.gmra.mxu0 %v2443
    %v2661 = vpop.f32.mrf.mxu0
    %v2662 = vadd.f32 %v2588, %v2661
    %v2663 = vpop.f32.mrf.mxu0
    %2664 = vdwg.mxu0
    %v2681 = vunpack.c.l.b16 %v2467
    %v2682 = vunpack.c.l.b16 %v2468
    %v2683 = vunpack.c.l.b16 %v2469
    %v2684 = vunpack.c.l.b16 %v2470
    %v2685 = vunpack.c.l.b16 %v2471
    %v2686 = vunpack.c.l.b16 %v2472
    %v2687 = vunpack.c.l.b16 %v2473
    %v2688 = vunpack.c.l.b16 %v2474
    %v2689 = vunpack.c.l.b16 %v2475
    %v2690 = vunpack.c.l.b16 %v2476
    %v2691 = vunpack.c.l.b16 %v2477
    %v2692 = vunpack.c.l.b16 %v2478
    %v2693 = vunpack.c.l.b16 %v2479
    %v2694 = vunpack.c.l.b16 %v2480
    %v2695 = vunpack.c.l.b16 %v2481
    %v2696 = vunpack.c.l.b16 %v2482
    %v2697 = vpack.c.b16 %v2682, %v2681
    %v2698 = vpack.c.b16 %v2684, %v2683
    %v2699 = vpack.c.b16 %v2686, %v2685
    %v2700 = vpack.c.b16 %v2688, %v2687
    %v2701 = vpack.c.b16 %v2690, %v2689
    %v2702 = vpack.c.b16 %v2692, %v2691
    %v2703 = vpack.c.b16 %v2694, %v2693
    %v2704 = vpack.c.b16 %v2696, %v2695
    %2713 = vmatpush.bf16.xpose.msra.mxu0 %v2704
    %2714 = vmatpush.bf16.xpose.msra.mxu0 %v2703
    %2715 = vmatpush.bf16.xpose.msra.mxu0 %v2702
    %2716 = vmatpush.bf16.xpose.msra.mxu0 %v2701
    %2717 = vmatpush.bf16.xpose.msra.mxu0 %v2700
    %2718 = vmatpush.bf16.xpose.msra.mxu0 %v2699
    %2719 = vmatpush.bf16.xpose.msra.mxu0 %v2698
    %2720 = vmatpush.bf16.xpose.msra.mxu0 %v2697
    %2721 = vmatmul.bf16.gmra.mxu0 %v2444
    %v2722 = vpop.f32.mrf.mxu0
    %v2723 = vadd.f32 %v2589, %v2722
    %v2724 = vpop.f32.mrf.mxu0
    %2725 = vdwg.mxu0
    %v2742 = vunpack.c.l.b16 %v2483
    %v2743 = vunpack.c.l.b16 %v2484
    %v2744 = vunpack.c.l.b16 %v2485
    %v2745 = vunpack.c.l.b16 %v2486
    %v2746 = vunpack.c.l.b16 %v2487
    %v2747 = vunpack.c.l.b16 %v2488
    %v2748 = vunpack.c.l.b16 %v2489
    %v2749 = vunpack.c.l.b16 %v2490
    %v2750 = vunpack.c.l.b16 %v2491
    %v2751 = vunpack.c.l.b16 %v2492
    %v2752 = vunpack.c.l.b16 %v2493
    %v2753 = vunpack.c.l.b16 %v2494
    %v2754 = vunpack.c.l.b16 %v2495
    %v2755 = vunpack.c.l.b16 %v2496
    %v2756 = vunpack.c.l.b16 %v2497
    %v2757 = vunpack.c.l.b16 %v2498
    %v2758 = vpack.c.b16 %v2743, %v2742
    %v2759 = vpack.c.b16 %v2745, %v2744
    %v2760 = vpack.c.b16 %v2747, %v2746
    %v2761 = vpack.c.b16 %v2749, %v2748
    %v2762 = vpack.c.b16 %v2751, %v2750
    %v2763 = vpack.c.b16 %v2753, %v2752
    %v2764 = vpack.c.b16 %v2755, %v2754
    %v2765 = vpack.c.b16 %v2757, %v2756
    %2774 = vmatpush.bf16.xpose.msra.mxu0 %v2765
    %2775 = vmatpush.bf16.xpose.msra.mxu0 %v2764
    %2776 = vmatpush.bf16.xpose.msra.mxu0 %v2763
    %2777 = vmatpush.bf16.xpose.msra.mxu0 %v2762
    %2778 = vmatpush.bf16.xpose.msra.mxu0 %v2761
    %2779 = vmatpush.bf16.xpose.msra.mxu0 %v2760
    %2780 = vmatpush.bf16.xpose.msra.mxu0 %v2759
    %2781 = vmatpush.bf16.xpose.msra.mxu0 %v2758
    %2782 = vmatmul.bf16.gmra.mxu0 %v2445
    %v2783 = vpop.f32.mrf.mxu0
    %v2784 = vadd.f32 %v2590, %v2783
    %v2785 = vpop.f32.mrf.mxu0
    %2786 = vdwg.mxu0
    %v2803 = vunpack.c.l.b16 %v2499
    %v2804 = vunpack.c.l.b16 %v2500
    %v2805 = vunpack.c.l.b16 %v2501
    %v2806 = vunpack.c.l.b16 %v2502
    %v2807 = vunpack.c.l.b16 %v2503
    %v2808 = vunpack.c.l.b16 %v2504
    %v2809 = vunpack.c.l.b16 %v2505
    %v2810 = vunpack.c.l.b16 %v2506
    %v2811 = vunpack.c.l.b16 %v2507
    %v2812 = vunpack.c.l.b16 %v2508
    %v2813 = vunpack.c.l.b16 %v2509
    %v2814 = vunpack.c.l.b16 %v2510
    %v2815 = vunpack.c.l.b16 %v2511
    %v2816 = vunpack.c.l.b16 %v2512
    %v2817 = vunpack.c.l.b16 %v2513
    %v2818 = vunpack.c.l.b16 %v2514
    %v2819 = vpack.c.b16 %v2804, %v2803
    %v2820 = vpack.c.b16 %v2806, %v2805
    %v2821 = vpack.c.b16 %v2808, %v2807
    %v2822 = vpack.c.b16 %v2810, %v2809
    %v2823 = vpack.c.b16 %v2812, %v2811
    %v2824 = vpack.c.b16 %v2814, %v2813
    %v2825 = vpack.c.b16 %v2816, %v2815
    %v2826 = vpack.c.b16 %v2818, %v2817
    %2835 = vmatpush.bf16.xpose.msra.mxu0 %v2826
    %2836 = vmatpush.bf16.xpose.msra.mxu0 %v2825
    %2837 = vmatpush.bf16.xpose.msra.mxu0 %v2824
    %2838 = vmatpush.bf16.xpose.msra.mxu0 %v2823
    %2839 = vmatpush.bf16.xpose.msra.mxu0 %v2822
    %2840 = vmatpush.bf16.xpose.msra.mxu0 %v2821
    %2841 = vmatpush.bf16.xpose.msra.mxu0 %v2820
    %2842 = vmatpush.bf16.xpose.msra.mxu0 %v2819
    %2843 = vmatmul.bf16.gmra.mxu0 %v2446
    %v2844 = vpop.f32.mrf.mxu0
    %v2845 = vadd.f32 %v2591, %v2844
    %v2846 = vpop.f32.mrf.mxu0
    %2847 = vdwg.mxu0
    %v2864 = vunpack.c.l.b16 %v2515
    %v2865 = vunpack.c.l.b16 %v2516
    %v2866 = vunpack.c.l.b16 %v2517
    %v2867 = vunpack.c.l.b16 %v2518
    %v2868 = vunpack.c.l.b16 %v2519
    %v2869 = vunpack.c.l.b16 %v2520
    %v2870 = vunpack.c.l.b16 %v2521
    %v2871 = vunpack.c.l.b16 %v2522
    %v2872 = vunpack.c.l.b16 %v2523
    %v2873 = vunpack.c.l.b16 %v2524
    %v2874 = vunpack.c.l.b16 %v2525
    %v2875 = vunpack.c.l.b16 %v2526
    %v2876 = vunpack.c.l.b16 %v2527
    %v2877 = vunpack.c.l.b16 %v2528
    %v2878 = vunpack.c.l.b16 %v2529
    %v2879 = vunpack.c.l.b16 %v2530
    %v2880 = vpack.c.b16 %v2865, %v2864
    %v2881 = vpack.c.b16 %v2867, %v2866
    %v2882 = vpack.c.b16 %v2869, %v2868
    %v2883 = vpack.c.b16 %v2871, %v2870
    %v2884 = vpack.c.b16 %v2873, %v2872
    %v2885 = vpack.c.b16 %v2875, %v2874
    %v2886 = vpack.c.b16 %v2877, %v2876
    %v2887 = vpack.c.b16 %v2879, %v2878
    %2896 = vmatpush.bf16.xpose.msra.mxu0 %v2887
    %2897 = vmatpush.bf16.xpose.msra.mxu0 %v2886
    %2898 = vmatpush.bf16.xpose.msra.mxu0 %v2885
    %2899 = vmatpush.bf16.xpose.msra.mxu0 %v2884
    %2900 = vmatpush.bf16.xpose.msra.mxu0 %v2883
    %2901 = vmatpush.bf16.xpose.msra.mxu0 %v2882
    %2902 = vmatpush.bf16.xpose.msra.mxu0 %v2881
    %2903 = vmatpush.bf16.xpose.msra.mxu0 %v2880
    %2904 = vmatmul.bf16.gmra.mxu0 %v2447
    %v2905 = vpop.f32.mrf.mxu0
    %v2906 = vadd.f32 %v2592, %v2905
    %v2907 = vpop.f32.mrf.mxu0
    %2908 = vdwg.mxu0
    %v2925 = vunpack.c.l.b16 %v2531
    %v2926 = vunpack.c.l.b16 %v2532
    %v2927 = vunpack.c.l.b16 %v2533
    %v2928 = vunpack.c.l.b16 %v2534
    %v2929 = vunpack.c.l.b16 %v2535
    %v2930 = vunpack.c.l.b16 %v2536
    %v2931 = vunpack.c.l.b16 %v2537
    %v2932 = vunpack.c.l.b16 %v2538
    %v2933 = vunpack.c.l.b16 %v2539
    %v2934 = vunpack.c.l.b16 %v2540
    %v2935 = vunpack.c.l.b16 %v2541
    %v2936 = vunpack.c.l.b16 %v2542
    %v2937 = vunpack.c.l.b16 %v2543
    %v2938 = vunpack.c.l.b16 %v2544
    %v2939 = vunpack.c.l.b16 %v2545
    %v2940 = vunpack.c.l.b16 %v2546
    %v2941 = vpack.c.b16 %v2926, %v2925
    %v2942 = vpack.c.b16 %v2928, %v2927
    %v2943 = vpack.c.b16 %v2930, %v2929
    %v2944 = vpack.c.b16 %v2932, %v2931
    %v2945 = vpack.c.b16 %v2934, %v2933
    %v2946 = vpack.c.b16 %v2936, %v2935
    %v2947 = vpack.c.b16 %v2938, %v2937
    %v2948 = vpack.c.b16 %v2940, %v2939
    %2957 = vmatpush.bf16.xpose.msra.mxu0 %v2948
    %2958 = vmatpush.bf16.xpose.msra.mxu0 %v2947
    %2959 = vmatpush.bf16.xpose.msra.mxu0 %v2946
    %2960 = vmatpush.bf16.xpose.msra.mxu0 %v2945
    %2961 = vmatpush.bf16.xpose.msra.mxu0 %v2944
    %2962 = vmatpush.bf16.xpose.msra.mxu0 %v2943
    %2963 = vmatpush.bf16.xpose.msra.mxu0 %v2942
    %2964 = vmatpush.bf16.xpose.msra.mxu0 %v2941
    %2965 = vmatmul.bf16.gmra.mxu0 %v2448
    %v2966 = vpop.f32.mrf.mxu0
    %v2967 = vadd.f32 %v2593, %v2966
    %v2968 = vpop.f32.mrf.mxu0
    %2969 = vdwg.mxu0
    %v2986 = vunpack.c.l.b16 %v2547
    %v2987 = vunpack.c.l.b16 %v2548
    %v2988 = vunpack.c.l.b16 %v2549
    %v2989 = vunpack.c.l.b16 %v2550
    %v2990 = vunpack.c.l.b16 %v2551
    %v2991 = vunpack.c.l.b16 %v2552
    %v2992 = vunpack.c.l.b16 %v2553
    %v2993 = vunpack.c.l.b16 %v2554
    %v2994 = vunpack.c.l.b16 %v2555
    %v2995 = vunpack.c.l.b16 %v2556
    %v2996 = vunpack.c.l.b16 %v2557
    %v2997 = vunpack.c.l.b16 %v2558
    %v2998 = vunpack.c.l.b16 %v2559
    %v2999 = vunpack.c.l.b16 %v2560
    %v3000 = vunpack.c.l.b16 %v2561
    %v3001 = vunpack.c.l.b16 %v2562
    %v3002 = vpack.c.b16 %v2987, %v2986
    %v3003 = vpack.c.b16 %v2989, %v2988
    %v3004 = vpack.c.b16 %v2991, %v2990
    %v3005 = vpack.c.b16 %v2993, %v2992
    %v3006 = vpack.c.b16 %v2995, %v2994
    %v3007 = vpack.c.b16 %v2997, %v2996
    %v3008 = vpack.c.b16 %v2999, %v2998
    %v3009 = vpack.c.b16 %v3001, %v3000
    %3018 = vmatpush.bf16.xpose.msra.mxu0 %v3009
    %3019 = vmatpush.bf16.xpose.msra.mxu0 %v3008
    %3020 = vmatpush.bf16.xpose.msra.mxu0 %v3007
    %3021 = vmatpush.bf16.xpose.msra.mxu0 %v3006
    %3022 = vmatpush.bf16.xpose.msra.mxu0 %v3005
    %3023 = vmatpush.bf16.xpose.msra.mxu0 %v3004
    %3024 = vmatpush.bf16.xpose.msra.mxu0 %v3003
    %3025 = vmatpush.bf16.xpose.msra.mxu0 %v3002
    %3026 = vmatmul.bf16.gmra.mxu0 %v2449
    %v3027 = vpop.f32.mrf.mxu0
    %v3028 = vadd.f32 %v2594, %v3027
    %v3029 = vpop.f32.mrf.mxu0
    %3030 = vdwg.mxu0
    %v3047 = vunpack.c.l.b16 %v2563
    %v3048 = vunpack.c.l.b16 %v2564
    %v3049 = vunpack.c.l.b16 %v2565
    %v3050 = vunpack.c.l.b16 %v2566
    %v3051 = vunpack.c.l.b16 %v2567
    %v3052 = vunpack.c.l.b16 %v2568
    %v3053 = vunpack.c.l.b16 %v2569
    %v3054 = vunpack.c.l.b16 %v2570
    %v3055 = vunpack.c.l.b16 %v2571
    %v3056 = vunpack.c.l.b16 %v2572
    %v3057 = vunpack.c.l.b16 %v2573
    %v3058 = vunpack.c.l.b16 %v2574
    %v3059 = vunpack.c.l.b16 %v2575
    %v3060 = vunpack.c.l.b16 %v2576
    %v3061 = vunpack.c.l.b16 %v2577
    %v3062 = vunpack.c.l.b16 %v2578
    %v3063 = vpack.c.b16 %v3048, %v3047
    %v3064 = vpack.c.b16 %v3050, %v3049
    %v3065 = vpack.c.b16 %v3052, %v3051
    %v3066 = vpack.c.b16 %v3054, %v3053
    %v3067 = vpack.c.b16 %v3056, %v3055
    %v3068 = vpack.c.b16 %v3058, %v3057
    %v3069 = vpack.c.b16 %v3060, %v3059
    %v3070 = vpack.c.b16 %v3062, %v3061
    %3079 = vmatpush.bf16.xpose.msra.mxu0 %v3070
    %3080 = vmatpush.bf16.xpose.msra.mxu0 %v3069
    %3081 = vmatpush.bf16.xpose.msra.mxu0 %v3068
    %3082 = vmatpush.bf16.xpose.msra.mxu0 %v3067
    %3083 = vmatpush.bf16.xpose.msra.mxu0 %v3066
    %3084 = vmatpush.bf16.xpose.msra.mxu0 %v3065
    %3085 = vmatpush.bf16.xpose.msra.mxu0 %v3064
    %3086 = vmatpush.bf16.xpose.msra.mxu0 %v3063
    %3087 = vmatmul.bf16.gmra.mxu0 %v2450
    %v3088 = vpop.f32.mrf.mxu0
    %v3089 = vadd.f32 %v2595, %v3088
    %v3090 = vpop.f32.mrf.mxu0
    %3091 = vdwg.mxu0
    %3092 = vmax.xlane.f32.xlu0 %v2662
    %v3093 = vpop.xlane.xlu0 %3092
    %3094 = vmax.xlane.f32.xlu0 %v2723
    %v3095 = vpop.xlane.xlu0 %3094
    %3096 = vmax.xlane.f32.xlu0 %v2784
    %v3097 = vpop.xlane.xlu0 %3096
    %3098 = vmax.xlane.f32.xlu0 %v2845
    %v3099 = vpop.xlane.xlu0 %3098
    %3100 = vmax.xlane.f32.xlu0 %v2906
    %v3101 = vpop.xlane.xlu0 %3100
    %3102 = vmax.xlane.f32.xlu0 %v2967
    %v3103 = vpop.xlane.xlu0 %3102
    %3104 = vmax.xlane.f32.xlu0 %v3028
    %v3105 = vpop.xlane.xlu0 %3104
    %3106 = vmax.xlane.f32.xlu0 %v3089
    %v3107 = vpop.xlane.xlu0 %3106
    %v3108 = vsub.f32 %v2662, %v3093
    %v3109 = vsub.f32 %v2723, %v3095
    %v3110 = vsub.f32 %v2784, %v3097
    %v3111 = vsub.f32 %v2845, %v3099
    %v3112 = vsub.f32 %v2906, %v3101
    %v3113 = vsub.f32 %v2967, %v3103
    %v3114 = vsub.f32 %v3028, %v3105
    %v3115 = vsub.f32 %v3089, %v3107
    %v3116 = vmul.f32 %v3108, 1.442695
    %v3117 = vpow.pop %v3116
    %v3118 = vmul.f32 %v3109, 1.442695
    %v3119 = vpow.pop %v3118
    %v3120 = vmul.f32 %v3110, 1.442695
    %v3121 = vpow.pop %v3120
    %v3122 = vmul.f32 %v3111, 1.442695
    %v3123 = vpow.pop %v3122
    %v3124 = vmul.f32 %v3112, 1.442695
    %v3125 = vpow.pop %v3124
    %v3126 = vmul.f32 %v3113, 1.442695
    %v3127 = vpow.pop %v3126
    %v3128 = vmul.f32 %v3114, 1.442695
    %v3129 = vpow.pop %v3128
    %v3130 = vmul.f32 %v3115, 1.442695
    %v3131 = vpow.pop %v3130
    %3132 = vadd.xlane.f32.xlu0 %v3117
    %v3133 = vpop.xlane.xlu0 %3132
    %3134 = vadd.xlane.f32.xlu0 %v3119
    %v3135 = vpop.xlane.xlu0 %3134
    %3136 = vadd.xlane.f32.xlu0 %v3121
    %v3137 = vpop.xlane.xlu0 %3136
    %3138 = vadd.xlane.f32.xlu0 %v3123
    %v3139 = vpop.xlane.xlu0 %3138
    %3140 = vadd.xlane.f32.xlu0 %v3125
    %v3141 = vpop.xlane.xlu0 %3140
    %3142 = vadd.xlane.f32.xlu0 %v3127
    %v3143 = vpop.xlane.xlu0 %3142
    %3144 = vadd.xlane.f32.xlu0 %v3129
    %v3145 = vpop.xlane.xlu0 %3144
    %3146 = vadd.xlane.f32.xlu0 %v3131
    %v3147 = vpop.xlane.xlu0 %3146
    %v3148 = vrcp.pop %v3133
    %v3149 = vrcp.pop %v3135
    %v3150 = vrcp.pop %v3137
    %v3151 = vrcp.pop %v3139
    %v3152 = vrcp.pop %v3141
    %v3153 = vrcp.pop %v3143
    %v3154 = vrcp.pop %v3145
    %v3155 = vrcp.pop %v3147
    %v3156 = vmul.f32 %v3117, %v3148
    %v3157 = vmul.f32 %v3119, %v3149
    %v3158 = vmul.f32 %v3121, %v3150
    %v3159 = vmul.f32 %v3123, %v3151
    %v3160 = vmul.f32 %v3125, %v3152
    %v3161 = vmul.f32 %v3127, %v3153
    %v3162 = vmul.f32 %v3129, %v3154
    %v3163 = vmul.f32 %v3131, %v3155
    %3164 = vst [vmem:[%s9] sm:$0xff] %v3156
    %3165 = vst [vmem:[%s9 + $0x8] sm:$0xff] %v3157
    %3166 = vst [vmem:[%s9 + $0x10] sm:$0xff] %v3158
    %3167 = vst [vmem:[%s9 + $0x18] sm:$0xff] %v3159
    %3168 = vst [vmem:[%s9 + $0x20] sm:$0xff] %v3160
    %3169 = vst [vmem:[%s9 + $0x28] sm:$0xff] %v3161
    %3170 = vst [vmem:[%s9 + $0x30] sm:$0xff] %v3162
    %3171 = vst [vmem:[%s9 + $0x38] sm:$0xff] %v3163
    %v3172 = vpack.c.bf16 %v3156, %v3156
    %v3173 = vpack.c.bf16 %v3157, %v3157
    %v3174 = vpack.c.bf16 %v3158, %v3158
    %v3175 = vpack.c.bf16 %v3159, %v3159
    %v3176 = vpack.c.bf16 %v3160, %v3160
    %v3177 = vpack.c.bf16 %v3161, %v3161
    %v3178 = vpack.c.bf16 %v3162, %v3162
    %v3179 = vpack.c.bf16 %v3163, %v3163
    %3180 = vmatpush.bf16.msra.mxu0 %v2643
    %3181 = vmatpush.bf16.msra.mxu0 %v2642
    %3182 = vmatpush.bf16.msra.mxu0 %v2641
    %3183 = vmatpush.bf16.msra.mxu0 %v2640
    %3184 = vmatpush.bf16.msra.mxu0 %v2639
    %3185 = vmatpush.bf16.msra.mxu0 %v2638
    %3186 = vmatpush.bf16.msra.mxu0 %v2637
    %3187 = vmatpush.bf16.msra.mxu0 %v2636
    %3188 = vmatmul.bf16.gmra.mxu0 %v3172
    %v3189 = vpop.f32.mrf.mxu0
    %v3190 = vadd.f32 0.0, %v3189
    %v3191 = vpop.f32.mrf.mxu0
    %3192 = vdwg.mxu0
    %3193 = vmatpush.bf16.msra.mxu0 %v2704
    %3194 = vmatpush.bf16.msra.mxu0 %v2703
    %3195 = vmatpush.bf16.msra.mxu0 %v2702
    %3196 = vmatpush.bf16.msra.mxu0 %v2701
    %3197 = vmatpush.bf16.msra.mxu0 %v2700
    %3198 = vmatpush.bf16.msra.mxu0 %v2699
    %3199 = vmatpush.bf16.msra.mxu0 %v2698
    %3200 = vmatpush.bf16.msra.mxu0 %v2697
    %3201 = vmatmul.bf16.gmra.mxu0 %v3173
    %v3202 = vpop.f32.mrf.mxu0
    %v3203 = vadd.f32 0.0, %v3202
    %v3204 = vpop.f32.mrf.mxu0
    %3205 = vdwg.mxu0
    %3206 = vmatpush.bf16.msra.mxu0 %v2765
    %3207 = vmatpush.bf16.msra.mxu0 %v2764
    %3208 = vmatpush.bf16.msra.mxu0 %v2763
    %3209 = vmatpush.bf16.msra.mxu0 %v2762
    %3210 = vmatpush.bf16.msra.mxu0 %v2761
    %3211 = vmatpush.bf16.msra.mxu0 %v2760
    %3212 = vmatpush.bf16.msra.mxu0 %v2759
    %3213 = vmatpush.bf16.msra.mxu0 %v2758
    %3214 = vmatmul.bf16.gmra.mxu0 %v3174
    %v3215 = vpop.f32.mrf.mxu0
    %v3216 = vadd.f32 0.0, %v3215
    %v3217 = vpop.f32.mrf.mxu0
    %3218 = vdwg.mxu0
    %3219 = vmatpush.bf16.msra.mxu0 %v2826
    %3220 = vmatpush.bf16.msra.mxu0 %v2825
    %3221 = vmatpush.bf16.msra.mxu0 %v2824
    %3222 = vmatpush.bf16.msra.mxu0 %v2823
    %3223 = vmatpush.bf16.msra.mxu0 %v2822
    %3224 = vmatpush.bf16.msra.mxu0 %v2821
    %3225 = vmatpush.bf16.msra.mxu0 %v2820
    %3226 = vmatpush.bf16.msra.mxu0 %v2819
    %3227 = vmatmul.bf16.gmra.mxu0 %v3175
    %v3228 = vpop.f32.mrf.mxu0
    %v3229 = vadd.f32 0.0, %v3228
    %v3230 = vpop.f32.mrf.mxu0
    %3231 = vdwg.mxu0
    %3232 = vmatpush.bf16.msra.mxu0 %v2887
    %3233 = vmatpush.bf16.msra.mxu0 %v2886
    %3234 = vmatpush.bf16.msra.mxu0 %v2885
    %3235 = vmatpush.bf16.msra.mxu0 %v2884
    %3236 = vmatpush.bf16.msra.mxu0 %v2883
    %3237 = vmatpush.bf16.msra.mxu0 %v2882
    %3238 = vmatpush.bf16.msra.mxu0 %v2881
    %3239 = vmatpush.bf16.msra.mxu0 %v2880
    %3240 = vmatmul.bf16.gmra.mxu0 %v3176
    %v3241 = vpop.f32.mrf.mxu0
    %v3242 = vadd.f32 0.0, %v3241
    %v3243 = vpop.f32.mrf.mxu0
    %3244 = vdwg.mxu0
    %3245 = vmatpush.bf16.msra.mxu0 %v2948
    %3246 = vmatpush.bf16.msra.mxu0 %v2947
    %3247 = vmatpush.bf16.msra.mxu0 %v2946
    %3248 = vmatpush.bf16.msra.mxu0 %v2945
    %3249 = vmatpush.bf16.msra.mxu0 %v2944
    %3250 = vmatpush.bf16.msra.mxu0 %v2943
    %3251 = vmatpush.bf16.msra.mxu0 %v2942
    %3252 = vmatpush.bf16.msra.mxu0 %v2941
    %3253 = vmatmul.bf16.gmra.mxu0 %v3177
    %v3254 = vpop.f32.mrf.mxu0
    %v3255 = vadd.f32 0.0, %v3254
    %v3256 = vpop.f32.mrf.mxu0
    %3257 = vdwg.mxu0
    %3258 = vmatpush.bf16.msra.mxu0 %v3009
    %3259 = vmatpush.bf16.msra.mxu0 %v3008
    %3260 = vmatpush.bf16.msra.mxu0 %v3007
    %3261 = vmatpush.bf16.msra.mxu0 %v3006
    %3262 = vmatpush.bf16.msra.mxu0 %v3005
    %3263 = vmatpush.bf16.msra.mxu0 %v3004
    %3264 = vmatpush.bf16.msra.mxu0 %v3003
    %3265 = vmatpush.bf16.msra.mxu0 %v3002
    %3266 = vmatmul.bf16.gmra.mxu0 %v3178
    %v3267 = vpop.f32.mrf.mxu0
    %v3268 = vadd.f32 0.0, %v3267
    %v3269 = vpop.f32.mrf.mxu0
    %3270 = vdwg.mxu0
    %3271 = vmatpush.bf16.msra.mxu0 %v3070
    %3272 = vmatpush.bf16.msra.mxu0 %v3069
    %3273 = vmatpush.bf16.msra.mxu0 %v3068
    %3274 = vmatpush.bf16.msra.mxu0 %v3067
    %3275 = vmatpush.bf16.msra.mxu0 %v3066
    %3276 = vmatpush.bf16.msra.mxu0 %v3065
    %3277 = vmatpush.bf16.msra.mxu0 %v3064
    %3278 = vmatpush.bf16.msra.mxu0 %v3063
    %3279 = vmatmul.bf16.gmra.mxu0 %v3179
    %v3280 = vpop.f32.mrf.mxu0
    %v3281 = vadd.f32 0.0, %v3280
    %v3282 = vpop.f32.mrf.mxu0
    %3283 = vdwg.mxu0
    %3284 = vst [vmem:[%s10] sm:$0xf] %v2443
    %3285 = vst [vmem:[%s10 + $0x8] sm:$0xf] %v2444
    %3286 = vst [vmem:[%s10 + $0x10] sm:$0xf] %v2445
    %3287 = vst [vmem:[%s10 + $0x18] sm:$0xf] %v2446
    %3288 = vst [vmem:[%s10 + $0x20] sm:$0xf] %v2447
    %3289 = vst [vmem:[%s10 + $0x28] sm:$0xf] %v2448
    %3290 = vst [vmem:[%s10 + $0x30] sm:$0xf] %v2449
    %3291 = vst [vmem:[%s10 + $0x38] sm:$0xf] %v2450
    %v3292 = vpack.c.bf16 %v3190, %v3190
    %v3293 = vpack.c.bf16 %v3203, %v3203
    %v3294 = vpack.c.bf16 %v3216, %v3216
    %v3295 = vpack.c.bf16 %v3229, %v3229
    %v3296 = vpack.c.bf16 %v3242, %v3242
    %v3297 = vpack.c.bf16 %v3255, %v3255
    %v3298 = vpack.c.bf16 %v3268, %v3268
    %v3299 = vpack.c.bf16 %v3281, %v3281
    %3300 = vst [vmem:[%s10 + $0x4] sm:$0xf] %v3292
    %3301 = vst [vmem:[%s10 + $0xc] sm:$0xf] %v3293
    %3302 = vst [vmem:[%s10 + $0x14] sm:$0xf] %v3294
    %3303 = vst [vmem:[%s10 + $0x1c] sm:$0xf] %v3295
    %3304 = vst [vmem:[%s10 + $0x24] sm:$0xf] %v3296
    %3305 = vst [vmem:[%s10 + $0x2c] sm:$0xf] %v3297
    %3306 = vst [vmem:[%s10 + $0x34] sm:$0xf] %v3298
    %3307 = vst [vmem:[%s10 + $0x3c] sm:$0xf] %v3299
    // Predicated region
    $region46: #{_seq2seq_apply.2} parent=1 // pred_check
      _
    $region47: #{_seq2seq_apply.2} parent=1 // pred_check_branch
      %3309 = sbr.rel (0) target = $region49
    $region48: #{_seq2seq_apply.2} parent=1 // pred_region
      _
    $region49: #{_seq2seq_apply.2} parent=1 // pred_fallthru
      _
    // Predicated region
    $region50: #{_seq2seq_apply.2} parent=1 // pred_check
      _
    $region51: #{_seq2seq_apply.2} parent=1 // pred_check_branch
      %3311 = sbr.rel (0) target = $region53
    $region52: #{_seq2seq_apply.2} parent=1 // pred_region
      _
    $region53: #{_seq2seq_apply.2} parent=1 // pred_fallthru
      _
    // Predicated region
    $region54: #{_seq2seq_apply.2} parent=1 // pred_check
      _
    $region55: #{_seq2seq_apply.2} parent=1 // pred_check_branch
      %3313 = sbr.rel (0) target = $region57
    $region56: #{_seq2seq_apply.2} parent=1 // pred_region
      _
    $region57: #{_seq2seq_apply.2} parent=1 // pred_fallthru
      _
    // Predicated region
    $region58: #{_seq2seq_apply.2} parent=1 // pred_check
      _
    $region59: #{_seq2seq_apply.2} parent=1 // pred_check_branch
      %3315 = sbr.rel (0) target = $region61
    $region60: #{_seq2seq_apply.2} parent=1 // pred_region
      _
    $region61: #{_seq2seq_apply.2} parent=1 // pred_fallthru
      _
    %3316 = vsyncpa [#allocation5], 1
    %3317 = vsyncpa [#allocation7], 1

</llo_original>
